<compile_context>
chip_gen: v5e
topology: v5e:2x2
jax: 0.10.0
libtpu: 0.0.40
codegen_flags: <defaults>
</compile_context>

<pallas_src>
import math
import jax
import jax.numpy as jnp
from jax import lax
from jax.experimental import pallas as pl
from jax.experimental.pallas import tpu as pltpu

TM = 256   # GEMM row tile
TN = 128   # GEMM col tile (lane-dense output)
TK = 128   # contraction tile


def _round_up(x, m):
    return (x + m - 1) // m * m


# ---------------- Pallas kernels ----------------

def _mm_bias_kernel(a_ref, w_ref, b_ref, o_ref, acc_ref):
    @pl.when(pl.program_id(2) == 0)
    def _():
        acc_ref[...] = jnp.zeros_like(acc_ref)
    acc_ref[...] += jnp.dot(a_ref[...], w_ref[...],
                            preferred_element_type=jnp.float32)

    @pl.when(pl.program_id(2) == pl.num_programs(2) - 1)
    def _():
        o_ref[...] = acc_ref[...] + b_ref[...]


def _mm_bias_res_kernel(a_ref, w_ref, b_ref, r_ref, o_ref, acc_ref):
    @pl.when(pl.program_id(2) == 0)
    def _():
        acc_ref[...] = jnp.zeros_like(acc_ref)
    acc_ref[...] += jnp.dot(a_ref[...], w_ref[...],
                            preferred_element_type=jnp.float32)

    @pl.when(pl.program_id(2) == pl.num_programs(2) - 1)
    def _():
        o_ref[...] = acc_ref[...] + b_ref[...] + r_ref[...]


def _instnorm_swish_kernel(x_ref, o_ref):
    x = x_ref[0]                                      # (S, C) f32
    mean = jnp.mean(x, axis=0, keepdims=True)
    xc = x - mean
    var = jnp.mean(xc * xc, axis=0, keepdims=True)    # biased var (InstanceNorm3d)
    y = xc * lax.rsqrt(var + 1e-5)
    sig = pl.reciprocal(1.0 + jnp.exp(-y), approx=True)   # exp + recip on EUP
    o_ref[0] = y * sig


# ---------------- GEMM wrapper (tiled, bf16 operands, f32 accumulate) ----------------

def matmul_bias(a, w_p, b_p, residual=None):
    """a: (M, K) f32.  w_p: (K_pad, N_pad) bf16, prepadded.  b_p: (1, N_pad) f32.
    residual: optional (M, N_pad) f32.  Returns (M, N_pad) f32."""
    M, K = a.shape
    K_pad, N_pad = w_p.shape
    M_pad = _round_up(M, TM)
    a_p = jnp.pad(a, ((0, M_pad - M), (0, K_pad - K))).astype(jnp.bfloat16)
    grid = (M_pad // TM, N_pad // TN, K_pad // TK)

    a_spec = pl.BlockSpec((TM, TK), lambda i, j, k: (i, k))
    w_spec = pl.BlockSpec((TK, TN), lambda i, j, k: (k, j))
    b_spec = pl.BlockSpec((1, TN), lambda i, j, k: (0, j))
    o_spec = pl.BlockSpec((TM, TN), lambda i, j, k: (i, j))

    flops = 2 * M_pad * N_pad * K_pad
    bytes_accessed = a_p.size * 2 + w_p.size * 2 + M_pad * N_pad * 4
    cp = pltpu.CompilerParams(
        dimension_semantics=("parallel", "parallel", "arbitrary"))

    if residual is None:
        out = pl.pallas_call(
            _mm_bias_kernel,
            out_shape=jax.ShapeDtypeStruct((M_pad, N_pad), jnp.float32),
            grid_spec=pltpu.PrefetchScalarGridSpec(
                num_scalar_prefetch=0, grid=grid,
                in_specs=[a_spec, w_spec, b_spec],
                out_specs=o_spec,
                scratch_shapes=[pltpu.VMEM((TM, TN), jnp.float32)]),
            compiler_params=cp,
            cost_estimate=pl.CostEstimate(flops=flops, transcendentals=0,
                                          bytes_accessed=bytes_accessed),
        )(a_p, w_p, b_p)
        return out[:M]

    r_p = jnp.pad(residual, ((0, M_pad - M), (0, 0)))
    r_spec = pl.BlockSpec((TM, TN), lambda i, j, k: (i, j))
    out = pl.pallas_call(
        _mm_bias_res_kernel,
        out_shape=jax.ShapeDtypeStruct((M_pad, N_pad), jnp.float32),
        grid_spec=pltpu.PrefetchScalarGridSpec(
            num_scalar_prefetch=0, grid=grid,
            in_specs=[a_spec, w_spec, b_spec, r_spec],
            out_specs=o_spec,
            scratch_shapes=[pltpu.VMEM((TM, TN), jnp.float32)]),
        compiler_params=cp,
        cost_estimate=pl.CostEstimate(flops=flops, transcendentals=0,
                                      bytes_accessed=bytes_accessed + r_p.size * 4),
    )(a_p, w_p, b_p, r_p)
    return out[:M]


# ---------------- InstanceNorm3d + swish (channels-last, no transposes) ----------------

def instnorm_swish(x):
    N, D, H, W, C = x.shape
    S = D * H * W
    xr = x.reshape(N, S, C)                         # contiguous, free reshape
    # TODO(synk): one (S, C) slab per grid step must fit VMEM; very large spatial
    # sizes need a two-pass tiled mean/var reduction instead.
    y = pl.pallas_call(
        _instnorm_swish_kernel,
        out_shape=jax.ShapeDtypeStruct((N, S, C), jnp.float32),
        grid=(N,),
        in_specs=[pl.BlockSpec((1, S, C), lambda n: (n, 0, 0))],
        out_specs=pl.BlockSpec((1, S, C), lambda n: (n, 0, 0)),
        compiler_params=pltpu.CompilerParams(dimension_semantics=("parallel",)),
    )(xr)
    return y.reshape(N, D, H, W, C)


# ---------------- conv wrappers (channels-last, rows ordered (n, d, h, w)) ----------------

def conv331(x, layer, *, stride=1, residual=None):
    """Conv3d kernel (3,3,1), padding (1,1,0), stride (s,s,1) on channels-last x."""
    N, D, H, W, Cin = x.shape
    xp = jnp.pad(x, ((0, 0), (1, 1), (1, 1), (0, 0), (0, 0)))
    Do = (D + 2 - 3) // stride + 1
    Ho = (H + 2 - 3) // stride + 1
    # TODO(synk): for large activations, replace this XLA-side im2col (~9x HBM
    # traffic) with a tap-indexed K grid axis reading shifted windows in-kernel.
    taps = []
    for kd in range(3):
        for kh in range(3):
            t = xp[:, kd:kd + (Do - 1) * stride + 1:stride,
                   kh:kh + (Ho - 1) * stride + 1:stride, :, :]
            taps.append(t.reshape(N * Do * Ho * W, Cin))
    a = jnp.concatenate(taps, axis=-1)                       # (M, 9*Cin)
    o = matmul_bias(a, layer["w"], layer["b"], residual=residual)
    return o[:, :layer["cout"]].reshape(N, Do, Ho, W, layer["cout"])


def conv1x1_padded(x, layer):
    """1x1x1 conv; returns lane-padded (M, 128k) output, rows ordered (n, d, h, w)."""
    N, D, H, W, Cin = x.shape
    a = x.reshape(N * D * H * W, Cin)
    return matmul_bias(a, layer["w"], layer["b"])


# ---------------- parameter preparation (done once, outside the hot path) ----------------

def _grouped_to_dense(w, groups):
    cout, cin_g, kd, kh, kw = w.shape
    cout_g = cout // groups
    dense = jnp.zeros((cout, cin_g * groups, kd, kh, kw), w.dtype)
    for g in range(groups):
        dense = dense.at[g * cout_g:(g + 1) * cout_g,
                         g * cin_g:(g + 1) * cin_g].set(w[g * cout_g:(g + 1) * cout_g])
    return dense


def _prep_conv331(w, b):
    # torch (Cout, Cin, 3, 3, 1) -> GEMM weight (K_pad, N_pad) bf16, tap-major cols.
    cout, cin = w.shape[0], w.shape[1]
    wm = jnp.transpose(w[:, :, :, :, 0], (2, 3, 1, 0)).reshape(9 * cin, cout)
    k_pad, n_pad = _round_up(9 * cin, TK), _round_up(cout, TN)
    wm = jnp.pad(wm, ((0, k_pad - 9 * cin), (0, n_pad - cout))).astype(jnp.bfloat16)
    bp = jnp.pad(b, (0, n_pad - cout)).reshape(1, n_pad).astype(jnp.float32)
    return dict(w=wm, b=bp, cout=cout)


def _prep_conv1x1(w, b):
    cout, cin = w.shape[0], w.shape[1]
    wm = jnp.transpose(w[:, :, 0, 0, 0], (1, 0))
    k_pad, n_pad = _round_up(cin, TK), _round_up(cout, TN)
    wm = jnp.pad(wm, ((0, k_pad - cin), (0, n_pad - cout))).astype(jnp.bfloat16)
    bp = jnp.pad(b, (0, n_pad - cout)).reshape(1, n_pad).astype(jnp.float32)
    return dict(w=wm, b=bp, cout=cout)


def prepare_params(p):
    return dict(
        stem=_prep_conv331(_grouped_to_dense(p["stem_w"], p["groups"]), p["stem_b"]),
        c1=_prep_conv331(p["c1_w"], p["c1_b"]),
        c2=_prep_conv331(p["c2_w"], p["c2_b"]),
        down=_prep_conv331(p["down_w"], p["down_b"]),
        skip=_prep_conv1x1(p["skip_w"], p["skip_b"]),
    )


# ---------------- EncoderH forward (blocks=[1], TD=0, dim='3D', act='swish') ----------------

def encoder_forward(x_ncdhw, gp):
    x = jnp.transpose(x_ncdhw, (0, 2, 3, 4, 1))      # NCDHW -> channels-last
    # level-0 stem: grouped Conv3d fused into one GEMM via block-diagonal weight
    x1 = conv331(x, gp["stem"])
    # ResnetBlockH(channels -> 2*channels)
    h = instnorm_swish(x1)
    h = conv331(h, gp["c1"])
    h = instnorm_swish(h)
    # Dropout(p=0.0) is the identity
    skip = conv1x1_padded(x1, gp["skip"])            # kept lane-padded for fusion
    h = conv331(h, gp["c2"], residual=skip)          # conv2 + residual add fused in GEMM
    out = conv331(h, gp["down"], stride=2)           # downsample, stride (2,2,1)
    return jnp.transpose(out, (0, 4, 1, 2, 3))       # back to NCDHW


# ---------------- pure-JAX reference (correctness check) ----------------

def _ref_conv3d(x, w, b, stride=(1, 1, 1), padding=((1, 1), (1, 1), (0, 0)), groups=1):
    o = lax.conv_general_dilated(x, w, window_strides=stride, padding=padding,
                                 dimension_numbers=("NCDHW", "OIDHW", "NCDHW"),
                                 feature_group_count=groups)
    return o + b.reshape(1, -1, 1, 1, 1)


def _ref_inorm_swish(x):
    mean = x.mean(axis=(2, 3, 4), keepdims=True)
    var = ((x - mean) ** 2).mean(axis=(2, 3, 4), keepdims=True)
    y = (x - mean) / jnp.sqrt(var + 1e-5)
    return y * jax.nn.sigmoid(y)


def ref_forward(x, p):
    x1 = _ref_conv3d(x, p["stem_w"], p["stem_b"], groups=p["groups"])
    h = _ref_inorm_swish(x1)
    h = _ref_conv3d(h, p["c1_w"], p["c1_b"])
    h = _ref_inorm_swish(h)
    h = _ref_conv3d(h, p["c2_w"], p["c2_b"])
    skip = _ref_conv3d(x1, p["skip_w"], p["skip_b"], padding=((0, 0),) * 3)
    x2 = skip + h
    return _ref_conv3d(x2, p["down_w"], p["down_b"], stride=(2, 2, 1))


# ---------------- deterministic parameter init (PyTorch Conv default scheme) ----------------

def _init_conv(key, cout, cin_per_group, kshape):
    kD, kH, kW = kshape
    fan_in = cin_per_group * kD * kH * kW
    bound = 1.0 / math.sqrt(fan_in)
    kw, kb = jax.random.split(key)
    w = jax.random.uniform(kw, (cout, cin_per_group, kD, kH, kW), jnp.float32, -bound, bound)
    b = jax.random.uniform(kb, (cout,), jnp.float32, -bound, bound)
    return w, b


if __name__ == "__main__":
    # EncoderH(in_ch=4, channels=4, groups=2, blocks=[1], TD=0, dim='3D', act='swish')
    N, in_ch, D, H, W = 2, 4, 8, 8, 4
    channels, groups = 4, 2
    key = jax.random.PRNGKey(0)
    ks = jax.random.split(key, 6)

    stem_w, stem_b = _init_conv(ks[0], channels, in_ch // groups, (3, 3, 1))
    c1_w, c1_b = _init_conv(ks[1], 2 * channels, channels, (3, 3, 1))
    c2_w, c2_b = _init_conv(ks[2], 2 * channels, 2 * channels, (3, 3, 1))
    skip_w, skip_b = _init_conv(ks[3], 2 * channels, channels, (1, 1, 1))
    down_w, down_b = _init_conv(ks[4], 2 * channels, 2 * channels, (3, 3, 1))
    params = dict(groups=groups,
                  stem_w=stem_w, stem_b=stem_b,
                  c1_w=c1_w, c1_b=c1_b,
                  c2_w=c2_w, c2_b=c2_b,
                  skip_w=skip_w, skip_b=skip_b,
                  down_w=down_w, down_b=down_b)
    gparams = prepare_params(params)

    x = jax.random.normal(ks[5], (N, in_ch, D, H, W), jnp.float32)

    out = jax.jit(lambda xx: encoder_forward(xx, gparams))(x)
    out = jax.block_until_ready(out)

    assert out.shape == (N, 2 * channels, D // 2, H // 2, W), out.shape

    ref = jax.block_until_ready(ref_forward(x, params))
    if not jnp.allclose(out, ref, atol=5e-2, rtol=5e-2):
        raise RuntimeError("Pallas EncoderH output mismatch vs reference")

    print("KERNEL_OK")
</pallas_src>

<mosaic_0001>
module attributes {stable_mosaic.version = 11 : i64} {
  func.func @_mm_bias_kernel(%arg0: i32, %arg1: i32, %arg2: i32, %arg3: memref<256x128xbf16, #tpu.memory_space<vmem>>, %arg4: memref<128x128xbf16, #tpu.memory_space<vmem>>, %arg5: memref<1x128xf32, #tpu.memory_space<vmem>>, %arg6: memref<256x128xf32, #tpu.memory_space<vmem>>, %arg7: memref<256x128xf32, #tpu.memory_space<vmem>>) attributes {dimension_semantics = [#tpu.dimension_semantics<parallel>, #tpu.dimension_semantics<parallel>, #tpu.dimension_semantics<arbitrary>], iteration_bounds = array<i64: 2, 1, 1>, scalar_prefetch = 0 : i64, scratch_operands = 1 : i64, tpu.core_type = #tpu.core_type<tc>, window_params = [{transform_indices = @transform_0, window_bounds = array<i64: 256, 128>}, {transform_indices = @transform_1, window_bounds = array<i64: 128, 128>}, {transform_indices = @transform_2, window_bounds = array<i64: 1, 128>}, {transform_indices = @transform_3, window_bounds = array<i64: 256, 128>}]} {
    %c0_i32 = arith.constant 0 : i32
    %0 = arith.cmpi eq, %arg2, %c0_i32 : i32
    %1 = arith.extui %0 : i1 to i32
    %c0_i32_0 = arith.constant 0 : i32
    %2 = arith.cmpi ne, %1, %c0_i32_0 : i32
    scf.if %2 {
      %cst_10 = arith.constant 0.000000e+00 : f32
      %12 = vector.broadcast %cst_10 : f32 to vector<256x128xf32>
      %c0_11 = arith.constant 0 : index
      %c0_12 = arith.constant 0 : index
      %13 = vector.load %arg7[%c0_11, %c0_12] : memref<256x128xf32, #tpu.memory_space<vmem>>, vector<256x128xf32>
      tpu.vector_store %arg7[%c0_11, %c0_12], %12 {strides = array<i32>} : memref<256x128xf32, #tpu.memory_space<vmem>>, vector<256x128xf32>,
    } else {
    }
    %c0 = arith.constant 0 : index
    %c0_1 = arith.constant 0 : index
    %3 = vector.load %arg7[%c0, %c0_1] : memref<256x128xf32, #tpu.memory_space<vmem>>, vector<256x128xf32>
    %c0_2 = arith.constant 0 : index
    %c0_3 = arith.constant 0 : index
    %4 = vector.load %arg3[%c0_2, %c0_3] : memref<256x128xbf16, #tpu.memory_space<vmem>>, vector<256x128xbf16>
    %c0_4 = arith.constant 0 : index
    %c0_5 = arith.constant 0 : index
    %5 = vector.load %arg4[%c0_4, %c0_5] : memref<128x128xbf16, #tpu.memory_space<vmem>>, vector<128x128xbf16>
    %cst = arith.constant dense<0.000000e+00> : vector<256x128xf32>
    %6 = tpu.matmul %4, %5, %cst {dimension_numbers = #tpu.dot_dimension_numbers<[1], [0], [0], [1], [0, 0, 1, 1], [], []>} : vector<256x128xbf16>, vector<128x128xbf16>, vector<256x128xf32> -> vector<256x128xf32>
    %7 = arith.addf %3, %6 : vector<256x128xf32>
    %c0_6 = arith.constant 0 : index
    %c0_7 = arith.constant 0 : index
    %8 = vector.load %arg7[%c0_6, %c0_7] : memref<256x128xf32, #tpu.memory_space<vmem>>, vector<256x128xf32>
    tpu.vector_store %arg7[%c0_6, %c0_7], %7 {strides = array<i32>} : memref<256x128xf32, #tpu.memory_space<vmem>>, vector<256x128xf32>,
    %c0_i32_8 = arith.constant 0 : i32
    %9 = arith.cmpi eq, %arg2, %c0_i32_8 : i32
    %10 = arith.extui %9 : i1 to i32
    %c0_i32_9 = arith.constant 0 : i32
    %11 = arith.cmpi ne, %10, %c0_i32_9 : i32
    scf.if %11 {
      %c0_10 = arith.constant 0 : index
      %c0_11 = arith.constant 0 : index
      %12 = vector.load %arg7[%c0_10, %c0_11] : memref<256x128xf32, #tpu.memory_space<vmem>>, vector<256x128xf32>
      %c0_12 = arith.constant 0 : index
      %c0_13 = arith.constant 0 : index
      %13 = vector.load %arg5[%c0_12, %c0_13] : memref<1x128xf32, #tpu.memory_space<vmem>>, vector<1x128xf32>
      %14 = vector.broadcast %13 : vector<1x128xf32> to vector<256x128xf32>
      %15 = arith.addf %12, %14 : vector<256x128xf32>
      %c0_14 = arith.constant 0 : index
      %c0_15 = arith.constant 0 : index
      %16 = vector.load %arg6[%c0_14, %c0_15] : memref<256x128xf32, #tpu.memory_space<vmem>>, vector<256x128xf32>
      tpu.vector_store %arg6[%c0_14, %c0_15], %15 {strides = array<i32>} : memref<256x128xf32, #tpu.memory_space<vmem>>, vector<256x128xf32>,
    } else {
    }
    return
  }
  func.func @transform_0(%arg0: i32, %arg1: i32, %arg2: i32) -> (i32, i32) {
    %c0_i32 = arith.constant 0 : i32
    return %arg0, %arg2 : i32, i32
  }
  func.func @transform_1(%arg0: i32, %arg1: i32, %arg2: i32) -> (i32, i32) {
    %c0_i32 = arith.constant 0 : i32
    return %arg2, %arg1 : i32, i32
  }
  func.func @transform_2(%arg0: i32, %arg1: i32, %arg2: i32) -> (i32, i32) {
    %c0_i32 = arith.constant 0 : i32
    %c0_i32_0 = arith.constant 0 : i32
    return %c0_i32, %arg1 : i32, i32
  }
  func.func @transform_3(%arg0: i32, %arg1: i32, %arg2: i32) -> (i32, i32) {
    %c0_i32 = arith.constant 0 : i32
    return %arg0, %arg1 : i32, i32
  }
}

module attributes {stable_mosaic.version = 11 : i64} {
  func.func @_instnorm_swish_kernel(%arg0: i32, %arg1: memref<1x256x4xf32, #tpu.memory_space<vmem>>, %arg2: memref<1x256x4xf32, #tpu.memory_space<vmem>>) attributes {dimension_semantics = [#tpu.dimension_semantics<parallel>], iteration_bounds = array<i64: 2>, scalar_prefetch = 0 : i64, scratch_operands = 0 : i64, tpu.core_type = #tpu.core_type<tc>, window_params = [{transform_indices = @transform_0, window_bounds = array<i64: 1, 256, 4>}, {transform_indices = @transform_1, window_bounds = array<i64: 1, 256, 4>}]} {
    %c0 = arith.constant 0 : index
    %c0_0 = arith.constant 0 : index
    %c0_1 = arith.constant 0 : index
    %0 = vector.load %arg1[%c0, %c0_0, %c0_1] : memref<1x256x4xf32, #tpu.memory_space<vmem>>, vector<1x256x4xf32>
    %1 = vector.shape_cast %0 : vector<1x256x4xf32> to vector<256x4xf32>
    %cst = arith.constant dense<0.000000e+00> : vector<4xf32>
    %2 = vector.multi_reduction <add>, %1, %cst [0] : vector<256x4xf32> to vector<4xf32>
    %3 = vector.shape_cast %2 : vector<4xf32> to vector<1x4xf32>
    %cst_2 = arith.constant 2.560000e+02 : f32
    %4 = vector.broadcast %cst_2 : f32 to vector<1x4xf32>
    %5 = arith.divf %3, %4 : vector<1x4xf32>
    %6 = vector.broadcast %5 : vector<1x4xf32> to vector<256x4xf32>
    %7 = arith.subf %1, %6 : vector<256x4xf32>
    %8 = arith.mulf %7, %7 : vector<256x4xf32>
    %cst_3 = arith.constant dense<0.000000e+00> : vector<4xf32>
    %9 = vector.multi_reduction <add>, %8, %cst_3 [0] : vector<256x4xf32> to vector<4xf32>
    %10 = vector.shape_cast %9 : vector<4xf32> to vector<1x4xf32>
    %cst_4 = arith.constant 2.560000e+02 : f32
    %11 = vector.broadcast %cst_4 : f32 to vector<1x4xf32>
    %12 = arith.divf %10, %11 : vector<1x4xf32>
    %cst_5 = arith.constant 9.99999974E-6 : f32
    %13 = vector.broadcast %cst_5 : f32 to vector<1x4xf32>
    %14 = arith.addf %12, %13 : vector<1x4xf32>
    %15 = math.rsqrt %14 : vector<1x4xf32>
    %16 = vector.broadcast %15 : vector<1x4xf32> to vector<256x4xf32>
    %17 = arith.mulf %7, %16 : vector<256x4xf32>
    %cst_6 = arith.constant 0.000000e+00 : f32
    %18 = vector.broadcast %cst_6 : f32 to vector<256x4xf32>
    %19 = arith.subf %18, %17 : vector<256x4xf32>
    %20 = math.exp %19 : vector<256x4xf32>
    %cst_7 = arith.constant 1.000000e+00 : f32
    %21 = vector.broadcast %cst_7 : f32 to vector<256x4xf32>
    %22 = arith.addf %21, %20 : vector<256x4xf32>
    %23 = tpu.reciprocal %22 {approx = true} : vector<256x4xf32> -> vector<256x4xf32>
    %24 = arith.mulf %17, %23 : vector<256x4xf32>
    %c0_8 = arith.constant 0 : index
    %c0_9 = arith.constant 0 : index
    %c0_10 = arith.constant 0 : index
    %25 = vector.load %arg2[%c0_8, %c0_9, %c0_10] : memref<1x256x4xf32, #tpu.memory_space<vmem>>, vector<1x256x4xf32>
    %26 = vector.shape_cast %25 : vector<1x256x4xf32> to vector<256x4xf32>
    %27 = vector.shape_cast %24 : vector<256x4xf32> to vector<1x256x4xf32>
    tpu.vector_store %arg2[%c0_8, %c0_9, %c0_10], %27 {strides = array<i32>} : memref<1x256x4xf32, #tpu.memory_space<vmem>>, vector<1x256x4xf32>,
    return
  }
  func.func @transform_0(%arg0: i32) -> (i32, i32, i32) {
    %c0_i32 = arith.constant 0 : i32
    %c0_i32_0 = arith.constant 0 : i32
    %c0_i32_1 = arith.constant 0 : i32
    return %arg0, %c0_i32, %c0_i32_0 : i32, i32, i32
  }
  func.func @transform_1(%arg0: i32) -> (i32, i32, i32) {
    %c0_i32 = arith.constant 0 : i32
    %c0_i32_0 = arith.constant 0 : i32
    %c0_i32_1 = arith.constant 0 : i32
    return %arg0, %c0_i32, %c0_i32_0 : i32, i32, i32
  }
}

module attributes {stable_mosaic.version = 11 : i64} {
  func.func @_instnorm_swish_kernel(%arg0: i32, %arg1: memref<1x256x8xf32, #tpu.memory_space<vmem>>, %arg2: memref<1x256x8xf32, #tpu.memory_space<vmem>>) attributes {dimension_semantics = [#tpu.dimension_semantics<parallel>], iteration_bounds = array<i64: 2>, scalar_prefetch = 0 : i64, scratch_operands = 0 : i64, tpu.core_type = #tpu.core_type<tc>, window_params = [{transform_indices = @transform_0, window_bounds = array<i64: 1, 256, 8>}, {transform_indices = @transform_1, window_bounds = array<i64: 1, 256, 8>}]} {
    %c0 = arith.constant 0 : index
    %c0_0 = arith.constant 0 : index
    %c0_1 = arith.constant 0 : index
    %0 = vector.load %arg1[%c0, %c0_0, %c0_1] : memref<1x256x8xf32, #tpu.memory_space<vmem>>, vector<1x256x8xf32>
    %1 = vector.shape_cast %0 : vector<1x256x8xf32> to vector<256x8xf32>
    %cst = arith.constant dense<0.000000e+00> : vector<8xf32>
    %2 = vector.multi_reduction <add>, %1, %cst [0] : vector<256x8xf32> to vector<8xf32>
    %3 = vector.shape_cast %2 : vector<8xf32> to vector<1x8xf32>
    %cst_2 = arith.constant 2.560000e+02 : f32
    %4 = vector.broadcast %cst_2 : f32 to vector<1x8xf32>
    %5 = arith.divf %3, %4 : vector<1x8xf32>
    %6 = vector.broadcast %5 : vector<1x8xf32> to vector<256x8xf32>
    %7 = arith.subf %1, %6 : vector<256x8xf32>
    %8 = arith.mulf %7, %7 : vector<256x8xf32>
    %cst_3 = arith.constant dense<0.000000e+00> : vector<8xf32>
    %9 = vector.multi_reduction <add>, %8, %cst_3 [0] : vector<256x8xf32> to vector<8xf32>
    %10 = vector.shape_cast %9 : vector<8xf32> to vector<1x8xf32>
    %cst_4 = arith.constant 2.560000e+02 : f32
    %11 = vector.broadcast %cst_4 : f32 to vector<1x8xf32>
    %12 = arith.divf %10, %11 : vector<1x8xf32>
    %cst_5 = arith.constant 9.99999974E-6 : f32
    %13 = vector.broadcast %cst_5 : f32 to vector<1x8xf32>
    %14 = arith.addf %12, %13 : vector<1x8xf32>
    %15 = math.rsqrt %14 : vector<1x8xf32>
    %16 = vector.broadcast %15 : vector<1x8xf32> to vector<256x8xf32>
    %17 = arith.mulf %7, %16 : vector<256x8xf32>
    %cst_6 = arith.constant 0.000000e+00 : f32
    %18 = vector.broadcast %cst_6 : f32 to vector<256x8xf32>
    %19 = arith.subf %18, %17 : vector<256x8xf32>
    %20 = math.exp %19 : vector<256x8xf32>
    %cst_7 = arith.constant 1.000000e+00 : f32
    %21 = vector.broadcast %cst_7 : f32 to vector<256x8xf32>
    %22 = arith.addf %21, %20 : vector<256x8xf32>
    %23 = tpu.reciprocal %22 {approx = true} : vector<256x8xf32> -> vector<256x8xf32>
    %24 = arith.mulf %17, %23 : vector<256x8xf32>
    %c0_8 = arith.constant 0 : index
    %c0_9 = arith.constant 0 : index
    %c0_10 = arith.constant 0 : index
    %25 = vector.load %arg2[%c0_8, %c0_9, %c0_10] : memref<1x256x8xf32, #tpu.memory_space<vmem>>, vector<1x256x8xf32>
    %26 = vector.shape_cast %25 : vector<1x256x8xf32> to vector<256x8xf32>
    %27 = vector.shape_cast %24 : vector<256x8xf32> to vector<1x256x8xf32>
    tpu.vector_store %arg2[%c0_8, %c0_9, %c0_10], %27 {strides = array<i32>} : memref<1x256x8xf32, #tpu.memory_space<vmem>>, vector<1x256x8xf32>,
    return
  }
  func.func @transform_0(%arg0: i32) -> (i32, i32, i32) {
    %c0_i32 = arith.constant 0 : i32
    %c0_i32_0 = arith.constant 0 : i32
    %c0_i32_1 = arith.constant 0 : i32
    return %arg0, %c0_i32, %c0_i32_0 : i32, i32, i32
  }
  func.func @transform_1(%arg0: i32) -> (i32, i32, i32) {
    %c0_i32 = arith.constant 0 : i32
    %c0_i32_0 = arith.constant 0 : i32
    %c0_i32_1 = arith.constant 0 : i32
    return %arg0, %c0_i32, %c0_i32_0 : i32, i32, i32
  }
}

module attributes {stable_mosaic.version = 11 : i64} {
  func.func @_mm_bias_res_kernel(%arg0: i32, %arg1: i32, %arg2: i32, %arg3: memref<256x128xbf16, #tpu.memory_space<vmem>>, %arg4: memref<128x128xbf16, #tpu.memory_space<vmem>>, %arg5: memref<1x128xf32, #tpu.memory_space<vmem>>, %arg6: memref<256x128xf32, #tpu.memory_space<vmem>>, %arg7: memref<256x128xf32, #tpu.memory_space<vmem>>, %arg8: memref<256x128xf32, #tpu.memory_space<vmem>>) attributes {dimension_semantics = [#tpu.dimension_semantics<parallel>, #tpu.dimension_semantics<parallel>, #tpu.dimension_semantics<arbitrary>], iteration_bounds = array<i64: 2, 1, 1>, scalar_prefetch = 0 : i64, scratch_operands = 1 : i64, tpu.core_type = #tpu.core_type<tc>, window_params = [{transform_indices = @transform_0, window_bounds = array<i64: 256, 128>}, {transform_indices = @transform_1, window_bounds = array<i64: 128, 128>}, {transform_indices = @transform_2, window_bounds = array<i64: 1, 128>}, {transform_indices = @transform_3, window_bounds = array<i64: 256, 128>}, {transform_indices = @transform_4, window_bounds = array<i64: 256, 128>}]} {
    %c0_i32 = arith.constant 0 : i32
    %0 = arith.cmpi eq, %arg2, %c0_i32 : i32
    %1 = arith.extui %0 : i1 to i32
    %c0_i32_0 = arith.constant 0 : i32
    %2 = arith.cmpi ne, %1, %c0_i32_0 : i32
    scf.if %2 {
      %cst_10 = arith.constant 0.000000e+00 : f32
      %12 = vector.broadcast %cst_10 : f32 to vector<256x128xf32>
      %c0_11 = arith.constant 0 : index
      %c0_12 = arith.constant 0 : index
      %13 = vector.load %arg8[%c0_11, %c0_12] : memref<256x128xf32, #tpu.memory_space<vmem>>, vector<256x128xf32>
      tpu.vector_store %arg8[%c0_11, %c0_12], %12 {strides = array<i32>} : memref<256x128xf32, #tpu.memory_space<vmem>>, vector<256x128xf32>,
    } else {
    }
    %c0 = arith.constant 0 : index
    %c0_1 = arith.constant 0 : index
    %3 = vector.load %arg8[%c0, %c0_1] : memref<256x128xf32, #tpu.memory_space<vmem>>, vector<256x128xf32>
    %c0_2 = arith.constant 0 : index
    %c0_3 = arith.constant 0 : index
    %4 = vector.load %arg3[%c0_2, %c0_3] : memref<256x128xbf16, #tpu.memory_space<vmem>>, vector<256x128xbf16>
    %c0_4 = arith.constant 0 : index
    %c0_5 = arith.constant 0 : index
    %5 = vector.load %arg4[%c0_4, %c0_5] : memref<128x128xbf16, #tpu.memory_space<vmem>>, vector<128x128xbf16>
    %cst = arith.constant dense<0.000000e+00> : vector<256x128xf32>
    %6 = tpu.matmul %4, %5, %cst {dimension_numbers = #tpu.dot_dimension_numbers<[1], [0], [0], [1], [0, 0, 1, 1], [], []>} : vector<256x128xbf16>, vector<128x128xbf16>, vector<256x128xf32> -> vector<256x128xf32>
    %7 = arith.addf %3, %6 : vector<256x128xf32>
    %c0_6 = arith.constant 0 : index
    %c0_7 = arith.constant 0 : index
    %8 = vector.load %arg8[%c0_6, %c0_7] : memref<256x128xf32, #tpu.memory_space<vmem>>, vector<256x128xf32>
    tpu.vector_store %arg8[%c0_6, %c0_7], %7 {strides = array<i32>} : memref<256x128xf32, #tpu.memory_space<vmem>>, vector<256x128xf32>,
    %c0_i32_8 = arith.constant 0 : i32
    %9 = arith.cmpi eq, %arg2, %c0_i32_8 : i32
    %10 = arith.extui %9 : i1 to i32
    %c0_i32_9 = arith.constant 0 : i32
    %11 = arith.cmpi ne, %10, %c0_i32_9 : i32
    scf.if %11 {
      %c0_10 = arith.constant 0 : index
      %c0_11 = arith.constant 0 : index
      %12 = vector.load %arg8[%c0_10, %c0_11] : memref<256x128xf32, #tpu.memory_space<vmem>>, vector<256x128xf32>
      %c0_12 = arith.constant 0 : index
      %c0_13 = arith.constant 0 : index
      %13 = vector.load %arg5[%c0_12, %c0_13] : memref<1x128xf32, #tpu.memory_space<vmem>>, vector<1x128xf32>
      %14 = vector.broadcast %13 : vector<1x128xf32> to vector<256x128xf32>
      %15 = arith.addf %12, %14 : vector<256x128xf32>
      %c0_14 = arith.constant 0 : index
      %c0_15 = arith.constant 0 : index
      %16 = vector.load %arg6[%c0_14, %c0_15] : memref<256x128xf32, #tpu.memory_space<vmem>>, vector<256x128xf32>
      %17 = arith.addf %15, %16 : vector<256x128xf32>
      %c0_16 = arith.constant 0 : index
      %c0_17 = arith.constant 0 : index
      %18 = vector.load %arg7[%c0_16, %c0_17] : memref<256x128xf32, #tpu.memory_space<vmem>>, vector<256x128xf32>
      tpu.vector_store %arg7[%c0_16, %c0_17], %17 {strides = array<i32>} : memref<256x128xf32, #tpu.memory_space<vmem>>, vector<256x128xf32>,
    } else {
    }
    return
  }
  func.func @transform_0(%arg0: i32, %arg1: i32, %arg2: i32) -> (i32, i32) {
    %c0_i32 = arith.constant 0 : i32
    return %arg0, %arg2 : i32, i32
  }
  func.func @transform_1(%arg0: i32, %arg1: i32, %arg2: i32) -> (i32, i32) {
    %c0_i32 = arith.constant 0 : i32
    return %arg2, %arg1 : i32, i32
  }
  func.func @transform_2(%arg0: i32, %arg1: i32, %arg2: i32) -> (i32, i32) {
    %c0_i32 = arith.constant 0 : i32
    %c0_i32_0 = arith.constant 0 : i32
    return %c0_i32, %arg1 : i32, i32
  }
  func.func @transform_3(%arg0: i32, %arg1: i32, %arg2: i32) -> (i32, i32) {
    %c0_i32 = arith.constant 0 : i32
    return %arg0, %arg1 : i32, i32
  }
  func.func @transform_4(%arg0: i32, %arg1: i32, %arg2: i32) -> (i32, i32) {
    %c0_i32 = arith.constant 0 : i32
    return %arg0, %arg1 : i32, i32
  }
}

module attributes {stable_mosaic.version = 11 : i64} {
  func.func @_mm_bias_kernel(%arg0: i32, %arg1: i32, %arg2: i32, %arg3: memref<256x128xbf16, #tpu.memory_space<vmem>>, %arg4: memref<128x128xbf16, #tpu.memory_space<vmem>>, %arg5: memref<1x128xf32, #tpu.memory_space<vmem>>, %arg6: memref<256x128xf32, #tpu.memory_space<vmem>>, %arg7: memref<256x128xf32, #tpu.memory_space<vmem>>) attributes {dimension_semantics = [#tpu.dimension_semantics<parallel>, #tpu.dimension_semantics<parallel>, #tpu.dimension_semantics<arbitrary>], iteration_bounds = array<i64: 1, 1, 1>, scalar_prefetch = 0 : i64, scratch_operands = 1 : i64, tpu.core_type = #tpu.core_type<tc>, window_params = [{transform_indices = @transform_0, window_bounds = array<i64: 256, 128>}, {transform_indices = @transform_1, window_bounds = array<i64: 128, 128>}, {transform_indices = @transform_2, window_bounds = array<i64: 1, 128>}, {transform_indices = @transform_3, window_bounds = array<i64: 256, 128>}]} {
    %c0_i32 = arith.constant 0 : i32
    %0 = arith.cmpi eq, %arg2, %c0_i32 : i32
    %1 = arith.extui %0 : i1 to i32
    %c0_i32_0 = arith.constant 0 : i32
    %2 = arith.cmpi ne, %1, %c0_i32_0 : i32
    scf.if %2 {
      %cst_10 = arith.constant 0.000000e+00 : f32
      %12 = vector.broadcast %cst_10 : f32 to vector<256x128xf32>
      %c0_11 = arith.constant 0 : index
      %c0_12 = arith.constant 0 : index
      %13 = vector.load %arg7[%c0_11, %c0_12] : memref<256x128xf32, #tpu.memory_space<vmem>>, vector<256x128xf32>
      tpu.vector_store %arg7[%c0_11, %c0_12], %12 {strides = array<i32>} : memref<256x128xf32, #tpu.memory_space<vmem>>, vector<256x128xf32>,
    } else {
    }
    %c0 = arith.constant 0 : index
    %c0_1 = arith.constant 0 : index
    %3 = vector.load %arg7[%c0, %c0_1] : memref<256x128xf32, #tpu.memory_space<vmem>>, vector<256x128xf32>
    %c0_2 = arith.constant 0 : index
    %c0_3 = arith.constant 0 : index
    %4 = vector.load %arg3[%c0_2, %c0_3] : memref<256x128xbf16, #tpu.memory_space<vmem>>, vector<256x128xbf16>
    %c0_4 = arith.constant 0 : index
    %c0_5 = arith.constant 0 : index
    %5 = vector.load %arg4[%c0_4, %c0_5] : memref<128x128xbf16, #tpu.memory_space<vmem>>, vector<128x128xbf16>
    %cst = arith.constant dense<0.000000e+00> : vector<256x128xf32>
    %6 = tpu.matmul %4, %5, %cst {dimension_numbers = #tpu.dot_dimension_numbers<[1], [0], [0], [1], [0, 0, 1, 1], [], []>} : vector<256x128xbf16>, vector<128x128xbf16>, vector<256x128xf32> -> vector<256x128xf32>
    %7 = arith.addf %3, %6 : vector<256x128xf32>
    %c0_6 = arith.constant 0 : index
    %c0_7 = arith.constant 0 : index
    %8 = vector.load %arg7[%c0_6, %c0_7] : memref<256x128xf32, #tpu.memory_space<vmem>>, vector<256x128xf32>
    tpu.vector_store %arg7[%c0_6, %c0_7], %7 {strides = array<i32>} : memref<256x128xf32, #tpu.memory_space<vmem>>, vector<256x128xf32>,
    %c0_i32_8 = arith.constant 0 : i32
    %9 = arith.cmpi eq, %arg2, %c0_i32_8 : i32
    %10 = arith.extui %9 : i1 to i32
    %c0_i32_9 = arith.constant 0 : i32
    %11 = arith.cmpi ne, %10, %c0_i32_9 : i32
    scf.if %11 {
      %c0_10 = arith.constant 0 : index
      %c0_11 = arith.constant 0 : index
      %12 = vector.load %arg7[%c0_10, %c0_11] : memref<256x128xf32, #tpu.memory_space<vmem>>, vector<256x128xf32>
      %c0_12 = arith.constant 0 : index
      %c0_13 = arith.constant 0 : index
      %13 = vector.load %arg5[%c0_12, %c0_13] : memref<1x128xf32, #tpu.memory_space<vmem>>, vector<1x128xf32>
      %14 = vector.broadcast %13 : vector<1x128xf32> to vector<256x128xf32>
      %15 = arith.addf %12, %14 : vector<256x128xf32>
      %c0_14 = arith.constant 0 : index
      %c0_15 = arith.constant 0 : index
      %16 = vector.load %arg6[%c0_14, %c0_15] : memref<256x128xf32, #tpu.memory_space<vmem>>, vector<256x128xf32>
      tpu.vector_store %arg6[%c0_14, %c0_15], %15 {strides = array<i32>} : memref<256x128xf32, #tpu.memory_space<vmem>>, vector<256x128xf32>,
    } else {
    }
    return
  }
  func.func @transform_0(%arg0: i32, %arg1: i32, %arg2: i32) -> (i32, i32) {
    %c0_i32 = arith.constant 0 : i32
    return %arg0, %arg2 : i32, i32
  }
  func.func @transform_1(%arg0: i32, %arg1: i32, %arg2: i32) -> (i32, i32) {
    %c0_i32 = arith.constant 0 : i32
    return %arg2, %arg1 : i32, i32
  }
  func.func @transform_2(%arg0: i32, %arg1: i32, %arg2: i32) -> (i32, i32) {
    %c0_i32 = arith.constant 0 : i32
    %c0_i32_0 = arith.constant 0 : i32
    return %c0_i32, %arg1 : i32, i32
  }
  func.func @transform_3(%arg0: i32, %arg1: i32, %arg2: i32) -> (i32, i32) {
    %c0_i32 = arith.constant 0 : i32
    return %arg0, %arg1 : i32, i32
  }
}

</mosaic_0001>

<llo_original>
// kernel: _lambda_.8
$region0: #{_lambda_.8}
  #allocation0 [shape = 'u32[]', space=smem, size = 0x4, offset = 0x4, fixed_abs, tag = 'smem constant byte address 0x4 - core index']
  #allocation1 [shape = 'u32[72,128]{1,0:T(1,128)}', space=vmem, size = 0x9000, scoped, tag = 'internal scratch']
  %s0 = inlined_call_operand.vmem [shape: f32[2,256,4], index: 0, kind: input, shape index: {}]
  %s1 = inlined_call_operand.vmem [shape: f32[2,256,4], index: 1, kind: output, shape index: {}]
  %s2 = sld [smem:[#allocation0]]
  $region37: #{_lambda_.8} parent=0
    _
  %s4 = ssub.s32 1, %s2
  %s5 = scalar_select 0, %s4, %s2
  loop: start=0, step=1, limit=4
  $region2: #{_lambda_.8} parent=0 // loop_pre_header
    _
  $region3: #{_lambda_.8} parent=0 // loop_header
    %s7 = sphi 0, %s11
    %p8 = scmp.ge.s32.totalorder %s7, 4
    %s17 = sphi 0, %s19
    %s20 = sphi 0, %s17
    %s21 = sphi 0, %s20
    %s37 = sphi 0, %s21
    %s43 = sphi 0, %s45
    %s46 = sphi 0, %s43
    %s47 = sphi 0, %s46
    %s63 = sphi 0, %s47
  $region4: #{_lambda_.8} parent=0 // loop_header_branch
    %10 = sbr.rel (%p8) target = $region8
  $region5: #{_lambda_.8} parent=0 // loop_body
    %s12 = ssub.s32 %s7, 1
    %s13 = ssub.s32 %s7, 2
    %s14 = sadd.s32 %s7, 1
    %s15 = ssub.s32 %s7, %s14
    %p16 = scmp.eq.s32.totalorder %s15, 0
    %s18 = sadd.s32 %s17, 1
    %s19 = scalar_select %p16, %s17, %s18
    %p22 = pneg %p16
    %p23 = scmp.eq.s32.totalorder %s7, 1
    %p24 = por %p22, %p23
    %p25 = scmp.ne.s32.totalorder %s17, %s20
    %p26 = scmp.eq.s32.totalorder %s7, 0
    %p27 = por %p25, %p26
    %p28 = scmp.ne.s32.totalorder %s17, %s20
    %p29 = scmp.eq.s32.totalorder %s12, 1
    %p30 = por %p28, %p29
    %p31 = scmp.ne.s32.totalorder %s20, %s21
    %p32 = scmp.eq.s32.totalorder %s12, 0
    %p33 = por %p31, %p32
    %p34 = scmp.ne.s32.totalorder %s20, %s21
    %p35 = scmp.eq.s32.totalorder %s13, 1
    %p36 = por %p34, %p35
    %p38 = scmp.ne.s32.totalorder %s21, %s37
    %p39 = scmp.eq.s32.totalorder %s13, 0
    %p40 = por %p38, %p39
    %s41 = ssub.s32 %s7, %s14
    %p42 = scmp.eq.s32.totalorder %s41, 0
    %s44 = sadd.s32 %s43, 1
    %s45 = scalar_select %p42, %s43, %s44
    %p48 = pneg %p42
    %p49 = scmp.eq.s32.totalorder %s7, 1
    %p50 = por %p48, %p49
    %p51 = scmp.ne.s32.totalorder %s43, %s46
    %p52 = scmp.eq.s32.totalorder %s7, 0
    %p53 = por %p51, %p52
    %p54 = scmp.ne.s32.totalorder %s43, %s46
    %p55 = scmp.eq.s32.totalorder %s12, 1
    %p56 = por %p54, %p55
    %p57 = scmp.ne.s32.totalorder %s46, %s47
    %p58 = scmp.eq.s32.totalorder %s12, 0
    %p59 = por %p57, %p58
    %p60 = scmp.ne.s32.totalorder %s46, %s47
    %p61 = scmp.eq.s32.totalorder %s13, 1
    %p62 = por %p60, %p61
    %p64 = scmp.ne.s32.totalorder %s47, %s63
    %p65 = scmp.eq.s32.totalorder %s13, 0
    %p66 = por %p64, %p65
    %p67 = scmp.le.s32.totalorder 1, %s7
    %p68 = scmp.lt.s32.totalorder %s7, 3
    %p69 = pnand %p67, %p68
    %p70 = pneg %p69
    // Predicated region
    $region9: #{_lambda_.8} parent=5 // pred_check
      _
    $region10: #{_lambda_.8} parent=5 // pred_check_branch
      %72 = sbr.rel (%p69) target = $region12
    $region11: #{_lambda_.8} parent=5 // pred_region
      %s73 = ssub.s32 %s7, 1
    $region12: #{_lambda_.8} parent=5 // pred_fallthru
      _
    %p74 = scmp.lt.s32.totalorder %s7, 2
    // Predicated region
    $region13: #{_lambda_.8} parent=5 // pred_check
      %p75 = pneg %p74
    $region14: #{_lambda_.8} parent=5 // pred_check_branch
      %77 = sbr.rel (%p75) target = $region16
    $region15: #{_lambda_.8} parent=5 // pred_region
      // Predicated region
      $region17: #{_lambda_.8} parent=15 // pred_check
        %p78 = pneg %p27
      $region18: #{_lambda_.8} parent=15 // pred_check_branch
        %80 = sbr.rel (%p78) target = $region20
      $region19: #{_lambda_.8} parent=15 // pred_region
        %p81 = scmp.lt.s32.totalorder %s7, 1
        %s82 = scalar_select %p81, %s7, 1
        %s83 = smul.addr %s82, 32
        %s84 = smul.addr %s83, 8
        %s85 = scalar_lea.vmem %s0, %s84
      $region20: #{_lambda_.8} parent=15 // pred_fallthru
        _
    $region16: #{_lambda_.8} parent=5 // pred_fallthru
      _
    %p86 = scmp.le.s32.totalorder 1, %s7
    %p87 = scmp.lt.s32.totalorder %s7, 3
    %p88 = pnand %p86, %p87
    %p89 = pneg %p88
    // Predicated region
    $region21: #{_lambda_.8} parent=5 // pred_check
      _
    $region22: #{_lambda_.8} parent=5 // pred_check_branch
      %91 = sbr.rel (%p88) target = $region24
    $region23: #{_lambda_.8} parent=5 // pred_region
      %s92 = ssub.s32 %s7, 1
      %p93 = scmp.lt.s32.totalorder %s12, 1
      %s94 = scalar_select %p93, %s12, 1
      %s95 = smul.addr %s94, 32
      %s96 = smul.addr %s95, 8
      %s97 = scalar_lea.vmem %s0, %s96
      %p98 = pneg %p33
      %p99 = pneg %p30
      %p100 = pneg %p59
      %p101 = pneg %p56
      %p102 = scmp.lt.s32.totalorder %s12, 1
      %s103 = scalar_select %p102, %s12, 1
      %s104 = smul.addr %s103, 32
      %s105 = smul.addr %s104, 8
      %s106 = scalar_lea.vmem %s1, %s105
      %p107 = scmp.lt.s32.totalorder %s12, 1
      %s108 = scalar_select %p107, %s12, 1
      %s109 = smul.addr %s108, 32
      %s110 = smul.addr %s109, 8
      %s111 = scalar_lea.vmem %s0, %s110
      %p112 = scmp.lt.s32.totalorder %s12, 1
      %s113 = scalar_select %p112, %s12, 1
      %s114 = smul.addr %s113, 32
      %s115 = smul.addr %s114, 8
      %s116 = scalar_lea.vmem %s1, %s115
      %v117 = vld [vmem:[%s111] sm:$0xff]
      %v118 = vld [vmem:[%s111 + $0x8] sm:$0xff]
      %v119 = vld [vmem:[%s111 + $0x10] sm:$0xff]
      %v120 = vld [vmem:[%s111 + $0x18] sm:$0xff]
      %v121 = vld [vmem:[%s111 + $0x20] sm:$0xff]
      %v122 = vld [vmem:[%s111 + $0x28] sm:$0xff]
      %v123 = vld [vmem:[%s111 + $0x30] sm:$0xff]
      %v124 = vld [vmem:[%s111 + $0x38] sm:$0xff]
      %v125 = vld [vmem:[%s111 + $0x40] sm:$0xff]
      %v126 = vld [vmem:[%s111 + $0x48] sm:$0xff]
      %v127 = vld [vmem:[%s111 + $0x50] sm:$0xff]
      %v128 = vld [vmem:[%s111 + $0x58] sm:$0xff]
      %v129 = vld [vmem:[%s111 + $0x60] sm:$0xff]
      %v130 = vld [vmem:[%s111 + $0x68] sm:$0xff]
      %v131 = vld [vmem:[%s111 + $0x70] sm:$0xff]
      %v132 = vld [vmem:[%s111 + $0x78] sm:$0xff]
      %v133 = vld [vmem:[%s111 + $0x80] sm:$0xff]
      %v134 = vld [vmem:[%s111 + $0x88] sm:$0xff]
      %v135 = vld [vmem:[%s111 + $0x90] sm:$0xff]
      %v136 = vld [vmem:[%s111 + $0x98] sm:$0xff]
      %v137 = vld [vmem:[%s111 + $0xa0] sm:$0xff]
      %v138 = vld [vmem:[%s111 + $0xa8] sm:$0xff]
      %v139 = vld [vmem:[%s111 + $0xb0] sm:$0xff]
      %v140 = vld [vmem:[%s111 + $0xb8] sm:$0xff]
      %v141 = vld [vmem:[%s111 + $0xc0] sm:$0xff]
      %v142 = vld [vmem:[%s111 + $0xc8] sm:$0xff]
      %v143 = vld [vmem:[%s111 + $0xd0] sm:$0xff]
      %v144 = vld [vmem:[%s111 + $0xd8] sm:$0xff]
      %v145 = vld [vmem:[%s111 + $0xe0] sm:$0xff]
      %v146 = vld [vmem:[%s111 + $0xe8] sm:$0xff]
      %v147 = vld [vmem:[%s111 + $0xf0] sm:$0xff]
      %v148 = vld [vmem:[%s111 + $0xf8] sm:$0xff]
      %vm149 = vcmask 31744
      %v150 = vsel %vm149, %v117, 0.0
      %v151 = vsel %vm149, %v118, 0.0
      %v152 = vadd.f32 %v150, %v151
      %v153 = vsel %vm149, %v119, 0.0
      %v154 = vadd.f32 %v152, %v153
      %v155 = vsel %vm149, %v120, 0.0
      %v156 = vadd.f32 %v154, %v155
      %v157 = vsel %vm149, %v121, 0.0
      %v158 = vadd.f32 %v156, %v157
      %v159 = vsel %vm149, %v122, 0.0
      %v160 = vadd.f32 %v158, %v159
      %v161 = vsel %vm149, %v123, 0.0
      %v162 = vadd.f32 %v160, %v161
      %v163 = vsel %vm149, %v124, 0.0
      %v164 = vadd.f32 %v162, %v163
      %v165 = vsel %vm149, %v125, 0.0
      %v166 = vadd.f32 %v164, %v165
      %v167 = vsel %vm149, %v126, 0.0
      %v168 = vadd.f32 %v166, %v167
      %v169 = vsel %vm149, %v127, 0.0
      %v170 = vadd.f32 %v168, %v169
      %v171 = vsel %vm149, %v128, 0.0
      %v172 = vadd.f32 %v170, %v171
      %v173 = vsel %vm149, %v129, 0.0
      %v174 = vadd.f32 %v172, %v173
      %v175 = vsel %vm149, %v130, 0.0
      %v176 = vadd.f32 %v174, %v175
      %v177 = vsel %vm149, %v131, 0.0
      %v178 = vadd.f32 %v176, %v177
      %v179 = vsel %vm149, %v132, 0.0
      %v180 = vadd.f32 %v178, %v179
      %v181 = vsel %vm149, %v133, 0.0
      %v182 = vadd.f32 %v180, %v181
      %v183 = vsel %vm149, %v134, 0.0
      %v184 = vadd.f32 %v182, %v183
      %v185 = vsel %vm149, %v135, 0.0
      %v186 = vadd.f32 %v184, %v185
      %v187 = vsel %vm149, %v136, 0.0
      %v188 = vadd.f32 %v186, %v187
      %v189 = vsel %vm149, %v137, 0.0
      %v190 = vadd.f32 %v188, %v189
      %v191 = vsel %vm149, %v138, 0.0
      %v192 = vadd.f32 %v190, %v191
      %v193 = vsel %vm149, %v139, 0.0
      %v194 = vadd.f32 %v192, %v193
      %v195 = vsel %vm149, %v140, 0.0
      %v196 = vadd.f32 %v194, %v195
      %v197 = vsel %vm149, %v141, 0.0
      %v198 = vadd.f32 %v196, %v197
      %v199 = vsel %vm149, %v142, 0.0
      %v200 = vadd.f32 %v198, %v199
      %v201 = vsel %vm149, %v143, 0.0
      %v202 = vadd.f32 %v200, %v201
      %v203 = vsel %vm149, %v144, 0.0
      %v204 = vadd.f32 %v202, %v203
      %v205 = vsel %vm149, %v145, 0.0
      %v206 = vadd.f32 %v204, %v205
      %v207 = vsel %vm149, %v146, 0.0
      %v208 = vadd.f32 %v206, %v207
      %v209 = vsel %vm149, %v147, 0.0
      %v210 = vadd.f32 %v208, %v209
      %v211 = vsel %vm149, %v148, 0.0
      %v212 = vadd.f32 %v210, %v211
      %v213 = vrot.slane %v212, 4
      %v214 = vadd.f32 %v212, %v213
      %v215 = vrot.slane %v214, 2
      %v216 = vadd.f32 %v214, %v215
      %v217 = vrot.slane %v216, 1
      %v218 = vadd.f32 %v216, %v217
      %v219 = vrcp.pop 256.0
      %v220 = vmul.f32 256.0, %v219
      %v221 = vsub.f32 1.0, %v220
      %v222 = vmul.f32 %v219, %v221
      %v223 = vadd.f32 %v219, %v222
      %vm224 = vweird.f32 %v219
      %v225 = vsel %vm224, %v219, %v223
      %v226 = vmul.f32 %v218, %v225
      %v227 = vsub.f32 %v117, %v226
      %v228 = vsub.f32 %v118, %v226
      %v229 = vsub.f32 %v119, %v226
      %v230 = vsub.f32 %v120, %v226
      %v231 = vsub.f32 %v121, %v226
      %v232 = vsub.f32 %v122, %v226
      %v233 = vsub.f32 %v123, %v226
      %v234 = vsub.f32 %v124, %v226
      %v235 = vsub.f32 %v125, %v226
      %v236 = vsub.f32 %v126, %v226
      %v237 = vsub.f32 %v127, %v226
      %v238 = vsub.f32 %v128, %v226
      %v239 = vsub.f32 %v129, %v226
      %v240 = vsub.f32 %v130, %v226
      %v241 = vsub.f32 %v131, %v226
      %v242 = vsub.f32 %v132, %v226
      %v243 = vsub.f32 %v133, %v226
      %v244 = vsub.f32 %v134, %v226
      %v245 = vsub.f32 %v135, %v226
      %v246 = vsub.f32 %v136, %v226
      %v247 = vsub.f32 %v137, %v226
      %v248 = vsub.f32 %v138, %v226
      %v249 = vsub.f32 %v139, %v226
      %v250 = vsub.f32 %v140, %v226
      %v251 = vsub.f32 %v141, %v226
      %v252 = vsub.f32 %v142, %v226
      %v253 = vsub.f32 %v143, %v226
      %v254 = vsub.f32 %v144, %v226
      %v255 = vsub.f32 %v145, %v226
      %v256 = vsub.f32 %v146, %v226
      %v257 = vsub.f32 %v147, %v226
      %v258 = vsub.f32 %v148, %v226
      %v259 = vmul.f32 %v227, %v227
      %v260 = vmul.f32 %v228, %v228
      %v261 = vmul.f32 %v229, %v229
      %v262 = vmul.f32 %v230, %v230
      %v263 = vmul.f32 %v231, %v231
      %v264 = vmul.f32 %v232, %v232
      %v265 = vmul.f32 %v233, %v233
      %v266 = vmul.f32 %v234, %v234
      %v267 = vmul.f32 %v235, %v235
      %v268 = vmul.f32 %v236, %v236
      %v269 = vmul.f32 %v237, %v237
      %v270 = vmul.f32 %v238, %v238
      %v271 = vmul.f32 %v239, %v239
      %v272 = vmul.f32 %v240, %v240
      %v273 = vmul.f32 %v241, %v241
      %v274 = vmul.f32 %v242, %v242
      %v275 = vmul.f32 %v243, %v243
      %v276 = vmul.f32 %v244, %v244
      %v277 = vmul.f32 %v245, %v245
      %v278 = vmul.f32 %v246, %v246
      %v279 = vmul.f32 %v247, %v247
      %v280 = vmul.f32 %v248, %v248
      %v281 = vmul.f32 %v249, %v249
      %v282 = vmul.f32 %v250, %v250
      %v283 = vmul.f32 %v251, %v251
      %v284 = vmul.f32 %v252, %v252
      %v285 = vmul.f32 %v253, %v253
      %v286 = vmul.f32 %v254, %v254
      %v287 = vmul.f32 %v255, %v255
      %v288 = vmul.f32 %v256, %v256
      %v289 = vmul.f32 %v257, %v257
      %v290 = vmul.f32 %v258, %v258
      %v291 = vsel %vm149, %v259, 0.0
      %v292 = vsel %vm149, %v260, 0.0
      %v293 = vadd.f32 %v291, %v292
      %v294 = vsel %vm149, %v261, 0.0
      %v295 = vadd.f32 %v293, %v294
      %v296 = vsel %vm149, %v262, 0.0
      %v297 = vadd.f32 %v295, %v296
      %v298 = vsel %vm149, %v263, 0.0
      %v299 = vadd.f32 %v297, %v298
      %v300 = vsel %vm149, %v264, 0.0
      %v301 = vadd.f32 %v299, %v300
      %v302 = vsel %vm149, %v265, 0.0
      %v303 = vadd.f32 %v301, %v302
      %v304 = vsel %vm149, %v266, 0.0
      %v305 = vadd.f32 %v303, %v304
      %v306 = vsel %vm149, %v267, 0.0
      %v307 = vadd.f32 %v305, %v306
      %v308 = vsel %vm149, %v268, 0.0
      %v309 = vadd.f32 %v307, %v308
      %v310 = vsel %vm149, %v269, 0.0
      %v311 = vadd.f32 %v309, %v310
      %v312 = vsel %vm149, %v270, 0.0
      %v313 = vadd.f32 %v311, %v312
      %v314 = vsel %vm149, %v271, 0.0
      %v315 = vadd.f32 %v313, %v314
      %v316 = vsel %vm149, %v272, 0.0
      %v317 = vadd.f32 %v315, %v316
      %v318 = vsel %vm149, %v273, 0.0
      %v319 = vadd.f32 %v317, %v318
      %v320 = vsel %vm149, %v274, 0.0
      %v321 = vadd.f32 %v319, %v320
      %v322 = vsel %vm149, %v275, 0.0
      %v323 = vadd.f32 %v321, %v322
      %v324 = vsel %vm149, %v276, 0.0
      %v325 = vadd.f32 %v323, %v324
      %v326 = vsel %vm149, %v277, 0.0
      %v327 = vadd.f32 %v325, %v326
      %v328 = vsel %vm149, %v278, 0.0
      %v329 = vadd.f32 %v327, %v328
      %v330 = vsel %vm149, %v279, 0.0
      %v331 = vadd.f32 %v329, %v330
      %v332 = vsel %vm149, %v280, 0.0
      %v333 = vadd.f32 %v331, %v332
      %v334 = vsel %vm149, %v281, 0.0
      %v335 = vadd.f32 %v333, %v334
      %v336 = vsel %vm149, %v282, 0.0
      %v337 = vadd.f32 %v335, %v336
      %v338 = vsel %vm149, %v283, 0.0
      %v339 = vadd.f32 %v337, %v338
      %v340 = vsel %vm149, %v284, 0.0
      %v341 = vadd.f32 %v339, %v340
      %v342 = vsel %vm149, %v285, 0.0
      %v343 = vadd.f32 %v341, %v342
      %v344 = vsel %vm149, %v286, 0.0
      %v345 = vadd.f32 %v343, %v344
      %v346 = vsel %vm149, %v287, 0.0
      %v347 = vadd.f32 %v345, %v346
      %v348 = vsel %vm149, %v288, 0.0
      %v349 = vadd.f32 %v347, %v348
      %v350 = vsel %vm149, %v289, 0.0
      %v351 = vadd.f32 %v349, %v350
      %v352 = vsel %vm149, %v290, 0.0
      %v353 = vadd.f32 %v351, %v352
      %v354 = vrot.slane %v353, 4
      %v355 = vadd.f32 %v353, %v354
      %v356 = vrot.slane %v355, 2
      %v357 = vadd.f32 %v355, %v356
      %v358 = vrot.slane %v357, 1
      %v359 = vadd.f32 %v357, %v358
      %v360 = vmul.f32 %v359, %v225
      %v361 = vadd.f32 %v360, 1e-05
      %v362 = vrsqrt.pop %v361
      %v363 = vmul.f32 %v362, %v361
      %v364 = vmul.f32 %v363, %v362
      %v365 = vmul.f32 0.5, %v364
      %v366 = vsub.f32 1.5, %v365
      %v367 = vmul.f32 %v362, %v366
      %vm368 = vweird.f32 %v361
      %vm369 = vweird.f32 %v362
      %vm370 = vmor %vm368, %vm369
      %v371 = vsel %vm370, %v362, %v367
      %v372 = vmul.f32 %v227, %v371
      %v373 = vmul.f32 %v228, %v371
      %v374 = vmul.f32 %v229, %v371
      %v375 = vmul.f32 %v230, %v371
      %v376 = vmul.f32 %v231, %v371
      %v377 = vmul.f32 %v232, %v371
      %v378 = vmul.f32 %v233, %v371
      %v379 = vmul.f32 %v234, %v371
      %v380 = vmul.f32 %v235, %v371
      %v381 = vmul.f32 %v236, %v371
      %v382 = vmul.f32 %v237, %v371
      %v383 = vmul.f32 %v238, %v371
      %v384 = vmul.f32 %v239, %v371
      %v385 = vmul.f32 %v240, %v371
      %v386 = vmul.f32 %v241, %v371
      %v387 = vmul.f32 %v242, %v371
      %v388 = vmul.f32 %v243, %v371
      %v389 = vmul.f32 %v244, %v371
      %v390 = vmul.f32 %v245, %v371
      %v391 = vmul.f32 %v246, %v371
      %v392 = vmul.f32 %v247, %v371
      %v393 = vmul.f32 %v248, %v371
      %v394 = vmul.f32 %v249, %v371
      %v395 = vmul.f32 %v250, %v371
      %v396 = vmul.f32 %v251, %v371
      %v397 = vmul.f32 %v252, %v371
      %v398 = vmul.f32 %v253, %v371
      %v399 = vmul.f32 %v254, %v371
      %v400 = vmul.f32 %v255, %v371
      %v401 = vmul.f32 %v256, %v371
      %v402 = vmul.f32 %v257, %v371
      %v403 = vmul.f32 %v258, %v371
      %v404 = vsub.f32 0.0, %v372
      %v405 = vsub.f32 0.0, %v373
      %v406 = vsub.f32 0.0, %v374
      %v407 = vsub.f32 0.0, %v375
      %v408 = vsub.f32 0.0, %v376
      %v409 = vsub.f32 0.0, %v377
      %v410 = vsub.f32 0.0, %v378
      %v411 = vsub.f32 0.0, %v379
      %v412 = vsub.f32 0.0, %v380
      %v413 = vsub.f32 0.0, %v381
      %v414 = vsub.f32 0.0, %v382
      %v415 = vsub.f32 0.0, %v383
      %v416 = vsub.f32 0.0, %v384
      %v417 = vsub.f32 0.0, %v385
      %v418 = vsub.f32 0.0, %v386
      %v419 = vsub.f32 0.0, %v387
      %v420 = vsub.f32 0.0, %v388
      %v421 = vsub.f32 0.0, %v389
      %v422 = vsub.f32 0.0, %v390
      %v423 = vsub.f32 0.0, %v391
      %v424 = vsub.f32 0.0, %v392
      %v425 = vsub.f32 0.0, %v393
      %v426 = vsub.f32 0.0, %v394
      %v427 = vsub.f32 0.0, %v395
      %v428 = vsub.f32 0.0, %v396
      %v429 = vsub.f32 0.0, %v397
      %v430 = vsub.f32 0.0, %v398
      %v431 = vsub.f32 0.0, %v399
      %v432 = vsub.f32 0.0, %v400
      %v433 = vsub.f32 0.0, %v401
      %v434 = vsub.f32 0.0, %v402
      %v435 = vsub.f32 0.0, %v403
      %v436 = vmul.f32 %v404, 1.442695
      %v437 = vpow.pop %v436
      %v438 = vmul.f32 %v405, 1.442695
      %v439 = vpow.pop %v438
      %v440 = vmul.f32 %v406, 1.442695
      %v441 = vpow.pop %v440
      %v442 = vmul.f32 %v407, 1.442695
      %v443 = vpow.pop %v442
      %v444 = vmul.f32 %v408, 1.442695
      %v445 = vpow.pop %v444
      %v446 = vmul.f32 %v409, 1.442695
      %v447 = vpow.pop %v446
      %v448 = vmul.f32 %v410, 1.442695
      %v449 = vpow.pop %v448
      %v450 = vmul.f32 %v411, 1.442695
      %v451 = vpow.pop %v450
      %v452 = vmul.f32 %v412, 1.442695
      %v453 = vpow.pop %v452
      %v454 = vmul.f32 %v413, 1.442695
      %v455 = vpow.pop %v454
      %v456 = vmul.f32 %v414, 1.442695
      %v457 = vpow.pop %v456
      %v458 = vmul.f32 %v415, 1.442695
      %v459 = vpow.pop %v458
      %v460 = vmul.f32 %v416, 1.442695
      %v461 = vpow.pop %v460
      %v462 = vmul.f32 %v417, 1.442695
      %v463 = vpow.pop %v462
      %v464 = vmul.f32 %v418, 1.442695
      %v465 = vpow.pop %v464
      %v466 = vmul.f32 %v419, 1.442695
      %v467 = vpow.pop %v466
      %v468 = vmul.f32 %v420, 1.442695
      %v469 = vpow.pop %v468
      %v470 = vmul.f32 %v421, 1.442695
      %v471 = vpow.pop %v470
      %v472 = vmul.f32 %v422, 1.442695
      %v473 = vpow.pop %v472
      %v474 = vmul.f32 %v423, 1.442695
      %v475 = vpow.pop %v474
      %v476 = vmul.f32 %v424, 1.442695
      %v477 = vpow.pop %v476
      %v478 = vmul.f32 %v425, 1.442695
      %v479 = vpow.pop %v478
      %v480 = vmul.f32 %v426, 1.442695
      %v481 = vpow.pop %v480
      %v482 = vmul.f32 %v427, 1.442695
      %v483 = vpow.pop %v482
      %v484 = vmul.f32 %v428, 1.442695
      %v485 = vpow.pop %v484
      %v486 = vmul.f32 %v429, 1.442695
      %v487 = vpow.pop %v486
      %v488 = vmul.f32 %v430, 1.442695
      %v489 = vpow.pop %v488
      %v490 = vmul.f32 %v431, 1.442695
      %v491 = vpow.pop %v490
      %v492 = vmul.f32 %v432, 1.442695
      %v493 = vpow.pop %v492
      %v494 = vmul.f32 %v433, 1.442695
      %v495 = vpow.pop %v494
      %v496 = vmul.f32 %v434, 1.442695
      %v497 = vpow.pop %v496
      %v498 = vmul.f32 %v435, 1.442695
      %v499 = vpow.pop %v498
      %v500 = vadd.f32 %v437, 1.0
      %v501 = vadd.f32 %v439, 1.0
      %v502 = vadd.f32 %v441, 1.0
      %v503 = vadd.f32 %v443, 1.0
      %v504 = vadd.f32 %v445, 1.0
      %v505 = vadd.f32 %v447, 1.0
      %v506 = vadd.f32 %v449, 1.0
      %v507 = vadd.f32 %v451, 1.0
      %v508 = vadd.f32 %v453, 1.0
      %v509 = vadd.f32 %v455, 1.0
      %v510 = vadd.f32 %v457, 1.0
      %v511 = vadd.f32 %v459, 1.0
      %v512 = vadd.f32 %v461, 1.0
      %v513 = vadd.f32 %v463, 1.0
      %v514 = vadd.f32 %v465, 1.0
      %v515 = vadd.f32 %v467, 1.0
      %v516 = vadd.f32 %v469, 1.0
      %v517 = vadd.f32 %v471, 1.0
      %v518 = vadd.f32 %v473, 1.0
      %v519 = vadd.f32 %v475, 1.0
      %v520 = vadd.f32 %v477, 1.0
      %v521 = vadd.f32 %v479, 1.0
      %v522 = vadd.f32 %v481, 1.0
      %v523 = vadd.f32 %v483, 1.0
      %v524 = vadd.f32 %v485, 1.0
      %v525 = vadd.f32 %v487, 1.0
      %v526 = vadd.f32 %v489, 1.0
      %v527 = vadd.f32 %v491, 1.0
      %v528 = vadd.f32 %v493, 1.0
      %v529 = vadd.f32 %v495, 1.0
      %v530 = vadd.f32 %v497, 1.0
      %v531 = vadd.f32 %v499, 1.0
      %v532 = vrcp.pop %v500
      %v533 = vrcp.pop %v501
      %v534 = vrcp.pop %v502
      %v535 = vrcp.pop %v503
      %v536 = vrcp.pop %v504
      %v537 = vrcp.pop %v505
      %v538 = vrcp.pop %v506
      %v539 = vrcp.pop %v507
      %v540 = vrcp.pop %v508
      %v541 = vrcp.pop %v509
      %v542 = vrcp.pop %v510
      %v543 = vrcp.pop %v511
      %v544 = vrcp.pop %v512
      %v545 = vrcp.pop %v513
      %v546 = vrcp.pop %v514
      %v547 = vrcp.pop %v515
      %v548 = vrcp.pop %v516
      %v549 = vrcp.pop %v517
      %v550 = vrcp.pop %v518
      %v551 = vrcp.pop %v519
      %v552 = vrcp.pop %v520
      %v553 = vrcp.pop %v521
      %v554 = vrcp.pop %v522
      %v555 = vrcp.pop %v523
      %v556 = vrcp.pop %v524
      %v557 = vrcp.pop %v525
      %v558 = vrcp.pop %v526
      %v559 = vrcp.pop %v527
      %v560 = vrcp.pop %v528
      %v561 = vrcp.pop %v529
      %v562 = vrcp.pop %v530
      %v563 = vrcp.pop %v531
      %v564 = vmul.f32 %v372, %v532
      %v565 = vmul.f32 %v373, %v533
      %v566 = vmul.f32 %v374, %v534
      %v567 = vmul.f32 %v375, %v535
      %v568 = vmul.f32 %v376, %v536
      %v569 = vmul.f32 %v377, %v537
      %v570 = vmul.f32 %v378, %v538
      %v571 = vmul.f32 %v379, %v539
      %v572 = vmul.f32 %v380, %v540
      %v573 = vmul.f32 %v381, %v541
      %v574 = vmul.f32 %v382, %v542
      %v575 = vmul.f32 %v383, %v543
      %v576 = vmul.f32 %v384, %v544
      %v577 = vmul.f32 %v385, %v545
      %v578 = vmul.f32 %v386, %v546
      %v579 = vmul.f32 %v387, %v547
      %v580 = vmul.f32 %v388, %v548
      %v581 = vmul.f32 %v389, %v549
      %v582 = vmul.f32 %v390, %v550
      %v583 = vmul.f32 %v391, %v551
      %v584 = vmul.f32 %v392, %v552
      %v585 = vmul.f32 %v393, %v553
      %v586 = vmul.f32 %v394, %v554
      %v587 = vmul.f32 %v395, %v555
      %v588 = vmul.f32 %v396, %v556
      %v589 = vmul.f32 %v397, %v557
      %v590 = vmul.f32 %v398, %v558
      %v591 = vmul.f32 %v399, %v559
      %v592 = vmul.f32 %v400, %v560
      %v593 = vmul.f32 %v401, %v561
      %v594 = vmul.f32 %v402, %v562
      %v595 = vmul.f32 %v403, %v563
      %596 = vst.msk [vmem:[%s116] sm:$0xff] %vm149, %v564
      %597 = vst.msk [vmem:[%s116 + $0x8] sm:$0xff] %vm149, %v565
      %598 = vst.msk [vmem:[%s116 + $0x10] sm:$0xff] %vm149, %v566
      %599 = vst.msk [vmem:[%s116 + $0x18] sm:$0xff] %vm149, %v567
      %600 = vst.msk [vmem:[%s116 + $0x20] sm:$0xff] %vm149, %v568
      %601 = vst.msk [vmem:[%s116 + $0x28] sm:$0xff] %vm149, %v569
      %602 = vst.msk [vmem:[%s116 + $0x30] sm:$0xff] %vm149, %v570
      %603 = vst.msk [vmem:[%s116 + $0x38] sm:$0xff] %vm149, %v571
      %604 = vst.msk [vmem:[%s116 + $0x40] sm:$0xff] %vm149, %v572
      %605 = vst.msk [vmem:[%s116 + $0x48] sm:$0xff] %vm149, %v573
      %606 = vst.msk [vmem:[%s116 + $0x50] sm:$0xff] %vm149, %v574
      %607 = vst.msk [vmem:[%s116 + $0x58] sm:$0xff] %vm149, %v575
      %608 = vst.msk [vmem:[%s116 + $0x60] sm:$0xff] %vm149, %v576
      %609 = vst.msk [vmem:[%s116 + $0x68] sm:$0xff] %vm149, %v577
      %610 = vst.msk [vmem:[%s116 + $0x70] sm:$0xff] %vm149, %v578
      %611 = vst.msk [vmem:[%s116 + $0x78] sm:$0xff] %vm149, %v579
      %612 = vst.msk [vmem:[%s116 + $0x80] sm:$0xff] %vm149, %v580
      %613 = vst.msk [vmem:[%s116 + $0x88] sm:$0xff] %vm149, %v581
      %614 = vst.msk [vmem:[%s116 + $0x90] sm:$0xff] %vm149, %v582
      %615 = vst.msk [vmem:[%s116 + $0x98] sm:$0xff] %vm149, %v583
      %616 = vst.msk [vmem:[%s116 + $0xa0] sm:$0xff] %vm149, %v584
      %617 = vst.msk [vmem:[%s116 + $0xa8] sm:$0xff] %vm149, %v585
      %618 = vst.msk [vmem:[%s116 + $0xb0] sm:$0xff] %vm149, %v586
      %619 = vst.msk [vmem:[%s116 + $0xb8] sm:$0xff] %vm149, %v587
      %620 = vst.msk [vmem:[%s116 + $0xc0] sm:$0xff] %vm149, %v588
      %621 = vst.msk [vmem:[%s116 + $0xc8] sm:$0xff] %vm149, %v589
      %622 = vst.msk [vmem:[%s116 + $0xd0] sm:$0xff] %vm149, %v590
      %623 = vst.msk [vmem:[%s116 + $0xd8] sm:$0xff] %vm149, %v591
      %624 = vst.msk [vmem:[%s116 + $0xe0] sm:$0xff] %vm149, %v592
      %625 = vst.msk [vmem:[%s116 + $0xe8] sm:$0xff] %vm149, %v593
      %626 = vst.msk [vmem:[%s116 + $0xf0] sm:$0xff] %vm149, %v594
      %627 = vst.msk [vmem:[%s116 + $0xf8] sm:$0xff] %vm149, %v595
      %p628 = scmp.lt.s32.totalorder %s12, 1
      %s629 = scalar_select %p628, %s12, 1
      %s630 = smul.addr %s629, 32
      %s631 = smul.addr %s630, 8
      %s632 = scalar_lea.vmem %s1, %s631
      // Predicated region
      $region25: #{_lambda_.8} parent=23 // pred_check
        %p633 = pneg %p56
      $region26: #{_lambda_.8} parent=23 // pred_check_branch
        %635 = sbr.rel (%p633) target = $region28
      $region27: #{_lambda_.8} parent=23 // pred_region
        _
      $region28: #{_lambda_.8} parent=23 // pred_fallthru
        _
    $region24: #{_lambda_.8} parent=5 // pred_fallthru
      _
    %p636 = scmp.le.s32.totalorder 2, %s7
    // Predicated region
    $region29: #{_lambda_.8} parent=5 // pred_check
      %p637 = pneg %p636
    $region30: #{_lambda_.8} parent=5 // pred_check_branch
      %639 = sbr.rel (%p637) target = $region32
    $region31: #{_lambda_.8} parent=5 // pred_region
      %s640 = ssub.s32 %s7, 2
      // Predicated region
      $region33: #{_lambda_.8} parent=31 // pred_check
        %p641 = pneg %p62
      $region34: #{_lambda_.8} parent=31 // pred_check_branch
        %643 = sbr.rel (%p641) target = $region36
      $region35: #{_lambda_.8} parent=31 // pred_region
        %p644 = scmp.lt.s32.totalorder %s13, 1
        %s645 = scalar_select %p644, %s13, 1
        %s646 = smul.addr %s645, 32
        %s647 = smul.addr %s646, 8
        %s648 = scalar_lea.vmem %s1, %s647
      $region36: #{_lambda_.8} parent=31 // pred_fallthru
        _
    $region32: #{_lambda_.8} parent=5 // pred_fallthru
      _
  $region6: #{_lambda_.8} parent=0 // loop_footer
    %s11 = sadd.s32 1, %s7
  $region7: #{_lambda_.8} parent=0 // loop_footer_branch
    %6 = sbr.rel target = $region3
  $region8: #{_lambda_.8} parent=0 // loop_exit
    _

// kernel: _lambda_.7
$region0: #{_lambda_.7}
  #allocation0 [shape = 'u32[]', space=smem, size = 0x4, offset = 0x4, fixed_abs, tag = 'smem constant byte address 0x4 - core index']
  #allocation1 [shape = 'u32[72,128]{1,0:T(1,128)}', space=vmem, size = 0x9000, scoped, tag = 'internal scratch']
  #allocation2 [shape = 'f32[256,128]{1,0:T(8,128)}', space=vmem, size = 0x20000, scoped, tag = 'scratch operand']
  %s0 = inlined_call_operand.vmem [shape: bf16[512,128], index: 0, kind: input, shape index: {}]
  %s1 = inlined_call_operand.vmem [shape: bf16[128,128], index: 1, kind: input, shape index: {}]
  %s2 = inlined_call_operand.vmem [shape: f32[1,128], index: 2, kind: input, shape index: {}]
  %s3 = inlined_call_operand.vmem [shape: f32[512,128], index: 3, kind: output, shape index: {}]
  %s4 = sld [smem:[#allocation0]]
  $region53: #{_lambda_.7} parent=0
    _
  %s6 = ssub.s32 1, %s4
  %s7 = scalar_select 0, %s6, %s4
  loop: start=0, step=1, limit=4
  $region2: #{_lambda_.7} parent=0 // loop_pre_header
    _
  $region3: #{_lambda_.7} parent=0 // loop_header
    %s9 = sphi 0, %s13
    %p10 = scmp.ge.s32.totalorder %s9, 4
    %s16 = sphi 0, %s35
    %s17 = sphi 0, %s31
    %s18 = sphi 0, %s27
    %s19 = sphi 0, %s16
    %s20 = sphi 0, %s17
    %s21 = sphi 0, %s18
    %s22 = sphi 0, %s19
    %s23 = sphi 0, %s20
    %s24 = sphi 0, %s21
    %s40 = sphi 0, %s42
    %s43 = sphi 0, %s40
    %s44 = sphi 0, %s43
    %s60 = sphi 0, %s44
    %s68 = sphi 0, %s70
    %s71 = sphi 0, %s68
    %s72 = sphi 0, %s71
    %s88 = sphi 0, %s72
    %s94 = sphi 0, %s96
    %s97 = sphi 0, %s94
    %s98 = sphi 0, %s97
    %s114 = sphi 0, %s98
    %s122 = sphi 0, %s124
    %s125 = sphi 0, %s122
    %s126 = sphi 0, %s125
    %s142 = sphi 0, %s126
  $region4: #{_lambda_.7} parent=0 // loop_header_branch
    %12 = sbr.rel (%p10) target = $region8
  $region5: #{_lambda_.7} parent=0 // loop_body
    %s14 = ssub.s32 %s9, 1
    %s15 = ssub.s32 %s9, 2
    %s25 = sadd.s32 1, %s18
    %p26 = scmp.ge.s32.totalorder %s25, 1
    %s27 = scalar_select %p26, 0, %s25
    %s28 = sadd.s32 1, %s17
    %s29 = scalar_select %p26, %s28, %s17
    %p30 = scmp.ge.s32.totalorder %s29, 1
    %s31 = scalar_select %p30, 0, %s29
    %s32 = sadd.s32 1, %s16
    %s33 = scalar_select %p30, %s32, %s16
    %p34 = scmp.ge.s32.totalorder %s33, 2
    %s35 = scalar_select %p34, 0, %s33
    %s36 = ssub.s32 %s16, %s35
    %s37 = ssub.s32 %s18, %s27
    %s38 = sor.u32 %s36, %s37
    %p39 = scmp.eq.s32.totalorder %s38, 0
    %s41 = sadd.s32 %s40, 1
    %s42 = scalar_select %p39, %s40, %s41
    %p45 = pneg %p39
    %p46 = scmp.eq.s32.totalorder %s9, 1
    %p47 = por %p45, %p46
    %p48 = scmp.ne.s32.totalorder %s40, %s43
    %p49 = scmp.eq.s32.totalorder %s9, 0
    %p50 = por %p48, %p49
    %p51 = scmp.ne.s32.totalorder %s40, %s43
    %p52 = scmp.eq.s32.totalorder %s14, 1
    %p53 = por %p51, %p52
    %p54 = scmp.ne.s32.totalorder %s43, %s44
    %p55 = scmp.eq.s32.totalorder %s14, 0
    %p56 = por %p54, %p55
    %p57 = scmp.ne.s32.totalorder %s43, %s44
    %p58 = scmp.eq.s32.totalorder %s15, 1
    %p59 = por %p57, %p58
    %p61 = scmp.ne.s32.totalorder %s44, %s60
    %p62 = scmp.eq.s32.totalorder %s15, 0
    %p63 = por %p61, %p62
    %s64 = ssub.s32 %s18, %s27
    %s65 = ssub.s32 %s17, %s31
    %s66 = sor.u32 %s64, %s65
    %p67 = scmp.eq.s32.totalorder %s66, 0
    %s69 = sadd.s32 %s68, 1
    %s70 = scalar_select %p67, %s68, %s69
    %p73 = pneg %p67
    %p74 = scmp.eq.s32.totalorder %s9, 1
    %p75 = por %p73, %p74
    %p76 = scmp.ne.s32.totalorder %s68, %s71
    %p77 = scmp.eq.s32.totalorder %s9, 0
    %p78 = por %p76, %p77
    %p79 = scmp.ne.s32.totalorder %s68, %s71
    %p80 = scmp.eq.s32.totalorder %s14, 1
    %p81 = por %p79, %p80
    %p82 = scmp.ne.s32.totalorder %s71, %s72
    %p83 = scmp.eq.s32.totalorder %s14, 0
    %p84 = por %p82, %p83
    %p85 = scmp.ne.s32.totalorder %s71, %s72
    %p86 = scmp.eq.s32.totalorder %s15, 1
    %p87 = por %p85, %p86
    %p89 = scmp.ne.s32.totalorder %s72, %s88
    %p90 = scmp.eq.s32.totalorder %s15, 0
    %p91 = por %p89, %p90
    %s92 = ssub.s32 %s17, %s31
    %p93 = scmp.eq.s32.totalorder %s92, 0
    %s95 = sadd.s32 %s94, 1
    %s96 = scalar_select %p93, %s94, %s95
    %p99 = pneg %p93
    %p100 = scmp.eq.s32.totalorder %s9, 1
    %p101 = por %p99, %p100
    %p102 = scmp.ne.s32.totalorder %s94, %s97
    %p103 = scmp.eq.s32.totalorder %s9, 0
    %p104 = por %p102, %p103
    %p105 = scmp.ne.s32.totalorder %s94, %s97
    %p106 = scmp.eq.s32.totalorder %s14, 1
    %p107 = por %p105, %p106
    %p108 = scmp.ne.s32.totalorder %s97, %s98
    %p109 = scmp.eq.s32.totalorder %s14, 0
    %p110 = por %p108, %p109
    %p111 = scmp.ne.s32.totalorder %s97, %s98
    %p112 = scmp.eq.s32.totalorder %s15, 1
    %p113 = por %p111, %p112
    %p115 = scmp.ne.s32.totalorder %s98, %s114
    %p116 = scmp.eq.s32.totalorder %s15, 0
    %p117 = por %p115, %p116
    %s118 = ssub.s32 %s16, %s35
    %s119 = ssub.s32 %s17, %s31
    %s120 = sor.u32 %s118, %s119
    %p121 = scmp.eq.s32.totalorder %s120, 0
    %s123 = sadd.s32 %s122, 1
    %s124 = scalar_select %p121, %s122, %s123
    %p127 = pneg %p121
    %p128 = scmp.eq.s32.totalorder %s9, 1
    %p129 = por %p127, %p128
    %p130 = scmp.ne.s32.totalorder %s122, %s125
    %p131 = scmp.eq.s32.totalorder %s9, 0
    %p132 = por %p130, %p131
    %p133 = scmp.ne.s32.totalorder %s122, %s125
    %p134 = scmp.eq.s32.totalorder %s14, 1
    %p135 = por %p133, %p134
    %p136 = scmp.ne.s32.totalorder %s125, %s126
    %p137 = scmp.eq.s32.totalorder %s14, 0
    %p138 = por %p136, %p137
    %p139 = scmp.ne.s32.totalorder %s125, %s126
    %p140 = scmp.eq.s32.totalorder %s15, 1
    %p141 = por %p139, %p140
    %p143 = scmp.ne.s32.totalorder %s126, %s142
    %p144 = scmp.eq.s32.totalorder %s15, 0
    %p145 = por %p143, %p144
    %p146 = scmp.le.s32.totalorder 1, %s9
    %p147 = scmp.lt.s32.totalorder %s9, 3
    %p148 = pnand %p146, %p147
    %p149 = pneg %p148
    // Predicated region
    $region9: #{_lambda_.7} parent=5 // pred_check
      _
    $region10: #{_lambda_.7} parent=5 // pred_check_branch
      %151 = sbr.rel (%p148) target = $region12
    $region11: #{_lambda_.7} parent=5 // pred_region
      %s152 = ssub.s32 %s9, 1
      // Predicated region
      $region13: #{_lambda_.7} parent=11 // pred_check
        %p153 = pneg %p84
      $region14: #{_lambda_.7} parent=11 // pred_check_branch
        %155 = sbr.rel (%p153) target = $region16
      $region15: #{_lambda_.7} parent=11 // pred_region
        %s156 = smul.u32 16, %s21
        %p157 = scmp.lt.s32.totalorder %s156, 15
        %s158 = scalar_select %p157, %s156, 15
        %p159 = scmp.lt.s32.totalorder %s20, 0
        %s160 = scalar_select %p159, %s20, 0
        %s161 = sadd.s32 %s160, %s158
        %s162 = smul.addr %s161, 4
        %s163 = scalar_lea.vmem %s1, %s162
        %s164 = smul.u32 16, %s21
      $region16: #{_lambda_.7} parent=11 // pred_fallthru
        _
      // Predicated region
      $region17: #{_lambda_.7} parent=11 // pred_check
        %p165 = pneg %p110
      $region18: #{_lambda_.7} parent=11 // pred_check_branch
        %167 = sbr.rel (%p165) target = $region20
      $region19: #{_lambda_.7} parent=11 // pred_region
        %p168 = scmp.lt.s32.totalorder %s20, 0
        %s169 = scalar_select %p168, %s20, 0
        %s170 = scalar_lea.vmem %s2, %s169
      $region20: #{_lambda_.7} parent=11 // pred_fallthru
        _
    $region12: #{_lambda_.7} parent=5 // pred_fallthru
      _
    %p171 = scmp.lt.s32.totalorder %s9, 2
    // Predicated region
    $region21: #{_lambda_.7} parent=5 // pred_check
      %p172 = pneg %p171
    $region22: #{_lambda_.7} parent=5 // pred_check_branch
      %174 = sbr.rel (%p172) target = $region24
    $region23: #{_lambda_.7} parent=5 // pred_region
      // Predicated region
      $region25: #{_lambda_.7} parent=23 // pred_check
        %p175 = pneg %p50
      $region26: #{_lambda_.7} parent=23 // pred_check_branch
        %177 = sbr.rel (%p175) target = $region28
      $region27: #{_lambda_.7} parent=23 // pred_region
        %s178 = smul.u32 32, %s16
        %p179 = scmp.lt.s32.totalorder %s178, 63
        %s180 = scalar_select %p179, %s178, 63
        %p181 = scmp.lt.s32.totalorder %s18, 0
        %s182 = scalar_select %p181, %s18, 0
        %s183 = sadd.s32 %s182, %s180
        %s184 = smul.addr %s183, 4
        %s185 = scalar_lea.vmem %s0, %s184
        %s186 = smul.u32 32, %s16
      $region28: #{_lambda_.7} parent=23 // pred_fallthru
        _
    $region24: #{_lambda_.7} parent=5 // pred_fallthru
      _
    %p187 = scmp.le.s32.totalorder 1, %s9
    %p188 = scmp.lt.s32.totalorder %s9, 3
    %p189 = pnand %p187, %p188
    %p190 = pneg %p189
    // Predicated region
    $region29: #{_lambda_.7} parent=5 // pred_check
      _
    $region30: #{_lambda_.7} parent=5 // pred_check_branch
      %192 = sbr.rel (%p189) target = $region32
    $region31: #{_lambda_.7} parent=5 // pred_region
      %s193 = ssub.s32 %s9, 1
      %s194 = smul.u32 32, %s19
      %p195 = scmp.lt.s32.totalorder %s194, 63
      %s196 = scalar_select %p195, %s194, 63
      %p197 = scmp.lt.s32.totalorder %s21, 0
      %s198 = scalar_select %p197, %s21, 0
      %s199 = sadd.s32 %s198, %s196
      %s200 = smul.addr %s199, 4
      %s201 = scalar_lea.vmem %s0, %s200
      %p202 = pneg %p56
      %p203 = pneg %p53
      %s204 = smul.u32 16, %s21
      %p205 = scmp.lt.s32.totalorder %s204, 15
      %s206 = scalar_select %p205, %s204, 15
      %p207 = scmp.lt.s32.totalorder %s20, 0
      %s208 = scalar_select %p207, %s20, 0
      %s209 = sadd.s32 %s208, %s206
      %s210 = smul.addr %s209, 4
      %s211 = scalar_lea.vmem %s1, %s210
      %p212 = pneg %p84
      %p213 = pneg %p81
      %p214 = scmp.lt.s32.totalorder %s20, 0
      %s215 = scalar_select %p214, %s20, 0
      %s216 = scalar_lea.vmem %s2, %s215
      %p217 = pneg %p110
      %p218 = pneg %p107
      %p219 = pneg %p138
      %p220 = pneg %p135
      %s221 = smul.u32 32, %s19
      %p222 = scmp.lt.s32.totalorder %s221, 63
      %s223 = scalar_select %p222, %s221, 63
      %p224 = scmp.lt.s32.totalorder %s20, 0
      %s225 = scalar_select %p224, %s20, 0
      %s226 = sadd.s32 %s225, %s223
      %s227 = smul.addr %s226, 8
      %s228 = scalar_lea.vmem %s3, %s227
      %s229 = smul.u32 32, %s19
      %p230 = scmp.lt.s32.totalorder %s229, 63
      %s231 = scalar_select %p230, %s229, 63
      %p232 = scmp.lt.s32.totalorder %s21, 0
      %s233 = scalar_select %p232, %s21, 0
      %s234 = sadd.s32 %s233, %s231
      %s235 = smul.addr %s234, 4
      %s236 = scalar_lea.vmem %s0, %s235
      %s237 = smul.u32 32, %s19
      %s238 = smul.u32 16, %s21
      %p239 = scmp.lt.s32.totalorder %s238, 15
      %s240 = scalar_select %p239, %s238, 15
      %p241 = scmp.lt.s32.totalorder %s20, 0
      %s242 = scalar_select %p241, %s20, 0
      %s243 = sadd.s32 %s242, %s240
      %s244 = smul.addr %s243, 4
      %s245 = scalar_lea.vmem %s1, %s244
      %s246 = smul.u32 16, %s21
      %p247 = scmp.lt.s32.totalorder %s20, 0
      %s248 = scalar_select %p247, %s20, 0
      %s249 = scalar_lea.vmem %s2, %s248
      %s250 = smul.u32 32, %s19
      %p251 = scmp.lt.s32.totalorder %s250, 63
      %s252 = scalar_select %p251, %s250, 63
      %p253 = scmp.lt.s32.totalorder %s20, 0
      %s254 = scalar_select %p253, %s20, 0
      %s255 = sadd.s32 %s254, %s252
      %s256 = smul.addr %s255, 8
      %s257 = scalar_lea.vmem %s3, %s256
      %s258 = smul.u32 32, %s19
      %p259 = scmp.eq.s32.totalorder %s21, 0
      // Predicated region
      $region33: #{_lambda_.7} parent=31 // pred_check
        %p260 = pneg %p259
      $region34: #{_lambda_.7} parent=31 // pred_check_branch
        %262 = sbr.rel (%p260) target = $region36
      $region35: #{_lambda_.7} parent=31 // pred_region
        %263 = vst [vmem:[#allocation2] sm:$0xff] 0.0
        %264 = vst [vmem:[#allocation2 + $0x8] sm:$0xff] 0.0
        %265 = vst [vmem:[#allocation2 + $0x10] sm:$0xff] 0.0
        %266 = vst [vmem:[#allocation2 + $0x18] sm:$0xff] 0.0
        %267 = vst [vmem:[#allocation2 + $0x20] sm:$0xff] 0.0
        %268 = vst [vmem:[#allocation2 + $0x28] sm:$0xff] 0.0
        %269 = vst [vmem:[#allocation2 + $0x30] sm:$0xff] 0.0
        %270 = vst [vmem:[#allocation2 + $0x38] sm:$0xff] 0.0
        %271 = vst [vmem:[#allocation2 + $0x40] sm:$0xff] 0.0
        %272 = vst [vmem:[#allocation2 + $0x48] sm:$0xff] 0.0
        %273 = vst [vmem:[#allocation2 + $0x50] sm:$0xff] 0.0
        %274 = vst [vmem:[#allocation2 + $0x58] sm:$0xff] 0.0
        %275 = vst [vmem:[#allocation2 + $0x60] sm:$0xff] 0.0
        %276 = vst [vmem:[#allocation2 + $0x68] sm:$0xff] 0.0
        %277 = vst [vmem:[#allocation2 + $0x70] sm:$0xff] 0.0
        %278 = vst [vmem:[#allocation2 + $0x78] sm:$0xff] 0.0
        %279 = vst [vmem:[#allocation2 + $0x80] sm:$0xff] 0.0
        %280 = vst [vmem:[#allocation2 + $0x88] sm:$0xff] 0.0
        %281 = vst [vmem:[#allocation2 + $0x90] sm:$0xff] 0.0
        %282 = vst [vmem:[#allocation2 + $0x98] sm:$0xff] 0.0
        %283 = vst [vmem:[#allocation2 + $0xa0] sm:$0xff] 0.0
        %284 = vst [vmem:[#allocation2 + $0xa8] sm:$0xff] 0.0
        %285 = vst [vmem:[#allocation2 + $0xb0] sm:$0xff] 0.0
        %286 = vst [vmem:[#allocation2 + $0xb8] sm:$0xff] 0.0
        %287 = vst [vmem:[#allocation2 + $0xc0] sm:$0xff] 0.0
        %288 = vst [vmem:[#allocation2 + $0xc8] sm:$0xff] 0.0
        %289 = vst [vmem:[#allocation2 + $0xd0] sm:$0xff] 0.0
        %290 = vst [vmem:[#allocation2 + $0xd8] sm:$0xff] 0.0
        %291 = vst [vmem:[#allocation2 + $0xe0] sm:$0xff] 0.0
        %292 = vst [vmem:[#allocation2 + $0xe8] sm:$0xff] 0.0
        %293 = vst [vmem:[#allocation2 + $0xf0] sm:$0xff] 0.0
        %294 = vst [vmem:[#allocation2 + $0xf8] sm:$0xff] 0.0
      $region36: #{_lambda_.7} parent=31 // pred_fallthru
        _
      %v295 = vld [vmem:[#allocation2] sm:$0xff]
      %v296 = vld [vmem:[#allocation2 + $0x8] sm:$0xff]
      %v297 = vld [vmem:[#allocation2 + $0x10] sm:$0xff]
      %v298 = vld [vmem:[#allocation2 + $0x18] sm:$0xff]
      %v299 = vld [vmem:[#allocation2 + $0x20] sm:$0xff]
      %v300 = vld [vmem:[#allocation2 + $0x28] sm:$0xff]
      %v301 = vld [vmem:[#allocation2 + $0x30] sm:$0xff]
      %v302 = vld [vmem:[#allocation2 + $0x38] sm:$0xff]
      %v303 = vld [vmem:[#allocation2 + $0x40] sm:$0xff]
      %v304 = vld [vmem:[#allocation2 + $0x48] sm:$0xff]
      %v305 = vld [vmem:[#allocation2 + $0x50] sm:$0xff]
      %v306 = vld [vmem:[#allocation2 + $0x58] sm:$0xff]
      %v307 = vld [vmem:[#allocation2 + $0x60] sm:$0xff]
      %v308 = vld [vmem:[#allocation2 + $0x68] sm:$0xff]
      %v309 = vld [vmem:[#allocation2 + $0x70] sm:$0xff]
      %v310 = vld [vmem:[#allocation2 + $0x78] sm:$0xff]
      %v311 = vld [vmem:[#allocation2 + $0x80] sm:$0xff]
      %v312 = vld [vmem:[#allocation2 + $0x88] sm:$0xff]
      %v313 = vld [vmem:[#allocation2 + $0x90] sm:$0xff]
      %v314 = vld [vmem:[#allocation2 + $0x98] sm:$0xff]
      %v315 = vld [vmem:[#allocation2 + $0xa0] sm:$0xff]
      %v316 = vld [vmem:[#allocation2 + $0xa8] sm:$0xff]
      %v317 = vld [vmem:[#allocation2 + $0xb0] sm:$0xff]
      %v318 = vld [vmem:[#allocation2 + $0xb8] sm:$0xff]
      %v319 = vld [vmem:[#allocation2 + $0xc0] sm:$0xff]
      %v320 = vld [vmem:[#allocation2 + $0xc8] sm:$0xff]
      %v321 = vld [vmem:[#allocation2 + $0xd0] sm:$0xff]
      %v322 = vld [vmem:[#allocation2 + $0xd8] sm:$0xff]
      %v323 = vld [vmem:[#allocation2 + $0xe0] sm:$0xff]
      %v324 = vld [vmem:[#allocation2 + $0xe8] sm:$0xff]
      %v325 = vld [vmem:[#allocation2 + $0xf0] sm:$0xff]
      %v326 = vld [vmem:[#allocation2 + $0xf8] sm:$0xff]
      %v327 = vld [vmem:[%s236] sm:$0xf]
      %v328 = vld [vmem:[%s236 + $0x4] sm:$0xf]
      %v329 = vld [vmem:[%s236 + $0x8] sm:$0xf]
      %v330 = vld [vmem:[%s236 + $0xc] sm:$0xf]
      %v331 = vld [vmem:[%s236 + $0x10] sm:$0xf]
      %v332 = vld [vmem:[%s236 + $0x14] sm:$0xf]
      %v333 = vld [vmem:[%s236 + $0x18] sm:$0xf]
      %v334 = vld [vmem:[%s236 + $0x1c] sm:$0xf]
      %v335 = vld [vmem:[%s236 + $0x20] sm:$0xf]
      %v336 = vld [vmem:[%s236 + $0x24] sm:$0xf]
      %v337 = vld [vmem:[%s236 + $0x28] sm:$0xf]
      %v338 = vld [vmem:[%s236 + $0x2c] sm:$0xf]
      %v339 = vld [vmem:[%s236 + $0x30] sm:$0xf]
      %v340 = vld [vmem:[%s236 + $0x34] sm:$0xf]
      %v341 = vld [vmem:[%s236 + $0x38] sm:$0xf]
      %v342 = vld [vmem:[%s236 + $0x3c] sm:$0xf]
      %v343 = vld [vmem:[%s236 + $0x40] sm:$0xf]
      %v344 = vld [vmem:[%s236 + $0x44] sm:$0xf]
      %v345 = vld [vmem:[%s236 + $0x48] sm:$0xf]
      %v346 = vld [vmem:[%s236 + $0x4c] sm:$0xf]
      %v347 = vld [vmem:[%s236 + $0x50] sm:$0xf]
      %v348 = vld [vmem:[%s236 + $0x54] sm:$0xf]
      %v349 = vld [vmem:[%s236 + $0x58] sm:$0xf]
      %v350 = vld [vmem:[%s236 + $0x5c] sm:$0xf]
      %v351 = vld [vmem:[%s236 + $0x60] sm:$0xf]
      %v352 = vld [vmem:[%s236 + $0x64] sm:$0xf]
      %v353 = vld [vmem:[%s236 + $0x68] sm:$0xf]
      %v354 = vld [vmem:[%s236 + $0x6c] sm:$0xf]
      %v355 = vld [vmem:[%s236 + $0x70] sm:$0xf]
      %v356 = vld [vmem:[%s236 + $0x74] sm:$0xf]
      %v357 = vld [vmem:[%s236 + $0x78] sm:$0xf]
      %v358 = vld [vmem:[%s236 + $0x7c] sm:$0xf]
      %v359 = vld [vmem:[%s245] sm:$0xf]
      %v360 = vld [vmem:[%s245 + $0x4] sm:$0xf]
      %v361 = vld [vmem:[%s245 + $0x8] sm:$0xf]
      %v362 = vld [vmem:[%s245 + $0xc] sm:$0xf]
      %v363 = vld [vmem:[%s245 + $0x10] sm:$0xf]
      %v364 = vld [vmem:[%s245 + $0x14] sm:$0xf]
      %v365 = vld [vmem:[%s245 + $0x18] sm:$0xf]
      %v366 = vld [vmem:[%s245 + $0x1c] sm:$0xf]
      %v367 = vld [vmem:[%s245 + $0x20] sm:$0xf]
      %v368 = vld [vmem:[%s245 + $0x24] sm:$0xf]
      %v369 = vld [vmem:[%s245 + $0x28] sm:$0xf]
      %v370 = vld [vmem:[%s245 + $0x2c] sm:$0xf]
      %v371 = vld [vmem:[%s245 + $0x30] sm:$0xf]
      %v372 = vld [vmem:[%s245 + $0x34] sm:$0xf]
      %v373 = vld [vmem:[%s245 + $0x38] sm:$0xf]
      %v374 = vld [vmem:[%s245 + $0x3c] sm:$0xf]
      %v407 = vunpack.c.l.b16 %v327
      %v408 = vunpack.c.l.b16 %v328
      %v409 = vunpack.c.l.b16 %v329
      %v410 = vunpack.c.l.b16 %v330
      %v411 = vunpack.c.l.b16 %v331
      %v412 = vunpack.c.l.b16 %v332
      %v413 = vunpack.c.l.b16 %v333
      %v414 = vunpack.c.l.b16 %v334
      %v415 = vunpack.c.l.b16 %v335
      %v416 = vunpack.c.l.b16 %v336
      %v417 = vunpack.c.l.b16 %v337
      %v418 = vunpack.c.l.b16 %v338
      %v419 = vunpack.c.l.b16 %v339
      %v420 = vunpack.c.l.b16 %v340
      %v421 = vunpack.c.l.b16 %v341
      %v422 = vunpack.c.l.b16 %v342
      %v423 = vunpack.c.l.b16 %v343
      %v424 = vunpack.c.l.b16 %v344
      %v425 = vunpack.c.l.b16 %v345
      %v426 = vunpack.c.l.b16 %v346
      %v427 = vunpack.c.l.b16 %v347
      %v428 = vunpack.c.l.b16 %v348
      %v429 = vunpack.c.l.b16 %v349
      %v430 = vunpack.c.l.b16 %v350
      %v431 = vunpack.c.l.b16 %v351
      %v432 = vunpack.c.l.b16 %v352
      %v433 = vunpack.c.l.b16 %v353
      %v434 = vunpack.c.l.b16 %v354
      %v435 = vunpack.c.l.b16 %v355
      %v436 = vunpack.c.l.b16 %v356
      %v437 = vunpack.c.l.b16 %v357
      %v438 = vunpack.c.l.b16 %v358
      %v439 = vpack.c.b16 %v408, %v407
      %v440 = vpack.c.b16 %v410, %v409
      %v441 = vpack.c.b16 %v412, %v411
      %v442 = vpack.c.b16 %v414, %v413
      %v443 = vpack.c.b16 %v416, %v415
      %v444 = vpack.c.b16 %v418, %v417
      %v445 = vpack.c.b16 %v420, %v419
      %v446 = vpack.c.b16 %v422, %v421
      %v447 = vpack.c.b16 %v424, %v423
      %v448 = vpack.c.b16 %v426, %v425
      %v449 = vpack.c.b16 %v428, %v427
      %v450 = vpack.c.b16 %v430, %v429
      %v451 = vpack.c.b16 %v432, %v431
      %v452 = vpack.c.b16 %v434, %v433
      %v453 = vpack.c.b16 %v436, %v435
      %v454 = vpack.c.b16 %v438, %v437
      %v487 = vunpack.c.l.b16 %v359
      %v488 = vunpack.c.l.b16 %v360
      %v489 = vunpack.c.l.b16 %v361
      %v490 = vunpack.c.l.b16 %v362
      %v491 = vunpack.c.l.b16 %v363
      %v492 = vunpack.c.l.b16 %v364
      %v493 = vunpack.c.l.b16 %v365
      %v494 = vunpack.c.l.b16 %v366
      %v495 = vunpack.c.l.b16 %v367
      %v496 = vunpack.c.l.b16 %v368
      %v497 = vunpack.c.l.b16 %v369
      %v498 = vunpack.c.l.b16 %v370
      %v499 = vunpack.c.l.b16 %v371
      %v500 = vunpack.c.l.b16 %v372
      %v501 = vunpack.c.l.b16 %v373
      %v502 = vunpack.c.l.b16 %v374
      %v503 = vpack.c.b16 %v488, %v487
      %v504 = vpack.c.b16 %v490, %v489
      %v505 = vpack.c.b16 %v492, %v491
      %v506 = vpack.c.b16 %v494, %v493
      %v507 = vpack.c.b16 %v496, %v495
      %v508 = vpack.c.b16 %v498, %v497
      %v509 = vpack.c.b16 %v500, %v499
      %v510 = vpack.c.b16 %v502, %v501
      %519 = vmatpush.bf16.msra.mxu0 %v510
      %520 = vmatpush.bf16.msra.mxu0 %v509
      %521 = vmatpush.bf16.msra.mxu0 %v508
      %522 = vmatpush.bf16.msra.mxu0 %v507
      %523 = vmatpush.bf16.msra.mxu0 %v506
      %524 = vmatpush.bf16.msra.mxu0 %v505
      %525 = vmatpush.bf16.msra.mxu0 %v504
      %526 = vmatpush.bf16.msra.mxu0 %v503
      %527 = vmatmul.bf16.gmra.mxu0 %v439
      %v528 = vpop.f32.mrf.mxu0
      %v529 = vadd.f32 0.0, %v528
      %v530 = vpop.f32.mrf.mxu0
      %v531 = vadd.f32 0.0, %v530
      %532 = vmatmul.bf16.gmra.mxu0 %v440
      %v533 = vpop.f32.mrf.mxu0
      %v534 = vadd.f32 0.0, %v533
      %v535 = vpop.f32.mrf.mxu0
      %v536 = vadd.f32 0.0, %v535
      %537 = vmatmul.bf16.gmra.mxu0 %v441
      %v538 = vpop.f32.mrf.mxu0
      %v539 = vadd.f32 0.0, %v538
      %v540 = vpop.f32.mrf.mxu0
      %v541 = vadd.f32 0.0, %v540
      %542 = vmatmul.bf16.gmra.mxu0 %v442
      %v543 = vpop.f32.mrf.mxu0
      %v544 = vadd.f32 0.0, %v543
      %v545 = vpop.f32.mrf.mxu0
      %v546 = vadd.f32 0.0, %v545
      %547 = vmatmul.bf16.gmra.mxu0 %v443
      %v548 = vpop.f32.mrf.mxu0
      %v549 = vadd.f32 0.0, %v548
      %v550 = vpop.f32.mrf.mxu0
      %v551 = vadd.f32 0.0, %v550
      %552 = vmatmul.bf16.gmra.mxu0 %v444
      %v553 = vpop.f32.mrf.mxu0
      %v554 = vadd.f32 0.0, %v553
      %v555 = vpop.f32.mrf.mxu0
      %v556 = vadd.f32 0.0, %v555
      %557 = vmatmul.bf16.gmra.mxu0 %v445
      %v558 = vpop.f32.mrf.mxu0
      %v559 = vadd.f32 0.0, %v558
      %v560 = vpop.f32.mrf.mxu0
      %v561 = vadd.f32 0.0, %v560
      %562 = vmatmul.bf16.gmra.mxu0 %v446
      %v563 = vpop.f32.mrf.mxu0
      %v564 = vadd.f32 0.0, %v563
      %v565 = vpop.f32.mrf.mxu0
      %v566 = vadd.f32 0.0, %v565
      %567 = vmatmul.bf16.gmra.mxu0 %v447
      %v568 = vpop.f32.mrf.mxu0
      %v569 = vadd.f32 0.0, %v568
      %v570 = vpop.f32.mrf.mxu0
      %v571 = vadd.f32 0.0, %v570
      %572 = vmatmul.bf16.gmra.mxu0 %v448
      %v573 = vpop.f32.mrf.mxu0
      %v574 = vadd.f32 0.0, %v573
      %v575 = vpop.f32.mrf.mxu0
      %v576 = vadd.f32 0.0, %v575
      %577 = vmatmul.bf16.gmra.mxu0 %v449
      %v578 = vpop.f32.mrf.mxu0
      %v579 = vadd.f32 0.0, %v578
      %v580 = vpop.f32.mrf.mxu0
      %v581 = vadd.f32 0.0, %v580
      %582 = vmatmul.bf16.gmra.mxu0 %v450
      %v583 = vpop.f32.mrf.mxu0
      %v584 = vadd.f32 0.0, %v583
      %v585 = vpop.f32.mrf.mxu0
      %v586 = vadd.f32 0.0, %v585
      %587 = vmatmul.bf16.gmra.mxu0 %v451
      %v588 = vpop.f32.mrf.mxu0
      %v589 = vadd.f32 0.0, %v588
      %v590 = vpop.f32.mrf.mxu0
      %v591 = vadd.f32 0.0, %v590
      %592 = vmatmul.bf16.gmra.mxu0 %v452
      %v593 = vpop.f32.mrf.mxu0
      %v594 = vadd.f32 0.0, %v593
      %v595 = vpop.f32.mrf.mxu0
      %v596 = vadd.f32 0.0, %v595
      %597 = vmatmul.bf16.gmra.mxu0 %v453
      %v598 = vpop.f32.mrf.mxu0
      %v599 = vadd.f32 0.0, %v598
      %v600 = vpop.f32.mrf.mxu0
      %v601 = vadd.f32 0.0, %v600
      %602 = vmatmul.bf16.gmra.mxu0 %v454
      %v603 = vpop.f32.mrf.mxu0
      %v604 = vadd.f32 0.0, %v603
      %v605 = vpop.f32.mrf.mxu0
      %v606 = vadd.f32 0.0, %v605
      %607 = vdwg.mxu0
      %v608 = vadd.f32 %v295, %v529
      %v609 = vadd.f32 %v296, %v531
      %v610 = vadd.f32 %v297, %v534
      %v611 = vadd.f32 %v298, %v536
      %v612 = vadd.f32 %v299, %v539
      %v613 = vadd.f32 %v300, %v541
      %v614 = vadd.f32 %v301, %v544
      %v615 = vadd.f32 %v302, %v546
      %v616 = vadd.f32 %v303, %v549
      %v617 = vadd.f32 %v304, %v551
      %v618 = vadd.f32 %v305, %v554
      %v619 = vadd.f32 %v306, %v556
      %v620 = vadd.f32 %v307, %v559
      %v621 = vadd.f32 %v308, %v561
      %v622 = vadd.f32 %v309, %v564
      %v623 = vadd.f32 %v310, %v566
      %v624 = vadd.f32 %v311, %v569
      %v625 = vadd.f32 %v312, %v571
      %v626 = vadd.f32 %v313, %v574
      %v627 = vadd.f32 %v314, %v576
      %v628 = vadd.f32 %v315, %v579
      %v629 = vadd.f32 %v316, %v581
      %v630 = vadd.f32 %v317, %v584
      %v631 = vadd.f32 %v318, %v586
      %v632 = vadd.f32 %v319, %v589
      %v633 = vadd.f32 %v320, %v591
      %v634 = vadd.f32 %v321, %v594
      %v635 = vadd.f32 %v322, %v596
      %v636 = vadd.f32 %v323, %v599
      %v637 = vadd.f32 %v324, %v601
      %v638 = vadd.f32 %v325, %v604
      %v639 = vadd.f32 %v326, %v606
      %640 = vst [vmem:[#allocation2] sm:$0xff] %v608
      %641 = vst [vmem:[#allocation2 + $0x8] sm:$0xff] %v609
      %642 = vst [vmem:[#allocation2 + $0x10] sm:$0xff] %v610
      %643 = vst [vmem:[#allocation2 + $0x18] sm:$0xff] %v611
      %644 = vst [vmem:[#allocation2 + $0x20] sm:$0xff] %v612
      %645 = vst [vmem:[#allocation2 + $0x28] sm:$0xff] %v613
      %646 = vst [vmem:[#allocation2 + $0x30] sm:$0xff] %v614
      %647 = vst [vmem:[#allocation2 + $0x38] sm:$0xff] %v615
      %648 = vst [vmem:[#allocation2 + $0x40] sm:$0xff] %v616
      %649 = vst [vmem:[#allocation2 + $0x48] sm:$0xff] %v617
      %650 = vst [vmem:[#allocation2 + $0x50] sm:$0xff] %v618
      %651 = vst [vmem:[#allocation2 + $0x58] sm:$0xff] %v619
      %652 = vst [vmem:[#allocation2 + $0x60] sm:$0xff] %v620
      %653 = vst [vmem:[#allocation2 + $0x68] sm:$0xff] %v621
      %654 = vst [vmem:[#allocation2 + $0x70] sm:$0xff] %v622
      %655 = vst [vmem:[#allocation2 + $0x78] sm:$0xff] %v623
      %656 = vst [vmem:[#allocation2 + $0x80] sm:$0xff] %v624
      %657 = vst [vmem:[#allocation2 + $0x88] sm:$0xff] %v625
      %658 = vst [vmem:[#allocation2 + $0x90] sm:$0xff] %v626
      %659 = vst [vmem:[#allocation2 + $0x98] sm:$0xff] %v627
      %660 = vst [vmem:[#allocation2 + $0xa0] sm:$0xff] %v628
      %661 = vst [vmem:[#allocation2 + $0xa8] sm:$0xff] %v629
      %662 = vst [vmem:[#allocation2 + $0xb0] sm:$0xff] %v630
      %663 = vst [vmem:[#allocation2 + $0xb8] sm:$0xff] %v631
      %664 = vst [vmem:[#allocation2 + $0xc0] sm:$0xff] %v632
      %665 = vst [vmem:[#allocation2 + $0xc8] sm:$0xff] %v633
      %666 = vst [vmem:[#allocation2 + $0xd0] sm:$0xff] %v634
      %667 = vst [vmem:[#allocation2 + $0xd8] sm:$0xff] %v635
      %668 = vst [vmem:[#allocation2 + $0xe0] sm:$0xff] %v636
      %669 = vst [vmem:[#allocation2 + $0xe8] sm:$0xff] %v637
      %670 = vst [vmem:[#allocation2 + $0xf0] sm:$0xff] %v638
      %671 = vst [vmem:[#allocation2 + $0xf8] sm:$0xff] %v639
      // Predicated region
      $region37: #{_lambda_.7} parent=31 // pred_check
        %p672 = pneg %p259
      $region38: #{_lambda_.7} parent=31 // pred_check_branch
        %674 = sbr.rel (%p672) target = $region40
      $region39: #{_lambda_.7} parent=31 // pred_region
        %v675 = vld [vmem:[#allocation2] sm:$0xff]
        %v676 = vld [vmem:[#allocation2 + $0x8] sm:$0xff]
        %v677 = vld [vmem:[#allocation2 + $0x10] sm:$0xff]
        %v678 = vld [vmem:[#allocation2 + $0x18] sm:$0xff]
        %v679 = vld [vmem:[#allocation2 + $0x20] sm:$0xff]
        %v680 = vld [vmem:[#allocation2 + $0x28] sm:$0xff]
        %v681 = vld [vmem:[#allocation2 + $0x30] sm:$0xff]
        %v682 = vld [vmem:[#allocation2 + $0x38] sm:$0xff]
        %v683 = vld [vmem:[#allocation2 + $0x40] sm:$0xff]
        %v684 = vld [vmem:[#allocation2 + $0x48] sm:$0xff]
        %v685 = vld [vmem:[#allocation2 + $0x50] sm:$0xff]
        %v686 = vld [vmem:[#allocation2 + $0x58] sm:$0xff]
        %v687 = vld [vmem:[#allocation2 + $0x60] sm:$0xff]
        %v688 = vld [vmem:[#allocation2 + $0x68] sm:$0xff]
        %v689 = vld [vmem:[#allocation2 + $0x70] sm:$0xff]
        %v690 = vld [vmem:[#allocation2 + $0x78] sm:$0xff]
        %v691 = vld [vmem:[#allocation2 + $0x80] sm:$0xff]
        %v692 = vld [vmem:[#allocation2 + $0x88] sm:$0xff]
        %v693 = vld [vmem:[#allocation2 + $0x90] sm:$0xff]
        %v694 = vld [vmem:[#allocation2 + $0x98] sm:$0xff]
        %v695 = vld [vmem:[#allocation2 + $0xa0] sm:$0xff]
        %v696 = vld [vmem:[#allocation2 + $0xa8] sm:$0xff]
        %v697 = vld [vmem:[#allocation2 + $0xb0] sm:$0xff]
        %v698 = vld [vmem:[#allocation2 + $0xb8] sm:$0xff]
        %v699 = vld [vmem:[#allocation2 + $0xc0] sm:$0xff]
        %v700 = vld [vmem:[#allocation2 + $0xc8] sm:$0xff]
        %v701 = vld [vmem:[#allocation2 + $0xd0] sm:$0xff]
        %v702 = vld [vmem:[#allocation2 + $0xd8] sm:$0xff]
        %v703 = vld [vmem:[#allocation2 + $0xe0] sm:$0xff]
        %v704 = vld [vmem:[#allocation2 + $0xe8] sm:$0xff]
        %v705 = vld [vmem:[#allocation2 + $0xf0] sm:$0xff]
        %v706 = vld [vmem:[#allocation2 + $0xf8] sm:$0xff]
        %v707 = vld [vmem:[%s249] sm:$0x1]
        %v709 = vperm.slane %v707, 0
        %v711 = vadd.f32 %v675, %v709
        %v712 = vadd.f32 %v676, %v709
        %v713 = vadd.f32 %v677, %v709
        %v714 = vadd.f32 %v678, %v709
        %v715 = vadd.f32 %v679, %v709
        %v716 = vadd.f32 %v680, %v709
        %v717 = vadd.f32 %v681, %v709
        %v718 = vadd.f32 %v682, %v709
        %v719 = vadd.f32 %v683, %v709
        %v720 = vadd.f32 %v684, %v709
        %v721 = vadd.f32 %v685, %v709
        %v722 = vadd.f32 %v686, %v709
        %v723 = vadd.f32 %v687, %v709
        %v724 = vadd.f32 %v688, %v709
        %v725 = vadd.f32 %v689, %v709
        %v726 = vadd.f32 %v690, %v709
        %v727 = vadd.f32 %v691, %v709
        %v728 = vadd.f32 %v692, %v709
        %v729 = vadd.f32 %v693, %v709
        %v730 = vadd.f32 %v694, %v709
        %v731 = vadd.f32 %v695, %v709
        %v732 = vadd.f32 %v696, %v709
        %v733 = vadd.f32 %v697, %v709
        %v734 = vadd.f32 %v698, %v709
        %v735 = vadd.f32 %v699, %v709
        %v736 = vadd.f32 %v700, %v709
        %v737 = vadd.f32 %v701, %v709
        %v738 = vadd.f32 %v702, %v709
        %v739 = vadd.f32 %v703, %v709
        %v740 = vadd.f32 %v704, %v709
        %v741 = vadd.f32 %v705, %v709
        %v742 = vadd.f32 %v706, %v709
        %743 = vst [vmem:[%s257] sm:$0xff] %v711
        %744 = vst [vmem:[%s257 + $0x8] sm:$0xff] %v712
        %745 = vst [vmem:[%s257 + $0x10] sm:$0xff] %v713
        %746 = vst [vmem:[%s257 + $0x18] sm:$0xff] %v714
        %747 = vst [vmem:[%s257 + $0x20] sm:$0xff] %v715
        %748 = vst [vmem:[%s257 + $0x28] sm:$0xff] %v716
        %749 = vst [vmem:[%s257 + $0x30] sm:$0xff] %v717
        %750 = vst [vmem:[%s257 + $0x38] sm:$0xff] %v718
        %751 = vst [vmem:[%s257 + $0x40] sm:$0xff] %v719
        %752 = vst [vmem:[%s257 + $0x48] sm:$0xff] %v720
        %753 = vst [vmem:[%s257 + $0x50] sm:$0xff] %v721
        %754 = vst [vmem:[%s257 + $0x58] sm:$0xff] %v722
        %755 = vst [vmem:[%s257 + $0x60] sm:$0xff] %v723
        %756 = vst [vmem:[%s257 + $0x68] sm:$0xff] %v724
        %757 = vst [vmem:[%s257 + $0x70] sm:$0xff] %v725
        %758 = vst [vmem:[%s257 + $0x78] sm:$0xff] %v726
        %759 = vst [vmem:[%s257 + $0x80] sm:$0xff] %v727
        %760 = vst [vmem:[%s257 + $0x88] sm:$0xff] %v728
        %761 = vst [vmem:[%s257 + $0x90] sm:$0xff] %v729
        %762 = vst [vmem:[%s257 + $0x98] sm:$0xff] %v730
        %763 = vst [vmem:[%s257 + $0xa0] sm:$0xff] %v731
        %764 = vst [vmem:[%s257 + $0xa8] sm:$0xff] %v732
        %765 = vst [vmem:[%s257 + $0xb0] sm:$0xff] %v733
        %766 = vst [vmem:[%s257 + $0xb8] sm:$0xff] %v734
        %767 = vst [vmem:[%s257 + $0xc0] sm:$0xff] %v735
        %768 = vst [vmem:[%s257 + $0xc8] sm:$0xff] %v736
        %769 = vst [vmem:[%s257 + $0xd0] sm:$0xff] %v737
        %770 = vst [vmem:[%s257 + $0xd8] sm:$0xff] %v738
        %771 = vst [vmem:[%s257 + $0xe0] sm:$0xff] %v739
        %772 = vst [vmem:[%s257 + $0xe8] sm:$0xff] %v740
        %773 = vst [vmem:[%s257 + $0xf0] sm:$0xff] %v741
        %774 = vst [vmem:[%s257 + $0xf8] sm:$0xff] %v742
      $region40: #{_lambda_.7} parent=31 // pred_fallthru
        _
      %s775 = smul.u32 32, %s19
      %p776 = scmp.lt.s32.totalorder %s775, 63
      %s777 = scalar_select %p776, %s775, 63
      %p778 = scmp.lt.s32.totalorder %s20, 0
      %s779 = scalar_select %p778, %s20, 0
      %s780 = sadd.s32 %s779, %s777
      %s781 = smul.addr %s780, 8
      %s782 = scalar_lea.vmem %s3, %s781
      // Predicated region
      $region41: #{_lambda_.7} parent=31 // pred_check
        %p783 = pneg %p135
      $region42: #{_lambda_.7} parent=31 // pred_check_branch
        %785 = sbr.rel (%p783) target = $region44
      $region43: #{_lambda_.7} parent=31 // pred_region
        %s786 = smul.u32 32, %s19
      $region44: #{_lambda_.7} parent=31 // pred_fallthru
        _
    $region32: #{_lambda_.7} parent=5 // pred_fallthru
      _
    %p787 = scmp.le.s32.totalorder 2, %s9
    // Predicated region
    $region45: #{_lambda_.7} parent=5 // pred_check
      %p788 = pneg %p787
    $region46: #{_lambda_.7} parent=5 // pred_check_branch
      %790 = sbr.rel (%p788) target = $region48
    $region47: #{_lambda_.7} parent=5 // pred_region
      %s791 = ssub.s32 %s9, 2
      // Predicated region
      $region49: #{_lambda_.7} parent=47 // pred_check
        %p792 = pneg %p141
      $region50: #{_lambda_.7} parent=47 // pred_check_branch
        %794 = sbr.rel (%p792) target = $region52
      $region51: #{_lambda_.7} parent=47 // pred_region
        %s795 = smul.u32 32, %s22
        %p796 = scmp.lt.s32.totalorder %s795, 63
        %s797 = scalar_select %p796, %s795, 63
        %p798 = scmp.lt.s32.totalorder %s23, 0
        %s799 = scalar_select %p798, %s23, 0
        %s800 = sadd.s32 %s799, %s797
        %s801 = smul.addr %s800, 8
        %s802 = scalar_lea.vmem %s3, %s801
      $region52: #{_lambda_.7} parent=47 // pred_fallthru
        _
    $region48: #{_lambda_.7} parent=5 // pred_fallthru
      _
  $region6: #{_lambda_.7} parent=0 // loop_footer
    %s13 = sadd.s32 1, %s9
  $region7: #{_lambda_.7} parent=0 // loop_footer_branch
    %8 = sbr.rel target = $region3
  $region8: #{_lambda_.7} parent=0 // loop_exit
    _

// kernel: _lambda_.10
$region0: #{_lambda_.10}
  #allocation0 [shape = 'u32[]', space=smem, size = 0x4, offset = 0x4, fixed_abs, tag = 'smem constant byte address 0x4 - core index']
  #allocation1 [shape = 'u32[72,128]{1,0:T(1,128)}', space=vmem, size = 0x9000, scoped, tag = 'internal scratch']
  %s0 = inlined_call_operand.vmem [shape: f32[2,256,8], index: 0, kind: input, shape index: {}]
  %s1 = inlined_call_operand.vmem [shape: f32[2,256,8], index: 1, kind: output, shape index: {}]
  %s2 = sld [smem:[#allocation0]]
  $region37: #{_lambda_.10} parent=0
    _
  %s4 = ssub.s32 1, %s2
  %s5 = scalar_select 0, %s4, %s2
  loop: start=0, step=1, limit=4
  $region2: #{_lambda_.10} parent=0 // loop_pre_header
    _
  $region3: #{_lambda_.10} parent=0 // loop_header
    %s7 = sphi 0, %s11
    %p8 = scmp.ge.s32.totalorder %s7, 4
    %s17 = sphi 0, %s19
    %s20 = sphi 0, %s17
    %s21 = sphi 0, %s20
    %s37 = sphi 0, %s21
    %s43 = sphi 0, %s45
    %s46 = sphi 0, %s43
    %s47 = sphi 0, %s46
    %s63 = sphi 0, %s47
  $region4: #{_lambda_.10} parent=0 // loop_header_branch
    %10 = sbr.rel (%p8) target = $region8
  $region5: #{_lambda_.10} parent=0 // loop_body
    %s12 = ssub.s32 %s7, 1
    %s13 = ssub.s32 %s7, 2
    %s14 = sadd.s32 %s7, 1
    %s15 = ssub.s32 %s7, %s14
    %p16 = scmp.eq.s32.totalorder %s15, 0
    %s18 = sadd.s32 %s17, 1
    %s19 = scalar_select %p16, %s17, %s18
    %p22 = pneg %p16
    %p23 = scmp.eq.s32.totalorder %s7, 1
    %p24 = por %p22, %p23
    %p25 = scmp.ne.s32.totalorder %s17, %s20
    %p26 = scmp.eq.s32.totalorder %s7, 0
    %p27 = por %p25, %p26
    %p28 = scmp.ne.s32.totalorder %s17, %s20
    %p29 = scmp.eq.s32.totalorder %s12, 1
    %p30 = por %p28, %p29
    %p31 = scmp.ne.s32.totalorder %s20, %s21
    %p32 = scmp.eq.s32.totalorder %s12, 0
    %p33 = por %p31, %p32
    %p34 = scmp.ne.s32.totalorder %s20, %s21
    %p35 = scmp.eq.s32.totalorder %s13, 1
    %p36 = por %p34, %p35
    %p38 = scmp.ne.s32.totalorder %s21, %s37
    %p39 = scmp.eq.s32.totalorder %s13, 0
    %p40 = por %p38, %p39
    %s41 = ssub.s32 %s7, %s14
    %p42 = scmp.eq.s32.totalorder %s41, 0
    %s44 = sadd.s32 %s43, 1
    %s45 = scalar_select %p42, %s43, %s44
    %p48 = pneg %p42
    %p49 = scmp.eq.s32.totalorder %s7, 1
    %p50 = por %p48, %p49
    %p51 = scmp.ne.s32.totalorder %s43, %s46
    %p52 = scmp.eq.s32.totalorder %s7, 0
    %p53 = por %p51, %p52
    %p54 = scmp.ne.s32.totalorder %s43, %s46
    %p55 = scmp.eq.s32.totalorder %s12, 1
    %p56 = por %p54, %p55
    %p57 = scmp.ne.s32.totalorder %s46, %s47
    %p58 = scmp.eq.s32.totalorder %s12, 0
    %p59 = por %p57, %p58
    %p60 = scmp.ne.s32.totalorder %s46, %s47
    %p61 = scmp.eq.s32.totalorder %s13, 1
    %p62 = por %p60, %p61
    %p64 = scmp.ne.s32.totalorder %s47, %s63
    %p65 = scmp.eq.s32.totalorder %s13, 0
    %p66 = por %p64, %p65
    %p67 = scmp.le.s32.totalorder 1, %s7
    %p68 = scmp.lt.s32.totalorder %s7, 3
    %p69 = pnand %p67, %p68
    %p70 = pneg %p69
    // Predicated region
    $region9: #{_lambda_.10} parent=5 // pred_check
      _
    $region10: #{_lambda_.10} parent=5 // pred_check_branch
      %72 = sbr.rel (%p69) target = $region12
    $region11: #{_lambda_.10} parent=5 // pred_region
      %s73 = ssub.s32 %s7, 1
    $region12: #{_lambda_.10} parent=5 // pred_fallthru
      _
    %p74 = scmp.lt.s32.totalorder %s7, 2
    // Predicated region
    $region13: #{_lambda_.10} parent=5 // pred_check
      %p75 = pneg %p74
    $region14: #{_lambda_.10} parent=5 // pred_check_branch
      %77 = sbr.rel (%p75) target = $region16
    $region15: #{_lambda_.10} parent=5 // pred_region
      // Predicated region
      $region17: #{_lambda_.10} parent=15 // pred_check
        %p78 = pneg %p27
      $region18: #{_lambda_.10} parent=15 // pred_check_branch
        %80 = sbr.rel (%p78) target = $region20
      $region19: #{_lambda_.10} parent=15 // pred_region
        %p81 = scmp.lt.s32.totalorder %s7, 1
        %s82 = scalar_select %p81, %s7, 1
        %s83 = smul.addr %s82, 32
        %s84 = smul.addr %s83, 8
        %s85 = scalar_lea.vmem %s0, %s84
      $region20: #{_lambda_.10} parent=15 // pred_fallthru
        _
    $region16: #{_lambda_.10} parent=5 // pred_fallthru
      _
    %p86 = scmp.le.s32.totalorder 1, %s7
    %p87 = scmp.lt.s32.totalorder %s7, 3
    %p88 = pnand %p86, %p87
    %p89 = pneg %p88
    // Predicated region
    $region21: #{_lambda_.10} parent=5 // pred_check
      _
    $region22: #{_lambda_.10} parent=5 // pred_check_branch
      %91 = sbr.rel (%p88) target = $region24
    $region23: #{_lambda_.10} parent=5 // pred_region
      %s92 = ssub.s32 %s7, 1
      %p93 = scmp.lt.s32.totalorder %s12, 1
      %s94 = scalar_select %p93, %s12, 1
      %s95 = smul.addr %s94, 32
      %s96 = smul.addr %s95, 8
      %s97 = scalar_lea.vmem %s0, %s96
      %p98 = pneg %p33
      %p99 = pneg %p30
      %p100 = pneg %p59
      %p101 = pneg %p56
      %p102 = scmp.lt.s32.totalorder %s12, 1
      %s103 = scalar_select %p102, %s12, 1
      %s104 = smul.addr %s103, 32
      %s105 = smul.addr %s104, 8
      %s106 = scalar_lea.vmem %s1, %s105
      %p107 = scmp.lt.s32.totalorder %s12, 1
      %s108 = scalar_select %p107, %s12, 1
      %s109 = smul.addr %s108, 32
      %s110 = smul.addr %s109, 8
      %s111 = scalar_lea.vmem %s0, %s110
      %p112 = scmp.lt.s32.totalorder %s12, 1
      %s113 = scalar_select %p112, %s12, 1
      %s114 = smul.addr %s113, 32
      %s115 = smul.addr %s114, 8
      %s116 = scalar_lea.vmem %s1, %s115
      %v117 = vld [vmem:[%s111] sm:$0xff]
      %v118 = vld [vmem:[%s111 + $0x8] sm:$0xff]
      %v119 = vld [vmem:[%s111 + $0x10] sm:$0xff]
      %v120 = vld [vmem:[%s111 + $0x18] sm:$0xff]
      %v121 = vld [vmem:[%s111 + $0x20] sm:$0xff]
      %v122 = vld [vmem:[%s111 + $0x28] sm:$0xff]
      %v123 = vld [vmem:[%s111 + $0x30] sm:$0xff]
      %v124 = vld [vmem:[%s111 + $0x38] sm:$0xff]
      %v125 = vld [vmem:[%s111 + $0x40] sm:$0xff]
      %v126 = vld [vmem:[%s111 + $0x48] sm:$0xff]
      %v127 = vld [vmem:[%s111 + $0x50] sm:$0xff]
      %v128 = vld [vmem:[%s111 + $0x58] sm:$0xff]
      %v129 = vld [vmem:[%s111 + $0x60] sm:$0xff]
      %v130 = vld [vmem:[%s111 + $0x68] sm:$0xff]
      %v131 = vld [vmem:[%s111 + $0x70] sm:$0xff]
      %v132 = vld [vmem:[%s111 + $0x78] sm:$0xff]
      %v133 = vld [vmem:[%s111 + $0x80] sm:$0xff]
      %v134 = vld [vmem:[%s111 + $0x88] sm:$0xff]
      %v135 = vld [vmem:[%s111 + $0x90] sm:$0xff]
      %v136 = vld [vmem:[%s111 + $0x98] sm:$0xff]
      %v137 = vld [vmem:[%s111 + $0xa0] sm:$0xff]
      %v138 = vld [vmem:[%s111 + $0xa8] sm:$0xff]
      %v139 = vld [vmem:[%s111 + $0xb0] sm:$0xff]
      %v140 = vld [vmem:[%s111 + $0xb8] sm:$0xff]
      %v141 = vld [vmem:[%s111 + $0xc0] sm:$0xff]
      %v142 = vld [vmem:[%s111 + $0xc8] sm:$0xff]
      %v143 = vld [vmem:[%s111 + $0xd0] sm:$0xff]
      %v144 = vld [vmem:[%s111 + $0xd8] sm:$0xff]
      %v145 = vld [vmem:[%s111 + $0xe0] sm:$0xff]
      %v146 = vld [vmem:[%s111 + $0xe8] sm:$0xff]
      %v147 = vld [vmem:[%s111 + $0xf0] sm:$0xff]
      %v148 = vld [vmem:[%s111 + $0xf8] sm:$0xff]
      %vm149 = vcmask 64512
      %v150 = vsel %vm149, %v117, 0.0
      %v151 = vsel %vm149, %v118, 0.0
      %v152 = vadd.f32 %v150, %v151
      %v153 = vsel %vm149, %v119, 0.0
      %v154 = vadd.f32 %v152, %v153
      %v155 = vsel %vm149, %v120, 0.0
      %v156 = vadd.f32 %v154, %v155
      %v157 = vsel %vm149, %v121, 0.0
      %v158 = vadd.f32 %v156, %v157
      %v159 = vsel %vm149, %v122, 0.0
      %v160 = vadd.f32 %v158, %v159
      %v161 = vsel %vm149, %v123, 0.0
      %v162 = vadd.f32 %v160, %v161
      %v163 = vsel %vm149, %v124, 0.0
      %v164 = vadd.f32 %v162, %v163
      %v165 = vsel %vm149, %v125, 0.0
      %v166 = vadd.f32 %v164, %v165
      %v167 = vsel %vm149, %v126, 0.0
      %v168 = vadd.f32 %v166, %v167
      %v169 = vsel %vm149, %v127, 0.0
      %v170 = vadd.f32 %v168, %v169
      %v171 = vsel %vm149, %v128, 0.0
      %v172 = vadd.f32 %v170, %v171
      %v173 = vsel %vm149, %v129, 0.0
      %v174 = vadd.f32 %v172, %v173
      %v175 = vsel %vm149, %v130, 0.0
      %v176 = vadd.f32 %v174, %v175
      %v177 = vsel %vm149, %v131, 0.0
      %v178 = vadd.f32 %v176, %v177
      %v179 = vsel %vm149, %v132, 0.0
      %v180 = vadd.f32 %v178, %v179
      %v181 = vsel %vm149, %v133, 0.0
      %v182 = vadd.f32 %v180, %v181
      %v183 = vsel %vm149, %v134, 0.0
      %v184 = vadd.f32 %v182, %v183
      %v185 = vsel %vm149, %v135, 0.0
      %v186 = vadd.f32 %v184, %v185
      %v187 = vsel %vm149, %v136, 0.0
      %v188 = vadd.f32 %v186, %v187
      %v189 = vsel %vm149, %v137, 0.0
      %v190 = vadd.f32 %v188, %v189
      %v191 = vsel %vm149, %v138, 0.0
      %v192 = vadd.f32 %v190, %v191
      %v193 = vsel %vm149, %v139, 0.0
      %v194 = vadd.f32 %v192, %v193
      %v195 = vsel %vm149, %v140, 0.0
      %v196 = vadd.f32 %v194, %v195
      %v197 = vsel %vm149, %v141, 0.0
      %v198 = vadd.f32 %v196, %v197
      %v199 = vsel %vm149, %v142, 0.0
      %v200 = vadd.f32 %v198, %v199
      %v201 = vsel %vm149, %v143, 0.0
      %v202 = vadd.f32 %v200, %v201
      %v203 = vsel %vm149, %v144, 0.0
      %v204 = vadd.f32 %v202, %v203
      %v205 = vsel %vm149, %v145, 0.0
      %v206 = vadd.f32 %v204, %v205
      %v207 = vsel %vm149, %v146, 0.0
      %v208 = vadd.f32 %v206, %v207
      %v209 = vsel %vm149, %v147, 0.0
      %v210 = vadd.f32 %v208, %v209
      %v211 = vsel %vm149, %v148, 0.0
      %v212 = vadd.f32 %v210, %v211
      %v213 = vrot.slane %v212, 4
      %v214 = vadd.f32 %v212, %v213
      %v215 = vrot.slane %v214, 2
      %v216 = vadd.f32 %v214, %v215
      %v217 = vrot.slane %v216, 1
      %v218 = vadd.f32 %v216, %v217
      %v219 = vrcp.pop 256.0
      %v220 = vmul.f32 256.0, %v219
      %v221 = vsub.f32 1.0, %v220
      %v222 = vmul.f32 %v219, %v221
      %v223 = vadd.f32 %v219, %v222
      %vm224 = vweird.f32 %v219
      %v225 = vsel %vm224, %v219, %v223
      %v226 = vmul.f32 %v218, %v225
      %v227 = vsub.f32 %v117, %v226
      %v228 = vsub.f32 %v118, %v226
      %v229 = vsub.f32 %v119, %v226
      %v230 = vsub.f32 %v120, %v226
      %v231 = vsub.f32 %v121, %v226
      %v232 = vsub.f32 %v122, %v226
      %v233 = vsub.f32 %v123, %v226
      %v234 = vsub.f32 %v124, %v226
      %v235 = vsub.f32 %v125, %v226
      %v236 = vsub.f32 %v126, %v226
      %v237 = vsub.f32 %v127, %v226
      %v238 = vsub.f32 %v128, %v226
      %v239 = vsub.f32 %v129, %v226
      %v240 = vsub.f32 %v130, %v226
      %v241 = vsub.f32 %v131, %v226
      %v242 = vsub.f32 %v132, %v226
      %v243 = vsub.f32 %v133, %v226
      %v244 = vsub.f32 %v134, %v226
      %v245 = vsub.f32 %v135, %v226
      %v246 = vsub.f32 %v136, %v226
      %v247 = vsub.f32 %v137, %v226
      %v248 = vsub.f32 %v138, %v226
      %v249 = vsub.f32 %v139, %v226
      %v250 = vsub.f32 %v140, %v226
      %v251 = vsub.f32 %v141, %v226
      %v252 = vsub.f32 %v142, %v226
      %v253 = vsub.f32 %v143, %v226
      %v254 = vsub.f32 %v144, %v226
      %v255 = vsub.f32 %v145, %v226
      %v256 = vsub.f32 %v146, %v226
      %v257 = vsub.f32 %v147, %v226
      %v258 = vsub.f32 %v148, %v226
      %v259 = vmul.f32 %v227, %v227
      %v260 = vmul.f32 %v228, %v228
      %v261 = vmul.f32 %v229, %v229
      %v262 = vmul.f32 %v230, %v230
      %v263 = vmul.f32 %v231, %v231
      %v264 = vmul.f32 %v232, %v232
      %v265 = vmul.f32 %v233, %v233
      %v266 = vmul.f32 %v234, %v234
      %v267 = vmul.f32 %v235, %v235
      %v268 = vmul.f32 %v236, %v236
      %v269 = vmul.f32 %v237, %v237
      %v270 = vmul.f32 %v238, %v238
      %v271 = vmul.f32 %v239, %v239
      %v272 = vmul.f32 %v240, %v240
      %v273 = vmul.f32 %v241, %v241
      %v274 = vmul.f32 %v242, %v242
      %v275 = vmul.f32 %v243, %v243
      %v276 = vmul.f32 %v244, %v244
      %v277 = vmul.f32 %v245, %v245
      %v278 = vmul.f32 %v246, %v246
      %v279 = vmul.f32 %v247, %v247
      %v280 = vmul.f32 %v248, %v248
      %v281 = vmul.f32 %v249, %v249
      %v282 = vmul.f32 %v250, %v250
      %v283 = vmul.f32 %v251, %v251
      %v284 = vmul.f32 %v252, %v252
      %v285 = vmul.f32 %v253, %v253
      %v286 = vmul.f32 %v254, %v254
      %v287 = vmul.f32 %v255, %v255
      %v288 = vmul.f32 %v256, %v256
      %v289 = vmul.f32 %v257, %v257
      %v290 = vmul.f32 %v258, %v258
      %v291 = vsel %vm149, %v259, 0.0
      %v292 = vsel %vm149, %v260, 0.0
      %v293 = vadd.f32 %v291, %v292
      %v294 = vsel %vm149, %v261, 0.0
      %v295 = vadd.f32 %v293, %v294
      %v296 = vsel %vm149, %v262, 0.0
      %v297 = vadd.f32 %v295, %v296
      %v298 = vsel %vm149, %v263, 0.0
      %v299 = vadd.f32 %v297, %v298
      %v300 = vsel %vm149, %v264, 0.0
      %v301 = vadd.f32 %v299, %v300
      %v302 = vsel %vm149, %v265, 0.0
      %v303 = vadd.f32 %v301, %v302
      %v304 = vsel %vm149, %v266, 0.0
      %v305 = vadd.f32 %v303, %v304
      %v306 = vsel %vm149, %v267, 0.0
      %v307 = vadd.f32 %v305, %v306
      %v308 = vsel %vm149, %v268, 0.0
      %v309 = vadd.f32 %v307, %v308
      %v310 = vsel %vm149, %v269, 0.0
      %v311 = vadd.f32 %v309, %v310
      %v312 = vsel %vm149, %v270, 0.0
      %v313 = vadd.f32 %v311, %v312
      %v314 = vsel %vm149, %v271, 0.0
      %v315 = vadd.f32 %v313, %v314
      %v316 = vsel %vm149, %v272, 0.0
      %v317 = vadd.f32 %v315, %v316
      %v318 = vsel %vm149, %v273, 0.0
      %v319 = vadd.f32 %v317, %v318
      %v320 = vsel %vm149, %v274, 0.0
      %v321 = vadd.f32 %v319, %v320
      %v322 = vsel %vm149, %v275, 0.0
      %v323 = vadd.f32 %v321, %v322
      %v324 = vsel %vm149, %v276, 0.0
      %v325 = vadd.f32 %v323, %v324
      %v326 = vsel %vm149, %v277, 0.0
      %v327 = vadd.f32 %v325, %v326
      %v328 = vsel %vm149, %v278, 0.0
      %v329 = vadd.f32 %v327, %v328
      %v330 = vsel %vm149, %v279, 0.0
      %v331 = vadd.f32 %v329, %v330
      %v332 = vsel %vm149, %v280, 0.0
      %v333 = vadd.f32 %v331, %v332
      %v334 = vsel %vm149, %v281, 0.0
      %v335 = vadd.f32 %v333, %v334
      %v336 = vsel %vm149, %v282, 0.0
      %v337 = vadd.f32 %v335, %v336
      %v338 = vsel %vm149, %v283, 0.0
      %v339 = vadd.f32 %v337, %v338
      %v340 = vsel %vm149, %v284, 0.0
      %v341 = vadd.f32 %v339, %v340
      %v342 = vsel %vm149, %v285, 0.0
      %v343 = vadd.f32 %v341, %v342
      %v344 = vsel %vm149, %v286, 0.0
      %v345 = vadd.f32 %v343, %v344
      %v346 = vsel %vm149, %v287, 0.0
      %v347 = vadd.f32 %v345, %v346
      %v348 = vsel %vm149, %v288, 0.0
      %v349 = vadd.f32 %v347, %v348
      %v350 = vsel %vm149, %v289, 0.0
      %v351 = vadd.f32 %v349, %v350
      %v352 = vsel %vm149, %v290, 0.0
      %v353 = vadd.f32 %v351, %v352
      %v354 = vrot.slane %v353, 4
      %v355 = vadd.f32 %v353, %v354
      %v356 = vrot.slane %v355, 2
      %v357 = vadd.f32 %v355, %v356
      %v358 = vrot.slane %v357, 1
      %v359 = vadd.f32 %v357, %v358
      %v360 = vmul.f32 %v359, %v225
      %v361 = vadd.f32 %v360, 1e-05
      %v362 = vrsqrt.pop %v361
      %v363 = vmul.f32 %v362, %v361
      %v364 = vmul.f32 %v363, %v362
      %v365 = vmul.f32 0.5, %v364
      %v366 = vsub.f32 1.5, %v365
      %v367 = vmul.f32 %v362, %v366
      %vm368 = vweird.f32 %v361
      %vm369 = vweird.f32 %v362
      %vm370 = vmor %vm368, %vm369
      %v371 = vsel %vm370, %v362, %v367
      %v372 = vmul.f32 %v227, %v371
      %v373 = vmul.f32 %v228, %v371
      %v374 = vmul.f32 %v229, %v371
      %v375 = vmul.f32 %v230, %v371
      %v376 = vmul.f32 %v231, %v371
      %v377 = vmul.f32 %v232, %v371
      %v378 = vmul.f32 %v233, %v371
      %v379 = vmul.f32 %v234, %v371
      %v380 = vmul.f32 %v235, %v371
      %v381 = vmul.f32 %v236, %v371
      %v382 = vmul.f32 %v237, %v371
      %v383 = vmul.f32 %v238, %v371
      %v384 = vmul.f32 %v239, %v371
      %v385 = vmul.f32 %v240, %v371
      %v386 = vmul.f32 %v241, %v371
      %v387 = vmul.f32 %v242, %v371
      %v388 = vmul.f32 %v243, %v371
      %v389 = vmul.f32 %v244, %v371
      %v390 = vmul.f32 %v245, %v371
      %v391 = vmul.f32 %v246, %v371
      %v392 = vmul.f32 %v247, %v371
      %v393 = vmul.f32 %v248, %v371
      %v394 = vmul.f32 %v249, %v371
      %v395 = vmul.f32 %v250, %v371
      %v396 = vmul.f32 %v251, %v371
      %v397 = vmul.f32 %v252, %v371
      %v398 = vmul.f32 %v253, %v371
      %v399 = vmul.f32 %v254, %v371
      %v400 = vmul.f32 %v255, %v371
      %v401 = vmul.f32 %v256, %v371
      %v402 = vmul.f32 %v257, %v371
      %v403 = vmul.f32 %v258, %v371
      %v404 = vsub.f32 0.0, %v372
      %v405 = vsub.f32 0.0, %v373
      %v406 = vsub.f32 0.0, %v374
      %v407 = vsub.f32 0.0, %v375
      %v408 = vsub.f32 0.0, %v376
      %v409 = vsub.f32 0.0, %v377
      %v410 = vsub.f32 0.0, %v378
      %v411 = vsub.f32 0.0, %v379
      %v412 = vsub.f32 0.0, %v380
      %v413 = vsub.f32 0.0, %v381
      %v414 = vsub.f32 0.0, %v382
      %v415 = vsub.f32 0.0, %v383
      %v416 = vsub.f32 0.0, %v384
      %v417 = vsub.f32 0.0, %v385
      %v418 = vsub.f32 0.0, %v386
      %v419 = vsub.f32 0.0, %v387
      %v420 = vsub.f32 0.0, %v388
      %v421 = vsub.f32 0.0, %v389
      %v422 = vsub.f32 0.0, %v390
      %v423 = vsub.f32 0.0, %v391
      %v424 = vsub.f32 0.0, %v392
      %v425 = vsub.f32 0.0, %v393
      %v426 = vsub.f32 0.0, %v394
      %v427 = vsub.f32 0.0, %v395
      %v428 = vsub.f32 0.0, %v396
      %v429 = vsub.f32 0.0, %v397
      %v430 = vsub.f32 0.0, %v398
      %v431 = vsub.f32 0.0, %v399
      %v432 = vsub.f32 0.0, %v400
      %v433 = vsub.f32 0.0, %v401
      %v434 = vsub.f32 0.0, %v402
      %v435 = vsub.f32 0.0, %v403
      %v436 = vmul.f32 %v404, 1.442695
      %v437 = vpow.pop %v436
      %v438 = vmul.f32 %v405, 1.442695
      %v439 = vpow.pop %v438
      %v440 = vmul.f32 %v406, 1.442695
      %v441 = vpow.pop %v440
      %v442 = vmul.f32 %v407, 1.442695
      %v443 = vpow.pop %v442
      %v444 = vmul.f32 %v408, 1.442695
      %v445 = vpow.pop %v444
      %v446 = vmul.f32 %v409, 1.442695
      %v447 = vpow.pop %v446
      %v448 = vmul.f32 %v410, 1.442695
      %v449 = vpow.pop %v448
      %v450 = vmul.f32 %v411, 1.442695
      %v451 = vpow.pop %v450
      %v452 = vmul.f32 %v412, 1.442695
      %v453 = vpow.pop %v452
      %v454 = vmul.f32 %v413, 1.442695
      %v455 = vpow.pop %v454
      %v456 = vmul.f32 %v414, 1.442695
      %v457 = vpow.pop %v456
      %v458 = vmul.f32 %v415, 1.442695
      %v459 = vpow.pop %v458
      %v460 = vmul.f32 %v416, 1.442695
      %v461 = vpow.pop %v460
      %v462 = vmul.f32 %v417, 1.442695
      %v463 = vpow.pop %v462
      %v464 = vmul.f32 %v418, 1.442695
      %v465 = vpow.pop %v464
      %v466 = vmul.f32 %v419, 1.442695
      %v467 = vpow.pop %v466
      %v468 = vmul.f32 %v420, 1.442695
      %v469 = vpow.pop %v468
      %v470 = vmul.f32 %v421, 1.442695
      %v471 = vpow.pop %v470
      %v472 = vmul.f32 %v422, 1.442695
      %v473 = vpow.pop %v472
      %v474 = vmul.f32 %v423, 1.442695
      %v475 = vpow.pop %v474
      %v476 = vmul.f32 %v424, 1.442695
      %v477 = vpow.pop %v476
      %v478 = vmul.f32 %v425, 1.442695
      %v479 = vpow.pop %v478
      %v480 = vmul.f32 %v426, 1.442695
      %v481 = vpow.pop %v480
      %v482 = vmul.f32 %v427, 1.442695
      %v483 = vpow.pop %v482
      %v484 = vmul.f32 %v428, 1.442695
      %v485 = vpow.pop %v484
      %v486 = vmul.f32 %v429, 1.442695
      %v487 = vpow.pop %v486
      %v488 = vmul.f32 %v430, 1.442695
      %v489 = vpow.pop %v488
      %v490 = vmul.f32 %v431, 1.442695
      %v491 = vpow.pop %v490
      %v492 = vmul.f32 %v432, 1.442695
      %v493 = vpow.pop %v492
      %v494 = vmul.f32 %v433, 1.442695
      %v495 = vpow.pop %v494
      %v496 = vmul.f32 %v434, 1.442695
      %v497 = vpow.pop %v496
      %v498 = vmul.f32 %v435, 1.442695
      %v499 = vpow.pop %v498
      %v500 = vadd.f32 %v437, 1.0
      %v501 = vadd.f32 %v439, 1.0
      %v502 = vadd.f32 %v441, 1.0
      %v503 = vadd.f32 %v443, 1.0
      %v504 = vadd.f32 %v445, 1.0
      %v505 = vadd.f32 %v447, 1.0
      %v506 = vadd.f32 %v449, 1.0
      %v507 = vadd.f32 %v451, 1.0
      %v508 = vadd.f32 %v453, 1.0
      %v509 = vadd.f32 %v455, 1.0
      %v510 = vadd.f32 %v457, 1.0
      %v511 = vadd.f32 %v459, 1.0
      %v512 = vadd.f32 %v461, 1.0
      %v513 = vadd.f32 %v463, 1.0
      %v514 = vadd.f32 %v465, 1.0
      %v515 = vadd.f32 %v467, 1.0
      %v516 = vadd.f32 %v469, 1.0
      %v517 = vadd.f32 %v471, 1.0
      %v518 = vadd.f32 %v473, 1.0
      %v519 = vadd.f32 %v475, 1.0
      %v520 = vadd.f32 %v477, 1.0
      %v521 = vadd.f32 %v479, 1.0
      %v522 = vadd.f32 %v481, 1.0
      %v523 = vadd.f32 %v483, 1.0
      %v524 = vadd.f32 %v485, 1.0
      %v525 = vadd.f32 %v487, 1.0
      %v526 = vadd.f32 %v489, 1.0
      %v527 = vadd.f32 %v491, 1.0
      %v528 = vadd.f32 %v493, 1.0
      %v529 = vadd.f32 %v495, 1.0
      %v530 = vadd.f32 %v497, 1.0
      %v531 = vadd.f32 %v499, 1.0
      %v532 = vrcp.pop %v500
      %v533 = vrcp.pop %v501
      %v534 = vrcp.pop %v502
      %v535 = vrcp.pop %v503
      %v536 = vrcp.pop %v504
      %v537 = vrcp.pop %v505
      %v538 = vrcp.pop %v506
      %v539 = vrcp.pop %v507
      %v540 = vrcp.pop %v508
      %v541 = vrcp.pop %v509
      %v542 = vrcp.pop %v510
      %v543 = vrcp.pop %v511
      %v544 = vrcp.pop %v512
      %v545 = vrcp.pop %v513
      %v546 = vrcp.pop %v514
      %v547 = vrcp.pop %v515
      %v548 = vrcp.pop %v516
      %v549 = vrcp.pop %v517
      %v550 = vrcp.pop %v518
      %v551 = vrcp.pop %v519
      %v552 = vrcp.pop %v520
      %v553 = vrcp.pop %v521
      %v554 = vrcp.pop %v522
      %v555 = vrcp.pop %v523
      %v556 = vrcp.pop %v524
      %v557 = vrcp.pop %v525
      %v558 = vrcp.pop %v526
      %v559 = vrcp.pop %v527
      %v560 = vrcp.pop %v528
      %v561 = vrcp.pop %v529
      %v562 = vrcp.pop %v530
      %v563 = vrcp.pop %v531
      %v564 = vmul.f32 %v372, %v532
      %v565 = vmul.f32 %v373, %v533
      %v566 = vmul.f32 %v374, %v534
      %v567 = vmul.f32 %v375, %v535
      %v568 = vmul.f32 %v376, %v536
      %v569 = vmul.f32 %v377, %v537
      %v570 = vmul.f32 %v378, %v538
      %v571 = vmul.f32 %v379, %v539
      %v572 = vmul.f32 %v380, %v540
      %v573 = vmul.f32 %v381, %v541
      %v574 = vmul.f32 %v382, %v542
      %v575 = vmul.f32 %v383, %v543
      %v576 = vmul.f32 %v384, %v544
      %v577 = vmul.f32 %v385, %v545
      %v578 = vmul.f32 %v386, %v546
      %v579 = vmul.f32 %v387, %v547
      %v580 = vmul.f32 %v388, %v548
      %v581 = vmul.f32 %v389, %v549
      %v582 = vmul.f32 %v390, %v550
      %v583 = vmul.f32 %v391, %v551
      %v584 = vmul.f32 %v392, %v552
      %v585 = vmul.f32 %v393, %v553
      %v586 = vmul.f32 %v394, %v554
      %v587 = vmul.f32 %v395, %v555
      %v588 = vmul.f32 %v396, %v556
      %v589 = vmul.f32 %v397, %v557
      %v590 = vmul.f32 %v398, %v558
      %v591 = vmul.f32 %v399, %v559
      %v592 = vmul.f32 %v400, %v560
      %v593 = vmul.f32 %v401, %v561
      %v594 = vmul.f32 %v402, %v562
      %v595 = vmul.f32 %v403, %v563
      %596 = vst.msk [vmem:[%s116] sm:$0xff] %vm149, %v564
      %597 = vst.msk [vmem:[%s116 + $0x8] sm:$0xff] %vm149, %v565
      %598 = vst.msk [vmem:[%s116 + $0x10] sm:$0xff] %vm149, %v566
      %599 = vst.msk [vmem:[%s116 + $0x18] sm:$0xff] %vm149, %v567
      %600 = vst.msk [vmem:[%s116 + $0x20] sm:$0xff] %vm149, %v568
      %601 = vst.msk [vmem:[%s116 + $0x28] sm:$0xff] %vm149, %v569
      %602 = vst.msk [vmem:[%s116 + $0x30] sm:$0xff] %vm149, %v570
      %603 = vst.msk [vmem:[%s116 + $0x38] sm:$0xff] %vm149, %v571
      %604 = vst.msk [vmem:[%s116 + $0x40] sm:$0xff] %vm149, %v572
      %605 = vst.msk [vmem:[%s116 + $0x48] sm:$0xff] %vm149, %v573
      %606 = vst.msk [vmem:[%s116 + $0x50] sm:$0xff] %vm149, %v574
      %607 = vst.msk [vmem:[%s116 + $0x58] sm:$0xff] %vm149, %v575
      %608 = vst.msk [vmem:[%s116 + $0x60] sm:$0xff] %vm149, %v576
      %609 = vst.msk [vmem:[%s116 + $0x68] sm:$0xff] %vm149, %v577
      %610 = vst.msk [vmem:[%s116 + $0x70] sm:$0xff] %vm149, %v578
      %611 = vst.msk [vmem:[%s116 + $0x78] sm:$0xff] %vm149, %v579
      %612 = vst.msk [vmem:[%s116 + $0x80] sm:$0xff] %vm149, %v580
      %613 = vst.msk [vmem:[%s116 + $0x88] sm:$0xff] %vm149, %v581
      %614 = vst.msk [vmem:[%s116 + $0x90] sm:$0xff] %vm149, %v582
      %615 = vst.msk [vmem:[%s116 + $0x98] sm:$0xff] %vm149, %v583
      %616 = vst.msk [vmem:[%s116 + $0xa0] sm:$0xff] %vm149, %v584
      %617 = vst.msk [vmem:[%s116 + $0xa8] sm:$0xff] %vm149, %v585
      %618 = vst.msk [vmem:[%s116 + $0xb0] sm:$0xff] %vm149, %v586
      %619 = vst.msk [vmem:[%s116 + $0xb8] sm:$0xff] %vm149, %v587
      %620 = vst.msk [vmem:[%s116 + $0xc0] sm:$0xff] %vm149, %v588
      %621 = vst.msk [vmem:[%s116 + $0xc8] sm:$0xff] %vm149, %v589
      %622 = vst.msk [vmem:[%s116 + $0xd0] sm:$0xff] %vm149, %v590
      %623 = vst.msk [vmem:[%s116 + $0xd8] sm:$0xff] %vm149, %v591
      %624 = vst.msk [vmem:[%s116 + $0xe0] sm:$0xff] %vm149, %v592
      %625 = vst.msk [vmem:[%s116 + $0xe8] sm:$0xff] %vm149, %v593
      %626 = vst.msk [vmem:[%s116 + $0xf0] sm:$0xff] %vm149, %v594
      %627 = vst.msk [vmem:[%s116 + $0xf8] sm:$0xff] %vm149, %v595
      %p628 = scmp.lt.s32.totalorder %s12, 1
      %s629 = scalar_select %p628, %s12, 1
      %s630 = smul.addr %s629, 32
      %s631 = smul.addr %s630, 8
      %s632 = scalar_lea.vmem %s1, %s631
      // Predicated region
      $region25: #{_lambda_.10} parent=23 // pred_check
        %p633 = pneg %p56
      $region26: #{_lambda_.10} parent=23 // pred_check_branch
        %635 = sbr.rel (%p633) target = $region28
      $region27: #{_lambda_.10} parent=23 // pred_region
        _
      $region28: #{_lambda_.10} parent=23 // pred_fallthru
        _
    $region24: #{_lambda_.10} parent=5 // pred_fallthru
      _
    %p636 = scmp.le.s32.totalorder 2, %s7
    // Predicated region
    $region29: #{_lambda_.10} parent=5 // pred_check
      %p637 = pneg %p636
    $region30: #{_lambda_.10} parent=5 // pred_check_branch
      %639 = sbr.rel (%p637) target = $region32
    $region31: #{_lambda_.10} parent=5 // pred_region
      %s640 = ssub.s32 %s7, 2
      // Predicated region
      $region33: #{_lambda_.10} parent=31 // pred_check
        %p641 = pneg %p62
      $region34: #{_lambda_.10} parent=31 // pred_check_branch
        %643 = sbr.rel (%p641) target = $region36
      $region35: #{_lambda_.10} parent=31 // pred_region
        %p644 = scmp.lt.s32.totalorder %s13, 1
        %s645 = scalar_select %p644, %s13, 1
        %s646 = smul.addr %s645, 32
        %s647 = smul.addr %s646, 8
        %s648 = scalar_lea.vmem %s1, %s647
      $region36: #{_lambda_.10} parent=31 // pred_fallthru
        _
    $region32: #{_lambda_.10} parent=5 // pred_fallthru
      _
  $region6: #{_lambda_.10} parent=0 // loop_footer
    %s11 = sadd.s32 1, %s7
  $region7: #{_lambda_.10} parent=0 // loop_footer_branch
    %6 = sbr.rel target = $region3
  $region8: #{_lambda_.10} parent=0 // loop_exit
    _

// kernel: _lambda_.12
$region0: #{_lambda_.12}
  #allocation0 [shape = 'u32[]', space=smem, size = 0x4, offset = 0x4, fixed_abs, tag = 'smem constant byte address 0x4 - core index']
  #allocation1 [shape = 'u32[72,128]{1,0:T(1,128)}', space=vmem, size = 0x9000, scoped, tag = 'internal scratch']
  #allocation2 [shape = 'f32[256,128]{1,0:T(8,128)}', space=vmem, size = 0x20000, scoped, tag = 'scratch operand']
  %s0 = inlined_call_operand.vmem [shape: bf16[512,128], index: 0, kind: input, shape index: {}]
  %s1 = inlined_call_operand.vmem [shape: bf16[128,128], index: 1, kind: input, shape index: {}]
  %s2 = inlined_call_operand.vmem [shape: f32[1,128], index: 2, kind: input, shape index: {}]
  %s3 = inlined_call_operand.vmem [shape: f32[512,128], index: 3, kind: input, shape index: {}]
  %s4 = inlined_call_operand.vmem [shape: f32[512,128], index: 4, kind: output, shape index: {}]
  %s5 = sld [smem:[#allocation0]]
  $region57: #{_lambda_.12} parent=0
    _
  %s7 = ssub.s32 1, %s5
  %s8 = scalar_select 0, %s7, %s5
  loop: start=0, step=1, limit=4
  $region2: #{_lambda_.12} parent=0 // loop_pre_header
    _
  $region3: #{_lambda_.12} parent=0 // loop_header
    %s10 = sphi 0, %s14
    %p11 = scmp.ge.s32.totalorder %s10, 4
    %s17 = sphi 0, %s36
    %s18 = sphi 0, %s32
    %s19 = sphi 0, %s28
    %s20 = sphi 0, %s17
    %s21 = sphi 0, %s18
    %s22 = sphi 0, %s19
    %s23 = sphi 0, %s20
    %s24 = sphi 0, %s21
    %s25 = sphi 0, %s22
    %s41 = sphi 0, %s43
    %s44 = sphi 0, %s41
    %s45 = sphi 0, %s44
    %s61 = sphi 0, %s45
    %s69 = sphi 0, %s71
    %s72 = sphi 0, %s69
    %s73 = sphi 0, %s72
    %s89 = sphi 0, %s73
    %s95 = sphi 0, %s97
    %s98 = sphi 0, %s95
    %s99 = sphi 0, %s98
    %s115 = sphi 0, %s99
    %s123 = sphi 0, %s125
    %s126 = sphi 0, %s123
    %s127 = sphi 0, %s126
    %s143 = sphi 0, %s127
    %s151 = sphi 0, %s153
    %s154 = sphi 0, %s151
    %s155 = sphi 0, %s154
    %s171 = sphi 0, %s155
  $region4: #{_lambda_.12} parent=0 // loop_header_branch
    %13 = sbr.rel (%p11) target = $region8
  $region5: #{_lambda_.12} parent=0 // loop_body
    %s15 = ssub.s32 %s10, 1
    %s16 = ssub.s32 %s10, 2
    %s26 = sadd.s32 1, %s19
    %p27 = scmp.ge.s32.totalorder %s26, 1
    %s28 = scalar_select %p27, 0, %s26
    %s29 = sadd.s32 1, %s18
    %s30 = scalar_select %p27, %s29, %s18
    %p31 = scmp.ge.s32.totalorder %s30, 1
    %s32 = scalar_select %p31, 0, %s30
    %s33 = sadd.s32 1, %s17
    %s34 = scalar_select %p31, %s33, %s17
    %p35 = scmp.ge.s32.totalorder %s34, 2
    %s36 = scalar_select %p35, 0, %s34
    %s37 = ssub.s32 %s17, %s36
    %s38 = ssub.s32 %s19, %s28
    %s39 = sor.u32 %s37, %s38
    %p40 = scmp.eq.s32.totalorder %s39, 0
    %s42 = sadd.s32 %s41, 1
    %s43 = scalar_select %p40, %s41, %s42
    %p46 = pneg %p40
    %p47 = scmp.eq.s32.totalorder %s10, 1
    %p48 = por %p46, %p47
    %p49 = scmp.ne.s32.totalorder %s41, %s44
    %p50 = scmp.eq.s32.totalorder %s10, 0
    %p51 = por %p49, %p50
    %p52 = scmp.ne.s32.totalorder %s41, %s44
    %p53 = scmp.eq.s32.totalorder %s15, 1
    %p54 = por %p52, %p53
    %p55 = scmp.ne.s32.totalorder %s44, %s45
    %p56 = scmp.eq.s32.totalorder %s15, 0
    %p57 = por %p55, %p56
    %p58 = scmp.ne.s32.totalorder %s44, %s45
    %p59 = scmp.eq.s32.totalorder %s16, 1
    %p60 = por %p58, %p59
    %p62 = scmp.ne.s32.totalorder %s45, %s61
    %p63 = scmp.eq.s32.totalorder %s16, 0
    %p64 = por %p62, %p63
    %s65 = ssub.s32 %s19, %s28
    %s66 = ssub.s32 %s18, %s32
    %s67 = sor.u32 %s65, %s66
    %p68 = scmp.eq.s32.totalorder %s67, 0
    %s70 = sadd.s32 %s69, 1
    %s71 = scalar_select %p68, %s69, %s70
    %p74 = pneg %p68
    %p75 = scmp.eq.s32.totalorder %s10, 1
    %p76 = por %p74, %p75
    %p77 = scmp.ne.s32.totalorder %s69, %s72
    %p78 = scmp.eq.s32.totalorder %s10, 0
    %p79 = por %p77, %p78
    %p80 = scmp.ne.s32.totalorder %s69, %s72
    %p81 = scmp.eq.s32.totalorder %s15, 1
    %p82 = por %p80, %p81
    %p83 = scmp.ne.s32.totalorder %s72, %s73
    %p84 = scmp.eq.s32.totalorder %s15, 0
    %p85 = por %p83, %p84
    %p86 = scmp.ne.s32.totalorder %s72, %s73
    %p87 = scmp.eq.s32.totalorder %s16, 1
    %p88 = por %p86, %p87
    %p90 = scmp.ne.s32.totalorder %s73, %s89
    %p91 = scmp.eq.s32.totalorder %s16, 0
    %p92 = por %p90, %p91
    %s93 = ssub.s32 %s18, %s32
    %p94 = scmp.eq.s32.totalorder %s93, 0
    %s96 = sadd.s32 %s95, 1
    %s97 = scalar_select %p94, %s95, %s96
    %p100 = pneg %p94
    %p101 = scmp.eq.s32.totalorder %s10, 1
    %p102 = por %p100, %p101
    %p103 = scmp.ne.s32.totalorder %s95, %s98
    %p104 = scmp.eq.s32.totalorder %s10, 0
    %p105 = por %p103, %p104
    %p106 = scmp.ne.s32.totalorder %s95, %s98
    %p107 = scmp.eq.s32.totalorder %s15, 1
    %p108 = por %p106, %p107
    %p109 = scmp.ne.s32.totalorder %s98, %s99
    %p110 = scmp.eq.s32.totalorder %s15, 0
    %p111 = por %p109, %p110
    %p112 = scmp.ne.s32.totalorder %s98, %s99
    %p113 = scmp.eq.s32.totalorder %s16, 1
    %p114 = por %p112, %p113
    %p116 = scmp.ne.s32.totalorder %s99, %s115
    %p117 = scmp.eq.s32.totalorder %s16, 0
    %p118 = por %p116, %p117
    %s119 = ssub.s32 %s17, %s36
    %s120 = ssub.s32 %s18, %s32
    %s121 = sor.u32 %s119, %s120
    %p122 = scmp.eq.s32.totalorder %s121, 0
    %s124 = sadd.s32 %s123, 1
    %s125 = scalar_select %p122, %s123, %s124
    %p128 = pneg %p122
    %p129 = scmp.eq.s32.totalorder %s10, 1
    %p130 = por %p128, %p129
    %p131 = scmp.ne.s32.totalorder %s123, %s126
    %p132 = scmp.eq.s32.totalorder %s10, 0
    %p133 = por %p131, %p132
    %p134 = scmp.ne.s32.totalorder %s123, %s126
    %p135 = scmp.eq.s32.totalorder %s15, 1
    %p136 = por %p134, %p135
    %p137 = scmp.ne.s32.totalorder %s126, %s127
    %p138 = scmp.eq.s32.totalorder %s15, 0
    %p139 = por %p137, %p138
    %p140 = scmp.ne.s32.totalorder %s126, %s127
    %p141 = scmp.eq.s32.totalorder %s16, 1
    %p142 = por %p140, %p141
    %p144 = scmp.ne.s32.totalorder %s127, %s143
    %p145 = scmp.eq.s32.totalorder %s16, 0
    %p146 = por %p144, %p145
    %s147 = ssub.s32 %s17, %s36
    %s148 = ssub.s32 %s18, %s32
    %s149 = sor.u32 %s147, %s148
    %p150 = scmp.eq.s32.totalorder %s149, 0
    %s152 = sadd.s32 %s151, 1
    %s153 = scalar_select %p150, %s151, %s152
    %p156 = pneg %p150
    %p157 = scmp.eq.s32.totalorder %s10, 1
    %p158 = por %p156, %p157
    %p159 = scmp.ne.s32.totalorder %s151, %s154
    %p160 = scmp.eq.s32.totalorder %s10, 0
    %p161 = por %p159, %p160
    %p162 = scmp.ne.s32.totalorder %s151, %s154
    %p163 = scmp.eq.s32.totalorder %s15, 1
    %p164 = por %p162, %p163
    %p165 = scmp.ne.s32.totalorder %s154, %s155
    %p166 = scmp.eq.s32.totalorder %s15, 0
    %p167 = por %p165, %p166
    %p168 = scmp.ne.s32.totalorder %s154, %s155
    %p169 = scmp.eq.s32.totalorder %s16, 1
    %p170 = por %p168, %p169
    %p172 = scmp.ne.s32.totalorder %s155, %s171
    %p173 = scmp.eq.s32.totalorder %s16, 0
    %p174 = por %p172, %p173
    %p175 = scmp.le.s32.totalorder 1, %s10
    %p176 = scmp.lt.s32.totalorder %s10, 3
    %p177 = pnand %p175, %p176
    %p178 = pneg %p177
    // Predicated region
    $region9: #{_lambda_.12} parent=5 // pred_check
      _
    $region10: #{_lambda_.12} parent=5 // pred_check_branch
      %180 = sbr.rel (%p177) target = $region12
    $region11: #{_lambda_.12} parent=5 // pred_region
      %s181 = ssub.s32 %s10, 1
      // Predicated region
      $region13: #{_lambda_.12} parent=11 // pred_check
        %p182 = pneg %p85
      $region14: #{_lambda_.12} parent=11 // pred_check_branch
        %184 = sbr.rel (%p182) target = $region16
      $region15: #{_lambda_.12} parent=11 // pred_region
        %s185 = smul.u32 16, %s22
        %p186 = scmp.lt.s32.totalorder %s185, 15
        %s187 = scalar_select %p186, %s185, 15
        %p188 = scmp.lt.s32.totalorder %s21, 0
        %s189 = scalar_select %p188, %s21, 0
        %s190 = sadd.s32 %s189, %s187
        %s191 = smul.addr %s190, 4
        %s192 = scalar_lea.vmem %s1, %s191
        %s193 = smul.u32 16, %s22
      $region16: #{_lambda_.12} parent=11 // pred_fallthru
        _
      // Predicated region
      $region17: #{_lambda_.12} parent=11 // pred_check
        %p194 = pneg %p111
      $region18: #{_lambda_.12} parent=11 // pred_check_branch
        %196 = sbr.rel (%p194) target = $region20
      $region19: #{_lambda_.12} parent=11 // pred_region
        %p197 = scmp.lt.s32.totalorder %s21, 0
        %s198 = scalar_select %p197, %s21, 0
        %s199 = scalar_lea.vmem %s2, %s198
      $region20: #{_lambda_.12} parent=11 // pred_fallthru
        _
    $region12: #{_lambda_.12} parent=5 // pred_fallthru
      _
    %p200 = scmp.lt.s32.totalorder %s10, 2
    // Predicated region
    $region21: #{_lambda_.12} parent=5 // pred_check
      %p201 = pneg %p200
    $region22: #{_lambda_.12} parent=5 // pred_check_branch
      %203 = sbr.rel (%p201) target = $region24
    $region23: #{_lambda_.12} parent=5 // pred_region
      // Predicated region
      $region25: #{_lambda_.12} parent=23 // pred_check
        %p204 = pneg %p51
      $region26: #{_lambda_.12} parent=23 // pred_check_branch
        %206 = sbr.rel (%p204) target = $region28
      $region27: #{_lambda_.12} parent=23 // pred_region
        %s207 = smul.u32 32, %s17
        %p208 = scmp.lt.s32.totalorder %s207, 63
        %s209 = scalar_select %p208, %s207, 63
        %p210 = scmp.lt.s32.totalorder %s19, 0
        %s211 = scalar_select %p210, %s19, 0
        %s212 = sadd.s32 %s211, %s209
        %s213 = smul.addr %s212, 4
        %s214 = scalar_lea.vmem %s0, %s213
        %s215 = smul.u32 32, %s17
      $region28: #{_lambda_.12} parent=23 // pred_fallthru
        _
      // Predicated region
      $region29: #{_lambda_.12} parent=23 // pred_check
        %p216 = pneg %p133
      $region30: #{_lambda_.12} parent=23 // pred_check_branch
        %218 = sbr.rel (%p216) target = $region32
      $region31: #{_lambda_.12} parent=23 // pred_region
        %s219 = smul.u32 32, %s17
        %p220 = scmp.lt.s32.totalorder %s219, 63
        %s221 = scalar_select %p220, %s219, 63
        %p222 = scmp.lt.s32.totalorder %s18, 0
        %s223 = scalar_select %p222, %s18, 0
        %s224 = sadd.s32 %s223, %s221
        %s225 = smul.addr %s224, 8
        %s226 = scalar_lea.vmem %s3, %s225
        %s227 = smul.u32 32, %s17
      $region32: #{_lambda_.12} parent=23 // pred_fallthru
        _
    $region24: #{_lambda_.12} parent=5 // pred_fallthru
      _
    %p228 = scmp.le.s32.totalorder 1, %s10
    %p229 = scmp.lt.s32.totalorder %s10, 3
    %p230 = pnand %p228, %p229
    %p231 = pneg %p230
    // Predicated region
    $region33: #{_lambda_.12} parent=5 // pred_check
      _
    $region34: #{_lambda_.12} parent=5 // pred_check_branch
      %233 = sbr.rel (%p230) target = $region36
    $region35: #{_lambda_.12} parent=5 // pred_region
      %s234 = ssub.s32 %s10, 1
      %s235 = smul.u32 32, %s20
      %p236 = scmp.lt.s32.totalorder %s235, 63
      %s237 = scalar_select %p236, %s235, 63
      %p238 = scmp.lt.s32.totalorder %s22, 0
      %s239 = scalar_select %p238, %s22, 0
      %s240 = sadd.s32 %s239, %s237
      %s241 = smul.addr %s240, 4
      %s242 = scalar_lea.vmem %s0, %s241
      %p243 = pneg %p57
      %p244 = pneg %p54
      %s245 = smul.u32 16, %s22
      %p246 = scmp.lt.s32.totalorder %s245, 15
      %s247 = scalar_select %p246, %s245, 15
      %p248 = scmp.lt.s32.totalorder %s21, 0
      %s249 = scalar_select %p248, %s21, 0
      %s250 = sadd.s32 %s249, %s247
      %s251 = smul.addr %s250, 4
      %s252 = scalar_lea.vmem %s1, %s251
      %p253 = pneg %p85
      %p254 = pneg %p82
      %p255 = scmp.lt.s32.totalorder %s21, 0
      %s256 = scalar_select %p255, %s21, 0
      %s257 = scalar_lea.vmem %s2, %s256
      %p258 = pneg %p111
      %p259 = pneg %p108
      %s260 = smul.u32 32, %s20
      %p261 = scmp.lt.s32.totalorder %s260, 63
      %s262 = scalar_select %p261, %s260, 63
      %p263 = scmp.lt.s32.totalorder %s21, 0
      %s264 = scalar_select %p263, %s21, 0
      %s265 = sadd.s32 %s264, %s262
      %s266 = smul.addr %s265, 8
      %s267 = scalar_lea.vmem %s3, %s266
      %p268 = pneg %p139
      %p269 = pneg %p136
      %p270 = pneg %p167
      %p271 = pneg %p164
      %s272 = smul.u32 32, %s20
      %p273 = scmp.lt.s32.totalorder %s272, 63
      %s274 = scalar_select %p273, %s272, 63
      %p275 = scmp.lt.s32.totalorder %s21, 0
      %s276 = scalar_select %p275, %s21, 0
      %s277 = sadd.s32 %s276, %s274
      %s278 = smul.addr %s277, 8
      %s279 = scalar_lea.vmem %s4, %s278
      %s280 = smul.u32 32, %s20
      %p281 = scmp.lt.s32.totalorder %s280, 63
      %s282 = scalar_select %p281, %s280, 63
      %p283 = scmp.lt.s32.totalorder %s22, 0
      %s284 = scalar_select %p283, %s22, 0
      %s285 = sadd.s32 %s284, %s282
      %s286 = smul.addr %s285, 4
      %s287 = scalar_lea.vmem %s0, %s286
      %s288 = smul.u32 32, %s20
      %s289 = smul.u32 16, %s22
      %p290 = scmp.lt.s32.totalorder %s289, 15
      %s291 = scalar_select %p290, %s289, 15
      %p292 = scmp.lt.s32.totalorder %s21, 0
      %s293 = scalar_select %p292, %s21, 0
      %s294 = sadd.s32 %s293, %s291
      %s295 = smul.addr %s294, 4
      %s296 = scalar_lea.vmem %s1, %s295
      %s297 = smul.u32 16, %s22
      %p298 = scmp.lt.s32.totalorder %s21, 0
      %s299 = scalar_select %p298, %s21, 0
      %s300 = scalar_lea.vmem %s2, %s299
      %s301 = smul.u32 32, %s20
      %p302 = scmp.lt.s32.totalorder %s301, 63
      %s303 = scalar_select %p302, %s301, 63
      %p304 = scmp.lt.s32.totalorder %s21, 0
      %s305 = scalar_select %p304, %s21, 0
      %s306 = sadd.s32 %s305, %s303
      %s307 = smul.addr %s306, 8
      %s308 = scalar_lea.vmem %s3, %s307
      %s309 = smul.u32 32, %s20
      %s310 = smul.u32 32, %s20
      %p311 = scmp.lt.s32.totalorder %s310, 63
      %s312 = scalar_select %p311, %s310, 63
      %p313 = scmp.lt.s32.totalorder %s21, 0
      %s314 = scalar_select %p313, %s21, 0
      %s315 = sadd.s32 %s314, %s312
      %s316 = smul.addr %s315, 8
      %s317 = scalar_lea.vmem %s4, %s316
      %s318 = smul.u32 32, %s20
      %p319 = scmp.eq.s32.totalorder %s22, 0
      // Predicated region
      $region37: #{_lambda_.12} parent=35 // pred_check
        %p320 = pneg %p319
      $region38: #{_lambda_.12} parent=35 // pred_check_branch
        %322 = sbr.rel (%p320) target = $region40
      $region39: #{_lambda_.12} parent=35 // pred_region
        %323 = vst [vmem:[#allocation2] sm:$0xff] 0.0
        %324 = vst [vmem:[#allocation2 + $0x8] sm:$0xff] 0.0
        %325 = vst [vmem:[#allocation2 + $0x10] sm:$0xff] 0.0
        %326 = vst [vmem:[#allocation2 + $0x18] sm:$0xff] 0.0
        %327 = vst [vmem:[#allocation2 + $0x20] sm:$0xff] 0.0
        %328 = vst [vmem:[#allocation2 + $0x28] sm:$0xff] 0.0
        %329 = vst [vmem:[#allocation2 + $0x30] sm:$0xff] 0.0
        %330 = vst [vmem:[#allocation2 + $0x38] sm:$0xff] 0.0
        %331 = vst [vmem:[#allocation2 + $0x40] sm:$0xff] 0.0
        %332 = vst [vmem:[#allocation2 + $0x48] sm:$0xff] 0.0
        %333 = vst [vmem:[#allocation2 + $0x50] sm:$0xff] 0.0
        %334 = vst [vmem:[#allocation2 + $0x58] sm:$0xff] 0.0
        %335 = vst [vmem:[#allocation2 + $0x60] sm:$0xff] 0.0
        %336 = vst [vmem:[#allocation2 + $0x68] sm:$0xff] 0.0
        %337 = vst [vmem:[#allocation2 + $0x70] sm:$0xff] 0.0
        %338 = vst [vmem:[#allocation2 + $0x78] sm:$0xff] 0.0
        %339 = vst [vmem:[#allocation2 + $0x80] sm:$0xff] 0.0
        %340 = vst [vmem:[#allocation2 + $0x88] sm:$0xff] 0.0
        %341 = vst [vmem:[#allocation2 + $0x90] sm:$0xff] 0.0
        %342 = vst [vmem:[#allocation2 + $0x98] sm:$0xff] 0.0
        %343 = vst [vmem:[#allocation2 + $0xa0] sm:$0xff] 0.0
        %344 = vst [vmem:[#allocation2 + $0xa8] sm:$0xff] 0.0
        %345 = vst [vmem:[#allocation2 + $0xb0] sm:$0xff] 0.0
        %346 = vst [vmem:[#allocation2 + $0xb8] sm:$0xff] 0.0
        %347 = vst [vmem:[#allocation2 + $0xc0] sm:$0xff] 0.0
        %348 = vst [vmem:[#allocation2 + $0xc8] sm:$0xff] 0.0
        %349 = vst [vmem:[#allocation2 + $0xd0] sm:$0xff] 0.0
        %350 = vst [vmem:[#allocation2 + $0xd8] sm:$0xff] 0.0
        %351 = vst [vmem:[#allocation2 + $0xe0] sm:$0xff] 0.0
        %352 = vst [vmem:[#allocation2 + $0xe8] sm:$0xff] 0.0
        %353 = vst [vmem:[#allocation2 + $0xf0] sm:$0xff] 0.0
        %354 = vst [vmem:[#allocation2 + $0xf8] sm:$0xff] 0.0
      $region40: #{_lambda_.12} parent=35 // pred_fallthru
        _
      %v355 = vld [vmem:[#allocation2] sm:$0xff]
      %v356 = vld [vmem:[#allocation2 + $0x8] sm:$0xff]
      %v357 = vld [vmem:[#allocation2 + $0x10] sm:$0xff]
      %v358 = vld [vmem:[#allocation2 + $0x18] sm:$0xff]
      %v359 = vld [vmem:[#allocation2 + $0x20] sm:$0xff]
      %v360 = vld [vmem:[#allocation2 + $0x28] sm:$0xff]
      %v361 = vld [vmem:[#allocation2 + $0x30] sm:$0xff]
      %v362 = vld [vmem:[#allocation2 + $0x38] sm:$0xff]
      %v363 = vld [vmem:[#allocation2 + $0x40] sm:$0xff]
      %v364 = vld [vmem:[#allocation2 + $0x48] sm:$0xff]
      %v365 = vld [vmem:[#allocation2 + $0x50] sm:$0xff]
      %v366 = vld [vmem:[#allocation2 + $0x58] sm:$0xff]
      %v367 = vld [vmem:[#allocation2 + $0x60] sm:$0xff]
      %v368 = vld [vmem:[#allocation2 + $0x68] sm:$0xff]
      %v369 = vld [vmem:[#allocation2 + $0x70] sm:$0xff]
      %v370 = vld [vmem:[#allocation2 + $0x78] sm:$0xff]
      %v371 = vld [vmem:[#allocation2 + $0x80] sm:$0xff]
      %v372 = vld [vmem:[#allocation2 + $0x88] sm:$0xff]
      %v373 = vld [vmem:[#allocation2 + $0x90] sm:$0xff]
      %v374 = vld [vmem:[#allocation2 + $0x98] sm:$0xff]
      %v375 = vld [vmem:[#allocation2 + $0xa0] sm:$0xff]
      %v376 = vld [vmem:[#allocation2 + $0xa8] sm:$0xff]
      %v377 = vld [vmem:[#allocation2 + $0xb0] sm:$0xff]
      %v378 = vld [vmem:[#allocation2 + $0xb8] sm:$0xff]
      %v379 = vld [vmem:[#allocation2 + $0xc0] sm:$0xff]
      %v380 = vld [vmem:[#allocation2 + $0xc8] sm:$0xff]
      %v381 = vld [vmem:[#allocation2 + $0xd0] sm:$0xff]
      %v382 = vld [vmem:[#allocation2 + $0xd8] sm:$0xff]
      %v383 = vld [vmem:[#allocation2 + $0xe0] sm:$0xff]
      %v384 = vld [vmem:[#allocation2 + $0xe8] sm:$0xff]
      %v385 = vld [vmem:[#allocation2 + $0xf0] sm:$0xff]
      %v386 = vld [vmem:[#allocation2 + $0xf8] sm:$0xff]
      %v387 = vld [vmem:[%s287] sm:$0xf]
      %v388 = vld [vmem:[%s287 + $0x4] sm:$0xf]
      %v389 = vld [vmem:[%s287 + $0x8] sm:$0xf]
      %v390 = vld [vmem:[%s287 + $0xc] sm:$0xf]
      %v391 = vld [vmem:[%s287 + $0x10] sm:$0xf]
      %v392 = vld [vmem:[%s287 + $0x14] sm:$0xf]
      %v393 = vld [vmem:[%s287 + $0x18] sm:$0xf]
      %v394 = vld [vmem:[%s287 + $0x1c] sm:$0xf]
      %v395 = vld [vmem:[%s287 + $0x20] sm:$0xf]
      %v396 = vld [vmem:[%s287 + $0x24] sm:$0xf]
      %v397 = vld [vmem:[%s287 + $0x28] sm:$0xf]
      %v398 = vld [vmem:[%s287 + $0x2c] sm:$0xf]
      %v399 = vld [vmem:[%s287 + $0x30] sm:$0xf]
      %v400 = vld [vmem:[%s287 + $0x34] sm:$0xf]
      %v401 = vld [vmem:[%s287 + $0x38] sm:$0xf]
      %v402 = vld [vmem:[%s287 + $0x3c] sm:$0xf]
      %v403 = vld [vmem:[%s287 + $0x40] sm:$0xf]
      %v404 = vld [vmem:[%s287 + $0x44] sm:$0xf]
      %v405 = vld [vmem:[%s287 + $0x48] sm:$0xf]
      %v406 = vld [vmem:[%s287 + $0x4c] sm:$0xf]
      %v407 = vld [vmem:[%s287 + $0x50] sm:$0xf]
      %v408 = vld [vmem:[%s287 + $0x54] sm:$0xf]
      %v409 = vld [vmem:[%s287 + $0x58] sm:$0xf]
      %v410 = vld [vmem:[%s287 + $0x5c] sm:$0xf]
      %v411 = vld [vmem:[%s287 + $0x60] sm:$0xf]
      %v412 = vld [vmem:[%s287 + $0x64] sm:$0xf]
      %v413 = vld [vmem:[%s287 + $0x68] sm:$0xf]
      %v414 = vld [vmem:[%s287 + $0x6c] sm:$0xf]
      %v415 = vld [vmem:[%s287 + $0x70] sm:$0xf]
      %v416 = vld [vmem:[%s287 + $0x74] sm:$0xf]
      %v417 = vld [vmem:[%s287 + $0x78] sm:$0xf]
      %v418 = vld [vmem:[%s287 + $0x7c] sm:$0xf]
      %v419 = vld [vmem:[%s296] sm:$0xf]
      %v420 = vld [vmem:[%s296 + $0x4] sm:$0xf]
      %v421 = vld [vmem:[%s296 + $0x8] sm:$0xf]
      %v422 = vld [vmem:[%s296 + $0xc] sm:$0xf]
      %v423 = vld [vmem:[%s296 + $0x10] sm:$0xf]
      %v424 = vld [vmem:[%s296 + $0x14] sm:$0xf]
      %v425 = vld [vmem:[%s296 + $0x18] sm:$0xf]
      %v426 = vld [vmem:[%s296 + $0x1c] sm:$0xf]
      %v427 = vld [vmem:[%s296 + $0x20] sm:$0xf]
      %v428 = vld [vmem:[%s296 + $0x24] sm:$0xf]
      %v429 = vld [vmem:[%s296 + $0x28] sm:$0xf]
      %v430 = vld [vmem:[%s296 + $0x2c] sm:$0xf]
      %v431 = vld [vmem:[%s296 + $0x30] sm:$0xf]
      %v432 = vld [vmem:[%s296 + $0x34] sm:$0xf]
      %v433 = vld [vmem:[%s296 + $0x38] sm:$0xf]
      %v434 = vld [vmem:[%s296 + $0x3c] sm:$0xf]
      %v467 = vunpack.c.l.b16 %v387
      %v468 = vunpack.c.l.b16 %v388
      %v469 = vunpack.c.l.b16 %v389
      %v470 = vunpack.c.l.b16 %v390
      %v471 = vunpack.c.l.b16 %v391
      %v472 = vunpack.c.l.b16 %v392
      %v473 = vunpack.c.l.b16 %v393
      %v474 = vunpack.c.l.b16 %v394
      %v475 = vunpack.c.l.b16 %v395
      %v476 = vunpack.c.l.b16 %v396
      %v477 = vunpack.c.l.b16 %v397
      %v478 = vunpack.c.l.b16 %v398
      %v479 = vunpack.c.l.b16 %v399
      %v480 = vunpack.c.l.b16 %v400
      %v481 = vunpack.c.l.b16 %v401
      %v482 = vunpack.c.l.b16 %v402
      %v483 = vunpack.c.l.b16 %v403
      %v484 = vunpack.c.l.b16 %v404
      %v485 = vunpack.c.l.b16 %v405
      %v486 = vunpack.c.l.b16 %v406
      %v487 = vunpack.c.l.b16 %v407
      %v488 = vunpack.c.l.b16 %v408
      %v489 = vunpack.c.l.b16 %v409
      %v490 = vunpack.c.l.b16 %v410
      %v491 = vunpack.c.l.b16 %v411
      %v492 = vunpack.c.l.b16 %v412
      %v493 = vunpack.c.l.b16 %v413
      %v494 = vunpack.c.l.b16 %v414
      %v495 = vunpack.c.l.b16 %v415
      %v496 = vunpack.c.l.b16 %v416
      %v497 = vunpack.c.l.b16 %v417
      %v498 = vunpack.c.l.b16 %v418
      %v499 = vpack.c.b16 %v468, %v467
      %v500 = vpack.c.b16 %v470, %v469
      %v501 = vpack.c.b16 %v472, %v471
      %v502 = vpack.c.b16 %v474, %v473
      %v503 = vpack.c.b16 %v476, %v475
      %v504 = vpack.c.b16 %v478, %v477
      %v505 = vpack.c.b16 %v480, %v479
      %v506 = vpack.c.b16 %v482, %v481
      %v507 = vpack.c.b16 %v484, %v483
      %v508 = vpack.c.b16 %v486, %v485
      %v509 = vpack.c.b16 %v488, %v487
      %v510 = vpack.c.b16 %v490, %v489
      %v511 = vpack.c.b16 %v492, %v491
      %v512 = vpack.c.b16 %v494, %v493
      %v513 = vpack.c.b16 %v496, %v495
      %v514 = vpack.c.b16 %v498, %v497
      %v547 = vunpack.c.l.b16 %v419
      %v548 = vunpack.c.l.b16 %v420
      %v549 = vunpack.c.l.b16 %v421
      %v550 = vunpack.c.l.b16 %v422
      %v551 = vunpack.c.l.b16 %v423
      %v552 = vunpack.c.l.b16 %v424
      %v553 = vunpack.c.l.b16 %v425
      %v554 = vunpack.c.l.b16 %v426
      %v555 = vunpack.c.l.b16 %v427
      %v556 = vunpack.c.l.b16 %v428
      %v557 = vunpack.c.l.b16 %v429
      %v558 = vunpack.c.l.b16 %v430
      %v559 = vunpack.c.l.b16 %v431
      %v560 = vunpack.c.l.b16 %v432
      %v561 = vunpack.c.l.b16 %v433
      %v562 = vunpack.c.l.b16 %v434
      %v563 = vpack.c.b16 %v548, %v547
      %v564 = vpack.c.b16 %v550, %v549
      %v565 = vpack.c.b16 %v552, %v551
      %v566 = vpack.c.b16 %v554, %v553
      %v567 = vpack.c.b16 %v556, %v555
      %v568 = vpack.c.b16 %v558, %v557
      %v569 = vpack.c.b16 %v560, %v559
      %v570 = vpack.c.b16 %v562, %v561
      %579 = vmatpush.bf16.msra.mxu0 %v570
      %580 = vmatpush.bf16.msra.mxu0 %v569
      %581 = vmatpush.bf16.msra.mxu0 %v568
      %582 = vmatpush.bf16.msra.mxu0 %v567
      %583 = vmatpush.bf16.msra.mxu0 %v566
      %584 = vmatpush.bf16.msra.mxu0 %v565
      %585 = vmatpush.bf16.msra.mxu0 %v564
      %586 = vmatpush.bf16.msra.mxu0 %v563
      %587 = vmatmul.bf16.gmra.mxu0 %v499
      %v588 = vpop.f32.mrf.mxu0
      %v589 = vadd.f32 0.0, %v588
      %v590 = vpop.f32.mrf.mxu0
      %v591 = vadd.f32 0.0, %v590
      %592 = vmatmul.bf16.gmra.mxu0 %v500
      %v593 = vpop.f32.mrf.mxu0
      %v594 = vadd.f32 0.0, %v593
      %v595 = vpop.f32.mrf.mxu0
      %v596 = vadd.f32 0.0, %v595
      %597 = vmatmul.bf16.gmra.mxu0 %v501
      %v598 = vpop.f32.mrf.mxu0
      %v599 = vadd.f32 0.0, %v598
      %v600 = vpop.f32.mrf.mxu0
      %v601 = vadd.f32 0.0, %v600
      %602 = vmatmul.bf16.gmra.mxu0 %v502
      %v603 = vpop.f32.mrf.mxu0
      %v604 = vadd.f32 0.0, %v603
      %v605 = vpop.f32.mrf.mxu0
      %v606 = vadd.f32 0.0, %v605
      %607 = vmatmul.bf16.gmra.mxu0 %v503
      %v608 = vpop.f32.mrf.mxu0
      %v609 = vadd.f32 0.0, %v608
      %v610 = vpop.f32.mrf.mxu0
      %v611 = vadd.f32 0.0, %v610
      %612 = vmatmul.bf16.gmra.mxu0 %v504
      %v613 = vpop.f32.mrf.mxu0
      %v614 = vadd.f32 0.0, %v613
      %v615 = vpop.f32.mrf.mxu0
      %v616 = vadd.f32 0.0, %v615
      %617 = vmatmul.bf16.gmra.mxu0 %v505
      %v618 = vpop.f32.mrf.mxu0
      %v619 = vadd.f32 0.0, %v618
      %v620 = vpop.f32.mrf.mxu0
      %v621 = vadd.f32 0.0, %v620
      %622 = vmatmul.bf16.gmra.mxu0 %v506
      %v623 = vpop.f32.mrf.mxu0
      %v624 = vadd.f32 0.0, %v623
      %v625 = vpop.f32.mrf.mxu0
      %v626 = vadd.f32 0.0, %v625
      %627 = vmatmul.bf16.gmra.mxu0 %v507
      %v628 = vpop.f32.mrf.mxu0
      %v629 = vadd.f32 0.0, %v628
      %v630 = vpop.f32.mrf.mxu0
      %v631 = vadd.f32 0.0, %v630
      %632 = vmatmul.bf16.gmra.mxu0 %v508
      %v633 = vpop.f32.mrf.mxu0
      %v634 = vadd.f32 0.0, %v633
      %v635 = vpop.f32.mrf.mxu0
      %v636 = vadd.f32 0.0, %v635
      %637 = vmatmul.bf16.gmra.mxu0 %v509
      %v638 = vpop.f32.mrf.mxu0
      %v639 = vadd.f32 0.0, %v638
      %v640 = vpop.f32.mrf.mxu0
      %v641 = vadd.f32 0.0, %v640
      %642 = vmatmul.bf16.gmra.mxu0 %v510
      %v643 = vpop.f32.mrf.mxu0
      %v644 = vadd.f32 0.0, %v643
      %v645 = vpop.f32.mrf.mxu0
      %v646 = vadd.f32 0.0, %v645
      %647 = vmatmul.bf16.gmra.mxu0 %v511
      %v648 = vpop.f32.mrf.mxu0
      %v649 = vadd.f32 0.0, %v648
      %v650 = vpop.f32.mrf.mxu0
      %v651 = vadd.f32 0.0, %v650
      %652 = vmatmul.bf16.gmra.mxu0 %v512
      %v653 = vpop.f32.mrf.mxu0
      %v654 = vadd.f32 0.0, %v653
      %v655 = vpop.f32.mrf.mxu0
      %v656 = vadd.f32 0.0, %v655
      %657 = vmatmul.bf16.gmra.mxu0 %v513
      %v658 = vpop.f32.mrf.mxu0
      %v659 = vadd.f32 0.0, %v658
      %v660 = vpop.f32.mrf.mxu0
      %v661 = vadd.f32 0.0, %v660
      %662 = vmatmul.bf16.gmra.mxu0 %v514
      %v663 = vpop.f32.mrf.mxu0
      %v664 = vadd.f32 0.0, %v663
      %v665 = vpop.f32.mrf.mxu0
      %v666 = vadd.f32 0.0, %v665
      %667 = vdwg.mxu0
      %v668 = vadd.f32 %v355, %v589
      %v669 = vadd.f32 %v356, %v591
      %v670 = vadd.f32 %v357, %v594
      %v671 = vadd.f32 %v358, %v596
      %v672 = vadd.f32 %v359, %v599
      %v673 = vadd.f32 %v360, %v601
      %v674 = vadd.f32 %v361, %v604
      %v675 = vadd.f32 %v362, %v606
      %v676 = vadd.f32 %v363, %v609
      %v677 = vadd.f32 %v364, %v611
      %v678 = vadd.f32 %v365, %v614
      %v679 = vadd.f32 %v366, %v616
      %v680 = vadd.f32 %v367, %v619
      %v681 = vadd.f32 %v368, %v621
      %v682 = vadd.f32 %v369, %v624
      %v683 = vadd.f32 %v370, %v626
      %v684 = vadd.f32 %v371, %v629
      %v685 = vadd.f32 %v372, %v631
      %v686 = vadd.f32 %v373, %v634
      %v687 = vadd.f32 %v374, %v636
      %v688 = vadd.f32 %v375, %v639
      %v689 = vadd.f32 %v376, %v641
      %v690 = vadd.f32 %v377, %v644
      %v691 = vadd.f32 %v378, %v646
      %v692 = vadd.f32 %v379, %v649
      %v693 = vadd.f32 %v380, %v651
      %v694 = vadd.f32 %v381, %v654
      %v695 = vadd.f32 %v382, %v656
      %v696 = vadd.f32 %v383, %v659
      %v697 = vadd.f32 %v384, %v661
      %v698 = vadd.f32 %v385, %v664
      %v699 = vadd.f32 %v386, %v666
      %700 = vst [vmem:[#allocation2] sm:$0xff] %v668
      %701 = vst [vmem:[#allocation2 + $0x8] sm:$0xff] %v669
      %702 = vst [vmem:[#allocation2 + $0x10] sm:$0xff] %v670
      %703 = vst [vmem:[#allocation2 + $0x18] sm:$0xff] %v671
      %704 = vst [vmem:[#allocation2 + $0x20] sm:$0xff] %v672
      %705 = vst [vmem:[#allocation2 + $0x28] sm:$0xff] %v673
      %706 = vst [vmem:[#allocation2 + $0x30] sm:$0xff] %v674
      %707 = vst [vmem:[#allocation2 + $0x38] sm:$0xff] %v675
      %708 = vst [vmem:[#allocation2 + $0x40] sm:$0xff] %v676
      %709 = vst [vmem:[#allocation2 + $0x48] sm:$0xff] %v677
      %710 = vst [vmem:[#allocation2 + $0x50] sm:$0xff] %v678
      %711 = vst [vmem:[#allocation2 + $0x58] sm:$0xff] %v679
      %712 = vst [vmem:[#allocation2 + $0x60] sm:$0xff] %v680
      %713 = vst [vmem:[#allocation2 + $0x68] sm:$0xff] %v681
      %714 = vst [vmem:[#allocation2 + $0x70] sm:$0xff] %v682
      %715 = vst [vmem:[#allocation2 + $0x78] sm:$0xff] %v683
      %716 = vst [vmem:[#allocation2 + $0x80] sm:$0xff] %v684
      %717 = vst [vmem:[#allocation2 + $0x88] sm:$0xff] %v685
      %718 = vst [vmem:[#allocation2 + $0x90] sm:$0xff] %v686
      %719 = vst [vmem:[#allocation2 + $0x98] sm:$0xff] %v687
      %720 = vst [vmem:[#allocation2 + $0xa0] sm:$0xff] %v688
      %721 = vst [vmem:[#allocation2 + $0xa8] sm:$0xff] %v689
      %722 = vst [vmem:[#allocation2 + $0xb0] sm:$0xff] %v690
      %723 = vst [vmem:[#allocation2 + $0xb8] sm:$0xff] %v691
      %724 = vst [vmem:[#allocation2 + $0xc0] sm:$0xff] %v692
      %725 = vst [vmem:[#allocation2 + $0xc8] sm:$0xff] %v693
      %726 = vst [vmem:[#allocation2 + $0xd0] sm:$0xff] %v694
      %727 = vst [vmem:[#allocation2 + $0xd8] sm:$0xff] %v695
      %728 = vst [vmem:[#allocation2 + $0xe0] sm:$0xff] %v696
      %729 = vst [vmem:[#allocation2 + $0xe8] sm:$0xff] %v697
      %730 = vst [vmem:[#allocation2 + $0xf0] sm:$0xff] %v698
      %731 = vst [vmem:[#allocation2 + $0xf8] sm:$0xff] %v699
      // Predicated region
      $region41: #{_lambda_.12} parent=35 // pred_check
        %p732 = pneg %p319
      $region42: #{_lambda_.12} parent=35 // pred_check_branch
        %734 = sbr.rel (%p732) target = $region44
      $region43: #{_lambda_.12} parent=35 // pred_region
        %v735 = vld [vmem:[#allocation2] sm:$0xff]
        %v736 = vld [vmem:[#allocation2 + $0x8] sm:$0xff]
        %v737 = vld [vmem:[#allocation2 + $0x10] sm:$0xff]
        %v738 = vld [vmem:[#allocation2 + $0x18] sm:$0xff]
        %v739 = vld [vmem:[#allocation2 + $0x20] sm:$0xff]
        %v740 = vld [vmem:[#allocation2 + $0x28] sm:$0xff]
        %v741 = vld [vmem:[#allocation2 + $0x30] sm:$0xff]
        %v742 = vld [vmem:[#allocation2 + $0x38] sm:$0xff]
        %v743 = vld [vmem:[#allocation2 + $0x40] sm:$0xff]
        %v744 = vld [vmem:[#allocation2 + $0x48] sm:$0xff]
        %v745 = vld [vmem:[#allocation2 + $0x50] sm:$0xff]
        %v746 = vld [vmem:[#allocation2 + $0x58] sm:$0xff]
        %v747 = vld [vmem:[#allocation2 + $0x60] sm:$0xff]
        %v748 = vld [vmem:[#allocation2 + $0x68] sm:$0xff]
        %v749 = vld [vmem:[#allocation2 + $0x70] sm:$0xff]
        %v750 = vld [vmem:[#allocation2 + $0x78] sm:$0xff]
        %v751 = vld [vmem:[#allocation2 + $0x80] sm:$0xff]
        %v752 = vld [vmem:[#allocation2 + $0x88] sm:$0xff]
        %v753 = vld [vmem:[#allocation2 + $0x90] sm:$0xff]
        %v754 = vld [vmem:[#allocation2 + $0x98] sm:$0xff]
        %v755 = vld [vmem:[#allocation2 + $0xa0] sm:$0xff]
        %v756 = vld [vmem:[#allocation2 + $0xa8] sm:$0xff]
        %v757 = vld [vmem:[#allocation2 + $0xb0] sm:$0xff]
        %v758 = vld [vmem:[#allocation2 + $0xb8] sm:$0xff]
        %v759 = vld [vmem:[#allocation2 + $0xc0] sm:$0xff]
        %v760 = vld [vmem:[#allocation2 + $0xc8] sm:$0xff]
        %v761 = vld [vmem:[#allocation2 + $0xd0] sm:$0xff]
        %v762 = vld [vmem:[#allocation2 + $0xd8] sm:$0xff]
        %v763 = vld [vmem:[#allocation2 + $0xe0] sm:$0xff]
        %v764 = vld [vmem:[#allocation2 + $0xe8] sm:$0xff]
        %v765 = vld [vmem:[#allocation2 + $0xf0] sm:$0xff]
        %v766 = vld [vmem:[#allocation2 + $0xf8] sm:$0xff]
        %v767 = vld [vmem:[%s300] sm:$0x1]
        %v769 = vperm.slane %v767, 0
        %v771 = vadd.f32 %v735, %v769
        %v772 = vadd.f32 %v736, %v769
        %v773 = vadd.f32 %v737, %v769
        %v774 = vadd.f32 %v738, %v769
        %v775 = vadd.f32 %v739, %v769
        %v776 = vadd.f32 %v740, %v769
        %v777 = vadd.f32 %v741, %v769
        %v778 = vadd.f32 %v742, %v769
        %v779 = vadd.f32 %v743, %v769
        %v780 = vadd.f32 %v744, %v769
        %v781 = vadd.f32 %v745, %v769
        %v782 = vadd.f32 %v746, %v769
        %v783 = vadd.f32 %v747, %v769
        %v784 = vadd.f32 %v748, %v769
        %v785 = vadd.f32 %v749, %v769
        %v786 = vadd.f32 %v750, %v769
        %v787 = vadd.f32 %v751, %v769
        %v788 = vadd.f32 %v752, %v769
        %v789 = vadd.f32 %v753, %v769
        %v790 = vadd.f32 %v754, %v769
        %v791 = vadd.f32 %v755, %v769
        %v792 = vadd.f32 %v756, %v769
        %v793 = vadd.f32 %v757, %v769
        %v794 = vadd.f32 %v758, %v769
        %v795 = vadd.f32 %v759, %v769
        %v796 = vadd.f32 %v760, %v769
        %v797 = vadd.f32 %v761, %v769
        %v798 = vadd.f32 %v762, %v769
        %v799 = vadd.f32 %v763, %v769
        %v800 = vadd.f32 %v764, %v769
        %v801 = vadd.f32 %v765, %v769
        %v802 = vadd.f32 %v766, %v769
        %v803 = vld [vmem:[%s308] sm:$0xff]
        %v804 = vld [vmem:[%s308 + $0x8] sm:$0xff]
        %v805 = vld [vmem:[%s308 + $0x10] sm:$0xff]
        %v806 = vld [vmem:[%s308 + $0x18] sm:$0xff]
        %v807 = vld [vmem:[%s308 + $0x20] sm:$0xff]
        %v808 = vld [vmem:[%s308 + $0x28] sm:$0xff]
        %v809 = vld [vmem:[%s308 + $0x30] sm:$0xff]
        %v810 = vld [vmem:[%s308 + $0x38] sm:$0xff]
        %v811 = vld [vmem:[%s308 + $0x40] sm:$0xff]
        %v812 = vld [vmem:[%s308 + $0x48] sm:$0xff]
        %v813 = vld [vmem:[%s308 + $0x50] sm:$0xff]
        %v814 = vld [vmem:[%s308 + $0x58] sm:$0xff]
        %v815 = vld [vmem:[%s308 + $0x60] sm:$0xff]
        %v816 = vld [vmem:[%s308 + $0x68] sm:$0xff]
        %v817 = vld [vmem:[%s308 + $0x70] sm:$0xff]
        %v818 = vld [vmem:[%s308 + $0x78] sm:$0xff]
        %v819 = vld [vmem:[%s308 + $0x80] sm:$0xff]
        %v820 = vld [vmem:[%s308 + $0x88] sm:$0xff]
        %v821 = vld [vmem:[%s308 + $0x90] sm:$0xff]
        %v822 = vld [vmem:[%s308 + $0x98] sm:$0xff]
        %v823 = vld [vmem:[%s308 + $0xa0] sm:$0xff]
        %v824 = vld [vmem:[%s308 + $0xa8] sm:$0xff]
        %v825 = vld [vmem:[%s308 + $0xb0] sm:$0xff]
        %v826 = vld [vmem:[%s308 + $0xb8] sm:$0xff]
        %v827 = vld [vmem:[%s308 + $0xc0] sm:$0xff]
        %v828 = vld [vmem:[%s308 + $0xc8] sm:$0xff]
        %v829 = vld [vmem:[%s308 + $0xd0] sm:$0xff]
        %v830 = vld [vmem:[%s308 + $0xd8] sm:$0xff]
        %v831 = vld [vmem:[%s308 + $0xe0] sm:$0xff]
        %v832 = vld [vmem:[%s308 + $0xe8] sm:$0xff]
        %v833 = vld [vmem:[%s308 + $0xf0] sm:$0xff]
        %v834 = vld [vmem:[%s308 + $0xf8] sm:$0xff]
        %v835 = vadd.f32 %v771, %v803
        %v836 = vadd.f32 %v772, %v804
        %v837 = vadd.f32 %v773, %v805
        %v838 = vadd.f32 %v774, %v806
        %v839 = vadd.f32 %v775, %v807
        %v840 = vadd.f32 %v776, %v808
        %v841 = vadd.f32 %v777, %v809
        %v842 = vadd.f32 %v778, %v810
        %v843 = vadd.f32 %v779, %v811
        %v844 = vadd.f32 %v780, %v812
        %v845 = vadd.f32 %v781, %v813
        %v846 = vadd.f32 %v782, %v814
        %v847 = vadd.f32 %v783, %v815
        %v848 = vadd.f32 %v784, %v816
        %v849 = vadd.f32 %v785, %v817
        %v850 = vadd.f32 %v786, %v818
        %v851 = vadd.f32 %v787, %v819
        %v852 = vadd.f32 %v788, %v820
        %v853 = vadd.f32 %v789, %v821
        %v854 = vadd.f32 %v790, %v822
        %v855 = vadd.f32 %v791, %v823
        %v856 = vadd.f32 %v792, %v824
        %v857 = vadd.f32 %v793, %v825
        %v858 = vadd.f32 %v794, %v826
        %v859 = vadd.f32 %v795, %v827
        %v860 = vadd.f32 %v796, %v828
        %v861 = vadd.f32 %v797, %v829
        %v862 = vadd.f32 %v798, %v830
        %v863 = vadd.f32 %v799, %v831
        %v864 = vadd.f32 %v800, %v832
        %v865 = vadd.f32 %v801, %v833
        %v866 = vadd.f32 %v802, %v834
        %867 = vst [vmem:[%s317] sm:$0xff] %v835
        %868 = vst [vmem:[%s317 + $0x8] sm:$0xff] %v836
        %869 = vst [vmem:[%s317 + $0x10] sm:$0xff] %v837
        %870 = vst [vmem:[%s317 + $0x18] sm:$0xff] %v838
        %871 = vst [vmem:[%s317 + $0x20] sm:$0xff] %v839
        %872 = vst [vmem:[%s317 + $0x28] sm:$0xff] %v840
        %873 = vst [vmem:[%s317 + $0x30] sm:$0xff] %v841
        %874 = vst [vmem:[%s317 + $0x38] sm:$0xff] %v842
        %875 = vst [vmem:[%s317 + $0x40] sm:$0xff] %v843
        %876 = vst [vmem:[%s317 + $0x48] sm:$0xff] %v844
        %877 = vst [vmem:[%s317 + $0x50] sm:$0xff] %v845
        %878 = vst [vmem:[%s317 + $0x58] sm:$0xff] %v846
        %879 = vst [vmem:[%s317 + $0x60] sm:$0xff] %v847
        %880 = vst [vmem:[%s317 + $0x68] sm:$0xff] %v848
        %881 = vst [vmem:[%s317 + $0x70] sm:$0xff] %v849
        %882 = vst [vmem:[%s317 + $0x78] sm:$0xff] %v850
        %883 = vst [vmem:[%s317 + $0x80] sm:$0xff] %v851
        %884 = vst [vmem:[%s317 + $0x88] sm:$0xff] %v852
        %885 = vst [vmem:[%s317 + $0x90] sm:$0xff] %v853
        %886 = vst [vmem:[%s317 + $0x98] sm:$0xff] %v854
        %887 = vst [vmem:[%s317 + $0xa0] sm:$0xff] %v855
        %888 = vst [vmem:[%s317 + $0xa8] sm:$0xff] %v856
        %889 = vst [vmem:[%s317 + $0xb0] sm:$0xff] %v857
        %890 = vst [vmem:[%s317 + $0xb8] sm:$0xff] %v858
        %891 = vst [vmem:[%s317 + $0xc0] sm:$0xff] %v859
        %892 = vst [vmem:[%s317 + $0xc8] sm:$0xff] %v860
        %893 = vst [vmem:[%s317 + $0xd0] sm:$0xff] %v861
        %894 = vst [vmem:[%s317 + $0xd8] sm:$0xff] %v862
        %895 = vst [vmem:[%s317 + $0xe0] sm:$0xff] %v863
        %896 = vst [vmem:[%s317 + $0xe8] sm:$0xff] %v864
        %897 = vst [vmem:[%s317 + $0xf0] sm:$0xff] %v865
        %898 = vst [vmem:[%s317 + $0xf8] sm:$0xff] %v866
      $region44: #{_lambda_.12} parent=35 // pred_fallthru
        _
      %s899 = smul.u32 32, %s20
      %p900 = scmp.lt.s32.totalorder %s899, 63
      %s901 = scalar_select %p900, %s899, 63
      %p902 = scmp.lt.s32.totalorder %s21, 0
      %s903 = scalar_select %p902, %s21, 0
      %s904 = sadd.s32 %s903, %s901
      %s905 = smul.addr %s904, 8
      %s906 = scalar_lea.vmem %s4, %s905
      // Predicated region
      $region45: #{_lambda_.12} parent=35 // pred_check
        %p907 = pneg %p164
      $region46: #{_lambda_.12} parent=35 // pred_check_branch
        %909 = sbr.rel (%p907) target = $region48
      $region47: #{_lambda_.12} parent=35 // pred_region
        %s910 = smul.u32 32, %s20
      $region48: #{_lambda_.12} parent=35 // pred_fallthru
        _
    $region36: #{_lambda_.12} parent=5 // pred_fallthru
      _
    %p911 = scmp.le.s32.totalorder 2, %s10
    // Predicated region
    $region49: #{_lambda_.12} parent=5 // pred_check
      %p912 = pneg %p911
    $region50: #{_lambda_.12} parent=5 // pred_check_branch
      %914 = sbr.rel (%p912) target = $region52
    $region51: #{_lambda_.12} parent=5 // pred_region
      %s915 = ssub.s32 %s10, 2
      // Predicated region
      $region53: #{_lambda_.12} parent=51 // pred_check
        %p916 = pneg %p170
      $region54: #{_lambda_.12} parent=51 // pred_check_branch
        %918 = sbr.rel (%p916) target = $region56
      $region55: #{_lambda_.12} parent=51 // pred_region
        %s919 = smul.u32 32, %s23
        %p920 = scmp.lt.s32.totalorder %s919, 63
        %s921 = scalar_select %p920, %s919, 63
        %p922 = scmp.lt.s32.totalorder %s24, 0
        %s923 = scalar_select %p922, %s24, 0
        %s924 = sadd.s32 %s923, %s921
        %s925 = smul.addr %s924, 8
        %s926 = scalar_lea.vmem %s4, %s925
      $region56: #{_lambda_.12} parent=51 // pred_fallthru
        _
    $region52: #{_lambda_.12} parent=5 // pred_fallthru
      _
  $region6: #{_lambda_.12} parent=0 // loop_footer
    %s14 = sadd.s32 1, %s10
  $region7: #{_lambda_.12} parent=0 // loop_footer_branch
    %9 = sbr.rel target = $region3
  $region8: #{_lambda_.12} parent=0 // loop_exit
    _

// kernel: _lambda_.13
$region0: #{_lambda_.13}
  #allocation0 [shape = 'u32[]', space=smem, size = 0x4, offset = 0x4, fixed_abs, tag = 'smem constant byte address 0x4 - core index']
  #allocation1 [shape = 'u32[72,128]{1,0:T(1,128)}', space=vmem, size = 0x9000, scoped, tag = 'internal scratch']
  #allocation2 [shape = 'f32[256,128]{1,0:T(8,128)}', space=vmem, size = 0x20000, scoped, tag = 'scratch operand']
  %s0 = inlined_call_operand.vmem [shape: bf16[256,128], index: 0, kind: input, shape index: {}]
  %s1 = inlined_call_operand.vmem [shape: bf16[128,128], index: 1, kind: input, shape index: {}]
  %s2 = inlined_call_operand.vmem [shape: f32[1,128], index: 2, kind: input, shape index: {}]
  %s3 = inlined_call_operand.vmem [shape: f32[256,128], index: 3, kind: output, shape index: {}]
  %s4 = sld [smem:[#allocation0]]
  $region30: #{_lambda_.13} parent=0
    _
  %s6 = ssub.s32 1, %s4
  %s7 = scalar_select 0, %s6, %s4
  // Predicated region
  $region2: #{_lambda_.13} parent=0 // pred_check
    _
  $region3: #{_lambda_.13} parent=0 // pred_check_branch
    %9 = sbr.rel (0) target = $region5
  $region4: #{_lambda_.13} parent=0 // pred_region
    _
  $region5: #{_lambda_.13} parent=0 // pred_fallthru
    _
  // Predicated region
  $region6: #{_lambda_.13} parent=0 // pred_check
    _
  $region7: #{_lambda_.13} parent=0 // pred_check_branch
    %11 = sbr.rel (0) target = $region9
  $region8: #{_lambda_.13} parent=0 // pred_region
    _
  $region9: #{_lambda_.13} parent=0 // pred_fallthru
    _
  // Predicated region
  $region10: #{_lambda_.13} parent=0 // pred_check
    _
  $region11: #{_lambda_.13} parent=0 // pred_check_branch
    %13 = sbr.rel (0) target = $region13
  $region12: #{_lambda_.13} parent=0 // pred_region
    _
  $region13: #{_lambda_.13} parent=0 // pred_fallthru
    _
  %p14 = scmp.eq.s32.totalorder 0, 0
  // Predicated region
  $region14: #{_lambda_.13} parent=0 // pred_check
    %p15 = pneg %p14
  $region15: #{_lambda_.13} parent=0 // pred_check_branch
    %17 = sbr.rel (%p15) target = $region17
  $region16: #{_lambda_.13} parent=0 // pred_region
    %18 = vst [vmem:[#allocation2] sm:$0xff] 0.0
    %19 = vst [vmem:[#allocation2 + $0x8] sm:$0xff] 0.0
    %20 = vst [vmem:[#allocation2 + $0x10] sm:$0xff] 0.0
    %21 = vst [vmem:[#allocation2 + $0x18] sm:$0xff] 0.0
    %22 = vst [vmem:[#allocation2 + $0x20] sm:$0xff] 0.0
    %23 = vst [vmem:[#allocation2 + $0x28] sm:$0xff] 0.0
    %24 = vst [vmem:[#allocation2 + $0x30] sm:$0xff] 0.0
    %25 = vst [vmem:[#allocation2 + $0x38] sm:$0xff] 0.0
    %26 = vst [vmem:[#allocation2 + $0x40] sm:$0xff] 0.0
    %27 = vst [vmem:[#allocation2 + $0x48] sm:$0xff] 0.0
    %28 = vst [vmem:[#allocation2 + $0x50] sm:$0xff] 0.0
    %29 = vst [vmem:[#allocation2 + $0x58] sm:$0xff] 0.0
    %30 = vst [vmem:[#allocation2 + $0x60] sm:$0xff] 0.0
    %31 = vst [vmem:[#allocation2 + $0x68] sm:$0xff] 0.0
    %32 = vst [vmem:[#allocation2 + $0x70] sm:$0xff] 0.0
    %33 = vst [vmem:[#allocation2 + $0x78] sm:$0xff] 0.0
    %34 = vst [vmem:[#allocation2 + $0x80] sm:$0xff] 0.0
    %35 = vst [vmem:[#allocation2 + $0x88] sm:$0xff] 0.0
    %36 = vst [vmem:[#allocation2 + $0x90] sm:$0xff] 0.0
    %37 = vst [vmem:[#allocation2 + $0x98] sm:$0xff] 0.0
    %38 = vst [vmem:[#allocation2 + $0xa0] sm:$0xff] 0.0
    %39 = vst [vmem:[#allocation2 + $0xa8] sm:$0xff] 0.0
    %40 = vst [vmem:[#allocation2 + $0xb0] sm:$0xff] 0.0
    %41 = vst [vmem:[#allocation2 + $0xb8] sm:$0xff] 0.0
    %42 = vst [vmem:[#allocation2 + $0xc0] sm:$0xff] 0.0
    %43 = vst [vmem:[#allocation2 + $0xc8] sm:$0xff] 0.0
    %44 = vst [vmem:[#allocation2 + $0xd0] sm:$0xff] 0.0
    %45 = vst [vmem:[#allocation2 + $0xd8] sm:$0xff] 0.0
    %46 = vst [vmem:[#allocation2 + $0xe0] sm:$0xff] 0.0
    %47 = vst [vmem:[#allocation2 + $0xe8] sm:$0xff] 0.0
    %48 = vst [vmem:[#allocation2 + $0xf0] sm:$0xff] 0.0
    %49 = vst [vmem:[#allocation2 + $0xf8] sm:$0xff] 0.0
  $region17: #{_lambda_.13} parent=0 // pred_fallthru
    _
  %v50 = vld [vmem:[#allocation2] sm:$0xff]
  %v51 = vld [vmem:[#allocation2 + $0x8] sm:$0xff]
  %v52 = vld [vmem:[#allocation2 + $0x10] sm:$0xff]
  %v53 = vld [vmem:[#allocation2 + $0x18] sm:$0xff]
  %v54 = vld [vmem:[#allocation2 + $0x20] sm:$0xff]
  %v55 = vld [vmem:[#allocation2 + $0x28] sm:$0xff]
  %v56 = vld [vmem:[#allocation2 + $0x30] sm:$0xff]
  %v57 = vld [vmem:[#allocation2 + $0x38] sm:$0xff]
  %v58 = vld [vmem:[#allocation2 + $0x40] sm:$0xff]
  %v59 = vld [vmem:[#allocation2 + $0x48] sm:$0xff]
  %v60 = vld [vmem:[#allocation2 + $0x50] sm:$0xff]
  %v61 = vld [vmem:[#allocation2 + $0x58] sm:$0xff]
  %v62 = vld [vmem:[#allocation2 + $0x60] sm:$0xff]
  %v63 = vld [vmem:[#allocation2 + $0x68] sm:$0xff]
  %v64 = vld [vmem:[#allocation2 + $0x70] sm:$0xff]
  %v65 = vld [vmem:[#allocation2 + $0x78] sm:$0xff]
  %v66 = vld [vmem:[#allocation2 + $0x80] sm:$0xff]
  %v67 = vld [vmem:[#allocation2 + $0x88] sm:$0xff]
  %v68 = vld [vmem:[#allocation2 + $0x90] sm:$0xff]
  %v69 = vld [vmem:[#allocation2 + $0x98] sm:$0xff]
  %v70 = vld [vmem:[#allocation2 + $0xa0] sm:$0xff]
  %v71 = vld [vmem:[#allocation2 + $0xa8] sm:$0xff]
  %v72 = vld [vmem:[#allocation2 + $0xb0] sm:$0xff]
  %v73 = vld [vmem:[#allocation2 + $0xb8] sm:$0xff]
  %v74 = vld [vmem:[#allocation2 + $0xc0] sm:$0xff]
  %v75 = vld [vmem:[#allocation2 + $0xc8] sm:$0xff]
  %v76 = vld [vmem:[#allocation2 + $0xd0] sm:$0xff]
  %v77 = vld [vmem:[#allocation2 + $0xd8] sm:$0xff]
  %v78 = vld [vmem:[#allocation2 + $0xe0] sm:$0xff]
  %v79 = vld [vmem:[#allocation2 + $0xe8] sm:$0xff]
  %v80 = vld [vmem:[#allocation2 + $0xf0] sm:$0xff]
  %v81 = vld [vmem:[#allocation2 + $0xf8] sm:$0xff]
  %v82 = vld [vmem:[%s0] sm:$0xf]
  %v83 = vld [vmem:[%s0 + $0x4] sm:$0xf]
  %v84 = vld [vmem:[%s0 + $0x8] sm:$0xf]
  %v85 = vld [vmem:[%s0 + $0xc] sm:$0xf]
  %v86 = vld [vmem:[%s0 + $0x10] sm:$0xf]
  %v87 = vld [vmem:[%s0 + $0x14] sm:$0xf]
  %v88 = vld [vmem:[%s0 + $0x18] sm:$0xf]
  %v89 = vld [vmem:[%s0 + $0x1c] sm:$0xf]
  %v90 = vld [vmem:[%s0 + $0x20] sm:$0xf]
  %v91 = vld [vmem:[%s0 + $0x24] sm:$0xf]
  %v92 = vld [vmem:[%s0 + $0x28] sm:$0xf]
  %v93 = vld [vmem:[%s0 + $0x2c] sm:$0xf]
  %v94 = vld [vmem:[%s0 + $0x30] sm:$0xf]
  %v95 = vld [vmem:[%s0 + $0x34] sm:$0xf]
  %v96 = vld [vmem:[%s0 + $0x38] sm:$0xf]
  %v97 = vld [vmem:[%s0 + $0x3c] sm:$0xf]
  %v98 = vld [vmem:[%s0 + $0x40] sm:$0xf]
  %v99 = vld [vmem:[%s0 + $0x44] sm:$0xf]
  %v100 = vld [vmem:[%s0 + $0x48] sm:$0xf]
  %v101 = vld [vmem:[%s0 + $0x4c] sm:$0xf]
  %v102 = vld [vmem:[%s0 + $0x50] sm:$0xf]
  %v103 = vld [vmem:[%s0 + $0x54] sm:$0xf]
  %v104 = vld [vmem:[%s0 + $0x58] sm:$0xf]
  %v105 = vld [vmem:[%s0 + $0x5c] sm:$0xf]
  %v106 = vld [vmem:[%s0 + $0x60] sm:$0xf]
  %v107 = vld [vmem:[%s0 + $0x64] sm:$0xf]
  %v108 = vld [vmem:[%s0 + $0x68] sm:$0xf]
  %v109 = vld [vmem:[%s0 + $0x6c] sm:$0xf]
  %v110 = vld [vmem:[%s0 + $0x70] sm:$0xf]
  %v111 = vld [vmem:[%s0 + $0x74] sm:$0xf]
  %v112 = vld [vmem:[%s0 + $0x78] sm:$0xf]
  %v113 = vld [vmem:[%s0 + $0x7c] sm:$0xf]
  %v114 = vld [vmem:[%s1] sm:$0xf]
  %v115 = vld [vmem:[%s1 + $0x4] sm:$0xf]
  %v116 = vld [vmem:[%s1 + $0x8] sm:$0xf]
  %v117 = vld [vmem:[%s1 + $0xc] sm:$0xf]
  %v118 = vld [vmem:[%s1 + $0x10] sm:$0xf]
  %v119 = vld [vmem:[%s1 + $0x14] sm:$0xf]
  %v120 = vld [vmem:[%s1 + $0x18] sm:$0xf]
  %v121 = vld [vmem:[%s1 + $0x1c] sm:$0xf]
  %v122 = vld [vmem:[%s1 + $0x20] sm:$0xf]
  %v123 = vld [vmem:[%s1 + $0x24] sm:$0xf]
  %v124 = vld [vmem:[%s1 + $0x28] sm:$0xf]
  %v125 = vld [vmem:[%s1 + $0x2c] sm:$0xf]
  %v126 = vld [vmem:[%s1 + $0x30] sm:$0xf]
  %v127 = vld [vmem:[%s1 + $0x34] sm:$0xf]
  %v128 = vld [vmem:[%s1 + $0x38] sm:$0xf]
  %v129 = vld [vmem:[%s1 + $0x3c] sm:$0xf]
  %v162 = vunpack.c.l.b16 %v82
  %v163 = vunpack.c.l.b16 %v83
  %v164 = vunpack.c.l.b16 %v84
  %v165 = vunpack.c.l.b16 %v85
  %v166 = vunpack.c.l.b16 %v86
  %v167 = vunpack.c.l.b16 %v87
  %v168 = vunpack.c.l.b16 %v88
  %v169 = vunpack.c.l.b16 %v89
  %v170 = vunpack.c.l.b16 %v90
  %v171 = vunpack.c.l.b16 %v91
  %v172 = vunpack.c.l.b16 %v92
  %v173 = vunpack.c.l.b16 %v93
  %v174 = vunpack.c.l.b16 %v94
  %v175 = vunpack.c.l.b16 %v95
  %v176 = vunpack.c.l.b16 %v96
  %v177 = vunpack.c.l.b16 %v97
  %v178 = vunpack.c.l.b16 %v98
  %v179 = vunpack.c.l.b16 %v99
  %v180 = vunpack.c.l.b16 %v100
  %v181 = vunpack.c.l.b16 %v101
  %v182 = vunpack.c.l.b16 %v102
  %v183 = vunpack.c.l.b16 %v103
  %v184 = vunpack.c.l.b16 %v104
  %v185 = vunpack.c.l.b16 %v105
  %v186 = vunpack.c.l.b16 %v106
  %v187 = vunpack.c.l.b16 %v107
  %v188 = vunpack.c.l.b16 %v108
  %v189 = vunpack.c.l.b16 %v109
  %v190 = vunpack.c.l.b16 %v110
  %v191 = vunpack.c.l.b16 %v111
  %v192 = vunpack.c.l.b16 %v112
  %v193 = vunpack.c.l.b16 %v113
  %v194 = vpack.c.b16 %v163, %v162
  %v195 = vpack.c.b16 %v165, %v164
  %v196 = vpack.c.b16 %v167, %v166
  %v197 = vpack.c.b16 %v169, %v168
  %v198 = vpack.c.b16 %v171, %v170
  %v199 = vpack.c.b16 %v173, %v172
  %v200 = vpack.c.b16 %v175, %v174
  %v201 = vpack.c.b16 %v177, %v176
  %v202 = vpack.c.b16 %v179, %v178
  %v203 = vpack.c.b16 %v181, %v180
  %v204 = vpack.c.b16 %v183, %v182
  %v205 = vpack.c.b16 %v185, %v184
  %v206 = vpack.c.b16 %v187, %v186
  %v207 = vpack.c.b16 %v189, %v188
  %v208 = vpack.c.b16 %v191, %v190
  %v209 = vpack.c.b16 %v193, %v192
  %v242 = vunpack.c.l.b16 %v114
  %v243 = vunpack.c.l.b16 %v115
  %v244 = vunpack.c.l.b16 %v116
  %v245 = vunpack.c.l.b16 %v117
  %v246 = vunpack.c.l.b16 %v118
  %v247 = vunpack.c.l.b16 %v119
  %v248 = vunpack.c.l.b16 %v120
  %v249 = vunpack.c.l.b16 %v121
  %v250 = vunpack.c.l.b16 %v122
  %v251 = vunpack.c.l.b16 %v123
  %v252 = vunpack.c.l.b16 %v124
  %v253 = vunpack.c.l.b16 %v125
  %v254 = vunpack.c.l.b16 %v126
  %v255 = vunpack.c.l.b16 %v127
  %v256 = vunpack.c.l.b16 %v128
  %v257 = vunpack.c.l.b16 %v129
  %v258 = vpack.c.b16 %v243, %v242
  %v259 = vpack.c.b16 %v245, %v244
  %v260 = vpack.c.b16 %v247, %v246
  %v261 = vpack.c.b16 %v249, %v248
  %v262 = vpack.c.b16 %v251, %v250
  %v263 = vpack.c.b16 %v253, %v252
  %v264 = vpack.c.b16 %v255, %v254
  %v265 = vpack.c.b16 %v257, %v256
  %274 = vmatpush.bf16.msra.mxu0 %v265
  %275 = vmatpush.bf16.msra.mxu0 %v264
  %276 = vmatpush.bf16.msra.mxu0 %v263
  %277 = vmatpush.bf16.msra.mxu0 %v262
  %278 = vmatpush.bf16.msra.mxu0 %v261
  %279 = vmatpush.bf16.msra.mxu0 %v260
  %280 = vmatpush.bf16.msra.mxu0 %v259
  %281 = vmatpush.bf16.msra.mxu0 %v258
  %282 = vmatmul.bf16.gmra.mxu0 %v194
  %v283 = vpop.f32.mrf.mxu0
  %v284 = vadd.f32 0.0, %v283
  %v285 = vpop.f32.mrf.mxu0
  %v286 = vadd.f32 0.0, %v285
  %287 = vmatmul.bf16.gmra.mxu0 %v195
  %v288 = vpop.f32.mrf.mxu0
  %v289 = vadd.f32 0.0, %v288
  %v290 = vpop.f32.mrf.mxu0
  %v291 = vadd.f32 0.0, %v290
  %292 = vmatmul.bf16.gmra.mxu0 %v196
  %v293 = vpop.f32.mrf.mxu0
  %v294 = vadd.f32 0.0, %v293
  %v295 = vpop.f32.mrf.mxu0
  %v296 = vadd.f32 0.0, %v295
  %297 = vmatmul.bf16.gmra.mxu0 %v197
  %v298 = vpop.f32.mrf.mxu0
  %v299 = vadd.f32 0.0, %v298
  %v300 = vpop.f32.mrf.mxu0
  %v301 = vadd.f32 0.0, %v300
  %302 = vmatmul.bf16.gmra.mxu0 %v198
  %v303 = vpop.f32.mrf.mxu0
  %v304 = vadd.f32 0.0, %v303
  %v305 = vpop.f32.mrf.mxu0
  %v306 = vadd.f32 0.0, %v305
  %307 = vmatmul.bf16.gmra.mxu0 %v199
  %v308 = vpop.f32.mrf.mxu0
  %v309 = vadd.f32 0.0, %v308
  %v310 = vpop.f32.mrf.mxu0
  %v311 = vadd.f32 0.0, %v310
  %312 = vmatmul.bf16.gmra.mxu0 %v200
  %v313 = vpop.f32.mrf.mxu0
  %v314 = vadd.f32 0.0, %v313
  %v315 = vpop.f32.mrf.mxu0
  %v316 = vadd.f32 0.0, %v315
  %317 = vmatmul.bf16.gmra.mxu0 %v201
  %v318 = vpop.f32.mrf.mxu0
  %v319 = vadd.f32 0.0, %v318
  %v320 = vpop.f32.mrf.mxu0
  %v321 = vadd.f32 0.0, %v320
  %322 = vmatmul.bf16.gmra.mxu0 %v202
  %v323 = vpop.f32.mrf.mxu0
  %v324 = vadd.f32 0.0, %v323
  %v325 = vpop.f32.mrf.mxu0
  %v326 = vadd.f32 0.0, %v325
  %327 = vmatmul.bf16.gmra.mxu0 %v203
  %v328 = vpop.f32.mrf.mxu0
  %v329 = vadd.f32 0.0, %v328
  %v330 = vpop.f32.mrf.mxu0
  %v331 = vadd.f32 0.0, %v330
  %332 = vmatmul.bf16.gmra.mxu0 %v204
  %v333 = vpop.f32.mrf.mxu0
  %v334 = vadd.f32 0.0, %v333
  %v335 = vpop.f32.mrf.mxu0
  %v336 = vadd.f32 0.0, %v335
  %337 = vmatmul.bf16.gmra.mxu0 %v205
  %v338 = vpop.f32.mrf.mxu0
  %v339 = vadd.f32 0.0, %v338
  %v340 = vpop.f32.mrf.mxu0
  %v341 = vadd.f32 0.0, %v340
  %342 = vmatmul.bf16.gmra.mxu0 %v206
  %v343 = vpop.f32.mrf.mxu0
  %v344 = vadd.f32 0.0, %v343
  %v345 = vpop.f32.mrf.mxu0
  %v346 = vadd.f32 0.0, %v345
  %347 = vmatmul.bf16.gmra.mxu0 %v207
  %v348 = vpop.f32.mrf.mxu0
  %v349 = vadd.f32 0.0, %v348
  %v350 = vpop.f32.mrf.mxu0
  %v351 = vadd.f32 0.0, %v350
  %352 = vmatmul.bf16.gmra.mxu0 %v208
  %v353 = vpop.f32.mrf.mxu0
  %v354 = vadd.f32 0.0, %v353
  %v355 = vpop.f32.mrf.mxu0
  %v356 = vadd.f32 0.0, %v355
  %357 = vmatmul.bf16.gmra.mxu0 %v209
  %v358 = vpop.f32.mrf.mxu0
  %v359 = vadd.f32 0.0, %v358
  %v360 = vpop.f32.mrf.mxu0
  %v361 = vadd.f32 0.0, %v360
  %362 = vdwg.mxu0
  %v363 = vadd.f32 %v50, %v284
  %v364 = vadd.f32 %v51, %v286
  %v365 = vadd.f32 %v52, %v289
  %v366 = vadd.f32 %v53, %v291
  %v367 = vadd.f32 %v54, %v294
  %v368 = vadd.f32 %v55, %v296
  %v369 = vadd.f32 %v56, %v299
  %v370 = vadd.f32 %v57, %v301
  %v371 = vadd.f32 %v58, %v304
  %v372 = vadd.f32 %v59, %v306
  %v373 = vadd.f32 %v60, %v309
  %v374 = vadd.f32 %v61, %v311
  %v375 = vadd.f32 %v62, %v314
  %v376 = vadd.f32 %v63, %v316
  %v377 = vadd.f32 %v64, %v319
  %v378 = vadd.f32 %v65, %v321
  %v379 = vadd.f32 %v66, %v324
  %v380 = vadd.f32 %v67, %v326
  %v381 = vadd.f32 %v68, %v329
  %v382 = vadd.f32 %v69, %v331
  %v383 = vadd.f32 %v70, %v334
  %v384 = vadd.f32 %v71, %v336
  %v385 = vadd.f32 %v72, %v339
  %v386 = vadd.f32 %v73, %v341
  %v387 = vadd.f32 %v74, %v344
  %v388 = vadd.f32 %v75, %v346
  %v389 = vadd.f32 %v76, %v349
  %v390 = vadd.f32 %v77, %v351
  %v391 = vadd.f32 %v78, %v354
  %v392 = vadd.f32 %v79, %v356
  %v393 = vadd.f32 %v80, %v359
  %v394 = vadd.f32 %v81, %v361
  %395 = vst [vmem:[#allocation2] sm:$0xff] %v363
  %396 = vst [vmem:[#allocation2 + $0x8] sm:$0xff] %v364
  %397 = vst [vmem:[#allocation2 + $0x10] sm:$0xff] %v365
  %398 = vst [vmem:[#allocation2 + $0x18] sm:$0xff] %v366
  %399 = vst [vmem:[#allocation2 + $0x20] sm:$0xff] %v367
  %400 = vst [vmem:[#allocation2 + $0x28] sm:$0xff] %v368
  %401 = vst [vmem:[#allocation2 + $0x30] sm:$0xff] %v369
  %402 = vst [vmem:[#allocation2 + $0x38] sm:$0xff] %v370
  %403 = vst [vmem:[#allocation2 + $0x40] sm:$0xff] %v371
  %404 = vst [vmem:[#allocation2 + $0x48] sm:$0xff] %v372
  %405 = vst [vmem:[#allocation2 + $0x50] sm:$0xff] %v373
  %406 = vst [vmem:[#allocation2 + $0x58] sm:$0xff] %v374
  %407 = vst [vmem:[#allocation2 + $0x60] sm:$0xff] %v375
  %408 = vst [vmem:[#allocation2 + $0x68] sm:$0xff] %v376
  %409 = vst [vmem:[#allocation2 + $0x70] sm:$0xff] %v377
  %410 = vst [vmem:[#allocation2 + $0x78] sm:$0xff] %v378
  %411 = vst [vmem:[#allocation2 + $0x80] sm:$0xff] %v379
  %412 = vst [vmem:[#allocation2 + $0x88] sm:$0xff] %v380
  %413 = vst [vmem:[#allocation2 + $0x90] sm:$0xff] %v381
  %414 = vst [vmem:[#allocation2 + $0x98] sm:$0xff] %v382
  %415 = vst [vmem:[#allocation2 + $0xa0] sm:$0xff] %v383
  %416 = vst [vmem:[#allocation2 + $0xa8] sm:$0xff] %v384
  %417 = vst [vmem:[#allocation2 + $0xb0] sm:$0xff] %v385
  %418 = vst [vmem:[#allocation2 + $0xb8] sm:$0xff] %v386
  %419 = vst [vmem:[#allocation2 + $0xc0] sm:$0xff] %v387
  %420 = vst [vmem:[#allocation2 + $0xc8] sm:$0xff] %v388
  %421 = vst [vmem:[#allocation2 + $0xd0] sm:$0xff] %v389
  %422 = vst [vmem:[#allocation2 + $0xd8] sm:$0xff] %v390
  %423 = vst [vmem:[#allocation2 + $0xe0] sm:$0xff] %v391
  %424 = vst [vmem:[#allocation2 + $0xe8] sm:$0xff] %v392
  %425 = vst [vmem:[#allocation2 + $0xf0] sm:$0xff] %v393
  %426 = vst [vmem:[#allocation2 + $0xf8] sm:$0xff] %v394
  // Predicated region
  $region18: #{_lambda_.13} parent=0 // pred_check
    %p427 = pneg %p14
  $region19: #{_lambda_.13} parent=0 // pred_check_branch
    %429 = sbr.rel (%p427) target = $region21
  $region20: #{_lambda_.13} parent=0 // pred_region
    %v430 = vld [vmem:[#allocation2] sm:$0xff]
    %v431 = vld [vmem:[#allocation2 + $0x8] sm:$0xff]
    %v432 = vld [vmem:[#allocation2 + $0x10] sm:$0xff]
    %v433 = vld [vmem:[#allocation2 + $0x18] sm:$0xff]
    %v434 = vld [vmem:[#allocation2 + $0x20] sm:$0xff]
    %v435 = vld [vmem:[#allocation2 + $0x28] sm:$0xff]
    %v436 = vld [vmem:[#allocation2 + $0x30] sm:$0xff]
    %v437 = vld [vmem:[#allocation2 + $0x38] sm:$0xff]
    %v438 = vld [vmem:[#allocation2 + $0x40] sm:$0xff]
    %v439 = vld [vmem:[#allocation2 + $0x48] sm:$0xff]
    %v440 = vld [vmem:[#allocation2 + $0x50] sm:$0xff]
    %v441 = vld [vmem:[#allocation2 + $0x58] sm:$0xff]
    %v442 = vld [vmem:[#allocation2 + $0x60] sm:$0xff]
    %v443 = vld [vmem:[#allocation2 + $0x68] sm:$0xff]
    %v444 = vld [vmem:[#allocation2 + $0x70] sm:$0xff]
    %v445 = vld [vmem:[#allocation2 + $0x78] sm:$0xff]
    %v446 = vld [vmem:[#allocation2 + $0x80] sm:$0xff]
    %v447 = vld [vmem:[#allocation2 + $0x88] sm:$0xff]
    %v448 = vld [vmem:[#allocation2 + $0x90] sm:$0xff]
    %v449 = vld [vmem:[#allocation2 + $0x98] sm:$0xff]
    %v450 = vld [vmem:[#allocation2 + $0xa0] sm:$0xff]
    %v451 = vld [vmem:[#allocation2 + $0xa8] sm:$0xff]
    %v452 = vld [vmem:[#allocation2 + $0xb0] sm:$0xff]
    %v453 = vld [vmem:[#allocation2 + $0xb8] sm:$0xff]
    %v454 = vld [vmem:[#allocation2 + $0xc0] sm:$0xff]
    %v455 = vld [vmem:[#allocation2 + $0xc8] sm:$0xff]
    %v456 = vld [vmem:[#allocation2 + $0xd0] sm:$0xff]
    %v457 = vld [vmem:[#allocation2 + $0xd8] sm:$0xff]
    %v458 = vld [vmem:[#allocation2 + $0xe0] sm:$0xff]
    %v459 = vld [vmem:[#allocation2 + $0xe8] sm:$0xff]
    %v460 = vld [vmem:[#allocation2 + $0xf0] sm:$0xff]
    %v461 = vld [vmem:[#allocation2 + $0xf8] sm:$0xff]
    %v462 = vld [vmem:[%s2] sm:$0x1]
    %v464 = vperm.slane %v462, 0
    %v466 = vadd.f32 %v430, %v464
    %v467 = vadd.f32 %v431, %v464
    %v468 = vadd.f32 %v432, %v464
    %v469 = vadd.f32 %v433, %v464
    %v470 = vadd.f32 %v434, %v464
    %v471 = vadd.f32 %v435, %v464
    %v472 = vadd.f32 %v436, %v464
    %v473 = vadd.f32 %v437, %v464
    %v474 = vadd.f32 %v438, %v464
    %v475 = vadd.f32 %v439, %v464
    %v476 = vadd.f32 %v440, %v464
    %v477 = vadd.f32 %v441, %v464
    %v478 = vadd.f32 %v442, %v464
    %v479 = vadd.f32 %v443, %v464
    %v480 = vadd.f32 %v444, %v464
    %v481 = vadd.f32 %v445, %v464
    %v482 = vadd.f32 %v446, %v464
    %v483 = vadd.f32 %v447, %v464
    %v484 = vadd.f32 %v448, %v464
    %v485 = vadd.f32 %v449, %v464
    %v486 = vadd.f32 %v450, %v464
    %v487 = vadd.f32 %v451, %v464
    %v488 = vadd.f32 %v452, %v464
    %v489 = vadd.f32 %v453, %v464
    %v490 = vadd.f32 %v454, %v464
    %v491 = vadd.f32 %v455, %v464
    %v492 = vadd.f32 %v456, %v464
    %v493 = vadd.f32 %v457, %v464
    %v494 = vadd.f32 %v458, %v464
    %v495 = vadd.f32 %v459, %v464
    %v496 = vadd.f32 %v460, %v464
    %v497 = vadd.f32 %v461, %v464
    %498 = vst [vmem:[%s3] sm:$0xff] %v466
    %499 = vst [vmem:[%s3 + $0x8] sm:$0xff] %v467
    %500 = vst [vmem:[%s3 + $0x10] sm:$0xff] %v468
    %501 = vst [vmem:[%s3 + $0x18] sm:$0xff] %v469
    %502 = vst [vmem:[%s3 + $0x20] sm:$0xff] %v470
    %503 = vst [vmem:[%s3 + $0x28] sm:$0xff] %v471
    %504 = vst [vmem:[%s3 + $0x30] sm:$0xff] %v472
    %505 = vst [vmem:[%s3 + $0x38] sm:$0xff] %v473
    %506 = vst [vmem:[%s3 + $0x40] sm:$0xff] %v474
    %507 = vst [vmem:[%s3 + $0x48] sm:$0xff] %v475
    %508 = vst [vmem:[%s3 + $0x50] sm:$0xff] %v476
    %509 = vst [vmem:[%s3 + $0x58] sm:$0xff] %v477
    %510 = vst [vmem:[%s3 + $0x60] sm:$0xff] %v478
    %511 = vst [vmem:[%s3 + $0x68] sm:$0xff] %v479
    %512 = vst [vmem:[%s3 + $0x70] sm:$0xff] %v480
    %513 = vst [vmem:[%s3 + $0x78] sm:$0xff] %v481
    %514 = vst [vmem:[%s3 + $0x80] sm:$0xff] %v482
    %515 = vst [vmem:[%s3 + $0x88] sm:$0xff] %v483
    %516 = vst [vmem:[%s3 + $0x90] sm:$0xff] %v484
    %517 = vst [vmem:[%s3 + $0x98] sm:$0xff] %v485
    %518 = vst [vmem:[%s3 + $0xa0] sm:$0xff] %v486
    %519 = vst [vmem:[%s3 + $0xa8] sm:$0xff] %v487
    %520 = vst [vmem:[%s3 + $0xb0] sm:$0xff] %v488
    %521 = vst [vmem:[%s3 + $0xb8] sm:$0xff] %v489
    %522 = vst [vmem:[%s3 + $0xc0] sm:$0xff] %v490
    %523 = vst [vmem:[%s3 + $0xc8] sm:$0xff] %v491
    %524 = vst [vmem:[%s3 + $0xd0] sm:$0xff] %v492
    %525 = vst [vmem:[%s3 + $0xd8] sm:$0xff] %v493
    %526 = vst [vmem:[%s3 + $0xe0] sm:$0xff] %v494
    %527 = vst [vmem:[%s3 + $0xe8] sm:$0xff] %v495
    %528 = vst [vmem:[%s3 + $0xf0] sm:$0xff] %v496
    %529 = vst [vmem:[%s3 + $0xf8] sm:$0xff] %v497
  $region21: #{_lambda_.13} parent=0 // pred_fallthru
    _
  // Predicated region
  $region22: #{_lambda_.13} parent=0 // pred_check
    _
  $region23: #{_lambda_.13} parent=0 // pred_check_branch
    %531 = sbr.rel (0) target = $region25
  $region24: #{_lambda_.13} parent=0 // pred_region
    _
  $region25: #{_lambda_.13} parent=0 // pred_fallthru
    _
  // Predicated region
  $region26: #{_lambda_.13} parent=0 // pred_check
    _
  $region27: #{_lambda_.13} parent=0 // pred_check_branch
    %533 = sbr.rel (0) target = $region29
  $region28: #{_lambda_.13} parent=0 // pred_region
    _
  $region29: #{_lambda_.13} parent=0 // pred_fallthru
    _

</llo_original>
